<compile_context>
chip_gen: v6e
topology: v6e:2x2x1
jax: 0.10.0
libtpu: 0.0.40
codegen_flags: <defaults>
</compile_context>

<pallas_src>
import functools
import math

import jax
import jax.numpy as jnp
from jax.experimental import pallas as pl
from jax.experimental.pallas import tpu as pltpu


def _gelu_exact(x):
    # torch nn.GELU() default = exact erf formulation
    return 0.5 * x * (1.0 + jax.lax.erf(x * 0.7071067811865476))


def attn_cls_kernel(num_heads,
                    xcls_ref, x_ref, mask_ref,
                    wq_ref, wk_ref, wv_ref, bq_ref, bk_ref, bv_ref,
                    wo_ref, bo_ref, w1_ref, b1_ref, w2_ref, b2_ref,
                    out_ref):
    TB, S = mask_ref.shape                   # batch tile, key length
    E = xcls_ref.shape[-1]
    Sq = xcls_ref.shape[0] // TB             # query (cls) length
    H = num_heads
    Dh = E // H

    q_in = xcls_ref[...]                     # (TB*Sq, E) bf16
    kv_in = x_ref[...]                       # (TB*S,  E) bf16

    # in_proj (Q, K, V); 1/sqrt(Dh) is already folded into wq / bq on host.
    Q = jnp.dot(q_in, wq_ref[...], preferred_element_type=jnp.float32) + bq_ref[...]
    K = jnp.dot(kv_in, wk_ref[...], preferred_element_type=jnp.float32) + bk_ref[...]
    V = jnp.dot(kv_in, wv_ref[...], preferred_element_type=jnp.float32) + bv_ref[...]

    Q3 = Q.reshape(TB, Sq, E).astype(jnp.bfloat16)
    K3 = K.reshape(TB, S, E).astype(jnp.bfloat16)
    V3 = V.reshape(TB, S, E).astype(jnp.bfloat16)

    mask_add = mask_ref[...].reshape(TB, 1, S)   # additive key-padding mask (f32)
    wo = wo_ref[...]                             # (E, E) bf16

    # Attention: static loop over heads, batched over the TB batch tile.
    # Each head's context is folded through its slice of Wo and accumulated in
    # f32, avoiding a concatenate / sub-lane offset writes.
    o_acc = jnp.zeros((TB * Sq, E), jnp.float32) + bo_ref[...]
    for h in range(H):
        lo = h * Dh
        Qh = Q3[:, :, lo:lo + Dh]                # (TB, Sq, Dh)
        Kh = K3[:, :, lo:lo + Dh]                # (TB, S,  Dh)
        Vh = V3[:, :, lo:lo + Dh]                # (TB, S,  Dh)

        s = jnp.einsum("bqd,bkd->bqk", Qh, Kh,
                       preferred_element_type=jnp.float32) + mask_add  # (TB, Sq, S)
        m = jnp.max(s, axis=-1, keepdims=True)
        p = jnp.exp(s - m)
        p = p * pl.reciprocal(jnp.sum(p, axis=-1, keepdims=True), approx=True)

        ctx = jnp.einsum("bqk,bkd->bqd", p.astype(jnp.bfloat16), Vh,
                         preferred_element_type=jnp.float32)           # (TB, Sq, Dh)
        o_acc = o_acc + jnp.dot(ctx.reshape(TB * Sq, Dh).astype(jnp.bfloat16),
                                wo[lo:lo + Dh, :],
                                preferred_element_type=jnp.float32)

    # fc1 -> GELU -> dropout(eval: identity) -> fc2 -> GELU
    h1 = _gelu_exact(
        jnp.dot(o_acc.astype(jnp.bfloat16), w1_ref[...],
                preferred_element_type=jnp.float32) + b1_ref[...])
    # TODO(synk): nn.Dropout is identity in eval mode; training-mode dropout not emitted.
    h2 = _gelu_exact(
        jnp.dot(h1.astype(jnp.bfloat16), w2_ref[...],
                preferred_element_type=jnp.float32) + b2_ref[...])

    out_ref[...] = h2.astype(out_ref.dtype)


def attn_cls_forward(x, x_cls, key_padding_mask, params, num_heads,
                     *, batch_tile=8, compute_dtype=jnp.bfloat16):
    B, S, E = x.shape
    Sq = x_cls.shape[1]
    hidden = params["w1"].shape[1]
    assert E % num_heads == 0, "embed_dim must be divisible by num_heads"
    Dh = E // num_heads

    TB = min(batch_tile, B)
    Bp = ((B + TB - 1) // TB) * TB
    pad = Bp - B

    # Additive key-padding mask: True (pad) -> large negative, False -> 0.
    # NB: a fully-masked row gives a uniform softmax here, whereas torch
    # returns NaN; this only diverges if an entire sequence is padded.
    mask_add = jnp.where(key_padding_mask, -1e9, 0.0).astype(jnp.float32)

    if pad:
        x = jnp.pad(x, ((0, pad), (0, 0), (0, 0)))
        x_cls = jnp.pad(x_cls, ((0, pad), (0, 0), (0, 0)))
        mask_add = jnp.pad(mask_add, ((0, pad), (0, 0)))

    # Lane/sublane-friendly 2-D activation slabs, bf16 for DMA bandwidth.
    xf = x.reshape(Bp * S, E).astype(compute_dtype)
    xcf = x_cls.reshape(Bp * Sq, E).astype(compute_dtype)

    # Weights -> bf16 (fold 1/sqrt(Dh) into wq/bq in f32 first); biases stay f32.
    f32 = jnp.float32
    scale = 1.0 / math.sqrt(Dh)
    wq = (params["wq"].astype(f32) * scale).astype(compute_dtype)
    bq = params["bq"].astype(f32) * scale
    wk = params["wk"].astype(compute_dtype)
    bk = params["bk"].astype(f32)
    wv = params["wv"].astype(compute_dtype)
    bv = params["bv"].astype(f32)
    wo = params["wo"].astype(compute_dtype)
    bo = params["bo"].astype(f32)
    w1 = params["w1"].astype(compute_dtype)
    b1 = params["b1"].astype(f32)
    w2 = params["w2"].astype(compute_dtype)
    b2 = params["b2"].astype(f32)
    weights = (wq, wk, wv, bq, bk, bv, wo, bo, w1, b1, w2, b2)

    grid = (Bp // TB,)

    def fixed(shape):
        return pl.BlockSpec(shape, lambda b, _s=shape: (0,) * len(_s))

    in_specs = [
        pl.BlockSpec((TB * Sq, E), lambda b: (b, 0)),    # x_cls slab
        pl.BlockSpec((TB * S, E), lambda b: (b, 0)),     # x slab
        pl.BlockSpec((TB, S), lambda b: (b, 0)),         # additive mask
        fixed((E, E)), fixed((E, E)), fixed((E, E)),     # Wq, Wk, Wv
        fixed((1, E)), fixed((1, E)), fixed((1, E)),     # bq, bk, bv
        fixed((E, E)), fixed((1, E)),                    # Wo, bo
        fixed((E, hidden)), fixed((1, hidden)),          # W1, b1
        fixed((hidden, E)), fixed((1, E)),               # W2, b2
    ]

    # Advisory cost estimate for the XLA scheduler.
    flops = int(2 * Bp * (Sq * E * E + 2 * S * E * E + 2 * Sq * S * E
                          + Sq * E * E + 2 * Sq * E * hidden))
    transcendentals = int(Bp * (num_heads * Sq * (S + 1) + Sq * (hidden + E)))
    bytes_accessed = int(sum(int(a.size) * a.dtype.itemsize
                             for a in (xcf, xf, mask_add) + weights)
                         + Bp * Sq * E * 4)

    # Explicit VMEM budget: double-buffered activation blocks + resident
    # weights + headroom (keeps production-sized E/hidden inside v7x's 64 MiB).
    block_bytes = 2 * (xcf.dtype.itemsize * TB * Sq * E
                       + xf.dtype.itemsize * TB * S * E
                       + 4 * TB * S
                       + 4 * TB * Sq * E)
    weight_bytes = int(sum(int(a.size) * a.dtype.itemsize for a in weights))
    vmem_limit = int(min(64 * 1024 * 1024,
                         max(16 * 1024 * 1024, 4 * (block_bytes + weight_bytes))))

    out_flat = pl.pallas_call(
        functools.partial(attn_cls_kernel, num_heads),
        out_shape=jax.ShapeDtypeStruct((Bp * Sq, E), jnp.float32),
        grid=grid,
        in_specs=in_specs,
        out_specs=pl.BlockSpec((TB * Sq, E), lambda b: (b, 0)),
        compiler_params=pltpu.CompilerParams(
            dimension_semantics=("parallel",),
            vmem_limit_bytes=vmem_limit),
        cost_estimate=pl.CostEstimate(flops=flops,
                                      transcendentals=transcendentals,
                                      bytes_accessed=bytes_accessed),
    )(xcf, xf, mask_add, *weights)

    return out_flat.reshape(Bp, Sq, E)[:B]


def attn_cls_reference(x, x_cls, key_padding_mask, params, num_heads):
    """Pure-JAX f32 reference matching torch semantics (eval mode)."""
    B, S, E = x.shape
    Sq = x_cls.shape[1]
    Dh = E // num_heads
    f32 = jnp.float32
    x = x.astype(f32)
    x_cls = x_cls.astype(f32)
    pp = {k: v.astype(f32) for k, v in params.items()}
    Q = x_cls @ pp["wq"] + pp["bq"]
    K = x @ pp["wk"] + pp["bk"]
    V = x @ pp["wv"] + pp["bv"]
    Q = Q.reshape(B, Sq, num_heads, Dh).transpose(0, 2, 1, 3)
    K = K.reshape(B, S, num_heads, Dh).transpose(0, 2, 1, 3)
    V = V.reshape(B, S, num_heads, Dh).transpose(0, 2, 1, 3)
    s = jnp.einsum("bhqd,bhkd->bhqk", Q, K) / jnp.sqrt(float(Dh))
    s = s + jnp.where(key_padding_mask, -1e9, 0.0)[:, None, None, :]
    probs = jax.nn.softmax(s, axis=-1)
    o = jnp.einsum("bhqk,bhkd->bhqd", probs, V).transpose(0, 2, 1, 3).reshape(B, Sq, E)
    o = o @ pp["wo"] + pp["bo"]
    h1 = _gelu_exact(o @ pp["w1"] + pp["b1"])
    h2 = _gelu_exact(h1 @ pp["w2"] + pp["b2"])
    return h2


def init_params(key, embed_dim, hidden):
    ks = jax.random.split(key, 12)

    def w(k, fan_in, fan_out):
        return (jax.random.normal(k, (fan_in, fan_out), jnp.float32)
                / jnp.sqrt(float(fan_in)))

    def b(k, fan_out):
        return 0.01 * jax.random.normal(k, (1, fan_out), jnp.float32)

    return {
        "wq": w(ks[0], embed_dim, embed_dim), "bq": b(ks[1], embed_dim),
        "wk": w(ks[2], embed_dim, embed_dim), "bk": b(ks[3], embed_dim),
        "wv": w(ks[4], embed_dim, embed_dim), "bv": b(ks[5], embed_dim),
        "wo": w(ks[6], embed_dim, embed_dim), "bo": b(ks[7], embed_dim),
        "w1": w(ks[8], embed_dim, hidden),    "b1": b(ks[9], hidden),
        "w2": w(ks[10], hidden, embed_dim),   "b2": b(ks[11], embed_dim),
    }


if __name__ == "__main__":
    B, S, Sq = 16, 8, 1          # batch, key sequence length, cls-token length
    E, H, HID = 32, 4, 64        # embed_dim, num_heads, hidden

    root = jax.random.PRNGKey(0)
    k_x, k_cls, k_p = jax.random.split(root, 3)

    x = jax.random.normal(k_x, (B, S, E), jnp.float32)
    x_cls = jax.random.normal(k_cls, (B, Sq, E), jnp.float32)
    # key_padding_mask: True = ignore that key
    key_padding_mask = (jnp.zeros((B, S), dtype=bool)
                        .at[1, -2:].set(True)
                        .at[5, -5:].set(True)
                        .at[12, -1:].set(True))

    params = init_params(k_p, E, HID)

    # The kernel runs in bf16 internally; round inputs/params to bf16 once so
    # kernel and reference see identical representable values (isolates kernel
    # error from input quantization).
    to_bf16_f32 = lambda a: a.astype(jnp.bfloat16).astype(jnp.float32)
    x = to_bf16_f32(x)
    x_cls = to_bf16_f32(x_cls)
    params = jax.tree_util.tree_map(to_bf16_f32, params)

    out = attn_cls_forward(x, x_cls, key_padding_mask, params, H, batch_tile=8)
    out = jax.block_until_ready(out)

    ref = attn_cls_reference(x, x_cls, key_padding_mask, params, H)
    assert out.shape == (B, Sq, E)
    # Tolerance covers bf16 intermediate rounding + approx EUP reciprocal.
    assert jnp.allclose(out, ref, atol=3e-2, rtol=3e-2), "mismatch vs reference"

    print("KERNEL_OK")
</pallas_src>

<mosaic_0001>
module attributes {stable_mosaic.version = 11 : i64} {
  func.func @attn_cls_kernel(%arg0: i32, %arg1: memref<8x32xbf16, #tpu.memory_space<vmem>>, %arg2: memref<64x32xbf16, #tpu.memory_space<vmem>>, %arg3: memref<8x8xf32, #tpu.memory_space<vmem>>, %arg4: memref<32x32xbf16, #tpu.memory_space<vmem>>, %arg5: memref<32x32xbf16, #tpu.memory_space<vmem>>, %arg6: memref<32x32xbf16, #tpu.memory_space<vmem>>, %arg7: memref<1x32xf32, #tpu.memory_space<vmem>>, %arg8: memref<1x32xf32, #tpu.memory_space<vmem>>, %arg9: memref<1x32xf32, #tpu.memory_space<vmem>>, %arg10: memref<32x32xbf16, #tpu.memory_space<vmem>>, %arg11: memref<1x32xf32, #tpu.memory_space<vmem>>, %arg12: memref<32x64xbf16, #tpu.memory_space<vmem>>, %arg13: memref<1x64xf32, #tpu.memory_space<vmem>>, %arg14: memref<64x32xbf16, #tpu.memory_space<vmem>>, %arg15: memref<1x32xf32, #tpu.memory_space<vmem>>, %arg16: memref<8x32xf32, #tpu.memory_space<vmem>>) attributes {dimension_semantics = [#tpu.dimension_semantics<parallel>], iteration_bounds = array<i64: 2>, scalar_prefetch = 0 : i64, scratch_operands = 0 : i64, tpu.core_type = #tpu.core_type<tc>, window_params = [{transform_indices = @transform_0, window_bounds = array<i64: 8, 32>}, {transform_indices = @transform_1, window_bounds = array<i64: 64, 32>}, {transform_indices = @transform_2, window_bounds = array<i64: 8, 8>}, {pipeline_mode = #tpu.pipeline_mode<synchronous>, transform_indices = @transform_3, window_bounds = array<i64: 32, 32>}, {pipeline_mode = #tpu.pipeline_mode<synchronous>, transform_indices = @transform_4, window_bounds = array<i64: 32, 32>}, {pipeline_mode = #tpu.pipeline_mode<synchronous>, transform_indices = @transform_5, window_bounds = array<i64: 32, 32>}, {pipeline_mode = #tpu.pipeline_mode<synchronous>, transform_indices = @transform_6, window_bounds = array<i64: 1, 32>}, {pipeline_mode = #tpu.pipeline_mode<synchronous>, transform_indices = @transform_7, window_bounds = array<i64: 1, 32>}, {pipeline_mode = #tpu.pipeline_mode<synchronous>, transform_indices = @transform_8, window_bounds = array<i64: 1, 32>}, {pipeline_mode = #tpu.pipeline_mode<synchronous>, transform_indices = @transform_9, window_bounds = array<i64: 32, 32>}, {pipeline_mode = #tpu.pipeline_mode<synchronous>, transform_indices = @transform_10, window_bounds = array<i64: 1, 32>}, {pipeline_mode = #tpu.pipeline_mode<synchronous>, transform_indices = @transform_11, window_bounds = array<i64: 32, 64>}, {pipeline_mode = #tpu.pipeline_mode<synchronous>, transform_indices = @transform_12, window_bounds = array<i64: 1, 64>}, {pipeline_mode = #tpu.pipeline_mode<synchronous>, transform_indices = @transform_13, window_bounds = array<i64: 64, 32>}, {pipeline_mode = #tpu.pipeline_mode<synchronous>, transform_indices = @transform_14, window_bounds = array<i64: 1, 32>}, {transform_indices = @transform_15, window_bounds = array<i64: 8, 32>}]} {
    %c0 = arith.constant 0 : index
    %c0_0 = arith.constant 0 : index
    %0 = vector.load %arg1[%c0, %c0_0] : memref<8x32xbf16, #tpu.memory_space<vmem>>, vector<8x32xbf16>
    %c0_1 = arith.constant 0 : index
    %c0_2 = arith.constant 0 : index
    %1 = vector.load %arg2[%c0_1, %c0_2] : memref<64x32xbf16, #tpu.memory_space<vmem>>, vector<64x32xbf16>
    %c0_3 = arith.constant 0 : index
    %c0_4 = arith.constant 0 : index
    %2 = vector.load %arg4[%c0_3, %c0_4] : memref<32x32xbf16, #tpu.memory_space<vmem>>, vector<32x32xbf16>
    %cst = arith.constant dense<0.000000e+00> : vector<8x32xf32>
    %3 = tpu.matmul %0, %2, %cst {dimension_numbers = #tpu.dot_dimension_numbers<[1], [0], [0], [1], [0, 0, 1, 1], [], []>} : vector<8x32xbf16>, vector<32x32xbf16>, vector<8x32xf32> -> vector<8x32xf32>
    %c0_5 = arith.constant 0 : index
    %c0_6 = arith.constant 0 : index
    %4 = vector.load %arg7[%c0_5, %c0_6] : memref<1x32xf32, #tpu.memory_space<vmem>>, vector<1x32xf32>
    %5 = vector.broadcast %4 : vector<1x32xf32> to vector<8x32xf32>
    %6 = arith.addf %3, %5 : vector<8x32xf32>
    %c0_7 = arith.constant 0 : index
    %c0_8 = arith.constant 0 : index
    %7 = vector.load %arg5[%c0_7, %c0_8] : memref<32x32xbf16, #tpu.memory_space<vmem>>, vector<32x32xbf16>
    %cst_9 = arith.constant dense<0.000000e+00> : vector<64x32xf32>
    %8 = tpu.matmul %1, %7, %cst_9 {dimension_numbers = #tpu.dot_dimension_numbers<[1], [0], [0], [1], [0, 0, 1, 1], [], []>} : vector<64x32xbf16>, vector<32x32xbf16>, vector<64x32xf32> -> vector<64x32xf32>
    %c0_10 = arith.constant 0 : index
    %c0_11 = arith.constant 0 : index
    %9 = vector.load %arg8[%c0_10, %c0_11] : memref<1x32xf32, #tpu.memory_space<vmem>>, vector<1x32xf32>
    %10 = vector.broadcast %9 : vector<1x32xf32> to vector<64x32xf32>
    %11 = arith.addf %8, %10 : vector<64x32xf32>
    %c0_12 = arith.constant 0 : index
    %c0_13 = arith.constant 0 : index
    %12 = vector.load %arg6[%c0_12, %c0_13] : memref<32x32xbf16, #tpu.memory_space<vmem>>, vector<32x32xbf16>
    %cst_14 = arith.constant dense<0.000000e+00> : vector<64x32xf32>
    %13 = tpu.matmul %1, %12, %cst_14 {dimension_numbers = #tpu.dot_dimension_numbers<[1], [0], [0], [1], [0, 0, 1, 1], [], []>} : vector<64x32xbf16>, vector<32x32xbf16>, vector<64x32xf32> -> vector<64x32xf32>
    %c0_15 = arith.constant 0 : index
    %c0_16 = arith.constant 0 : index
    %14 = vector.load %arg9[%c0_15, %c0_16] : memref<1x32xf32, #tpu.memory_space<vmem>>, vector<1x32xf32>
    %15 = vector.broadcast %14 : vector<1x32xf32> to vector<64x32xf32>
    %16 = arith.addf %13, %15 : vector<64x32xf32>
    %17 = vector.shape_cast %6 : vector<8x32xf32> to vector<8x1x32xf32>
    %18 = arith.truncf %17 : vector<8x1x32xf32> to vector<8x1x32xbf16>
    %19 = vector.shape_cast %11 : vector<64x32xf32> to vector<8x8x32xf32>
    %20 = arith.truncf %19 : vector<8x8x32xf32> to vector<8x8x32xbf16>
    %21 = vector.shape_cast %16 : vector<64x32xf32> to vector<8x8x32xf32>
    %22 = arith.truncf %21 : vector<8x8x32xf32> to vector<8x8x32xbf16>
    %c0_17 = arith.constant 0 : index
    %c0_18 = arith.constant 0 : index
    %23 = vector.load %arg3[%c0_17, %c0_18] : memref<8x8xf32, #tpu.memory_space<vmem>>, vector<8x8xf32>
    %24 = vector.shape_cast %23 : vector<8x8xf32> to vector<8x1x8xf32>
    %c0_19 = arith.constant 0 : index
    %c0_20 = arith.constant 0 : index
    %25 = vector.load %arg10[%c0_19, %c0_20] : memref<32x32xbf16, #tpu.memory_space<vmem>>, vector<32x32xbf16>
    %cst_21 = arith.constant 0.000000e+00 : f32
    %26 = vector.broadcast %cst_21 : f32 to vector<8x32xf32>
    %c0_22 = arith.constant 0 : index
    %c0_23 = arith.constant 0 : index
    %27 = vector.load %arg11[%c0_22, %c0_23] : memref<1x32xf32, #tpu.memory_space<vmem>>, vector<1x32xf32>
    %28 = vector.broadcast %27 : vector<1x32xf32> to vector<8x32xf32>
    %29 = arith.addf %26, %28 : vector<8x32xf32>
    %30 = vector.extract_strided_slice %18 {offsets = [0, 0, 0], sizes = [8, 1, 8], strides = [1, 1, 1]} : vector<8x1x32xbf16> to vector<8x1x8xbf16>
    %31 = vector.extract_strided_slice %20 {offsets = [0, 0, 0], sizes = [8, 8, 8], strides = [1, 1, 1]} : vector<8x8x32xbf16> to vector<8x8x8xbf16>
    %32 = vector.extract_strided_slice %22 {offsets = [0, 0, 0], sizes = [8, 8, 8], strides = [1, 1, 1]} : vector<8x8x32xbf16> to vector<8x8x8xbf16>
    "tpu.trace_start"() <{level = 10 : i32, message = "bqd,bkd->bqk"}> : () -> ()
    %cst_24 = arith.constant dense<0.000000e+00> : vector<8x1x8xf32>
    %33 = tpu.matmul %30, %31, %cst_24 {dimension_numbers = #tpu.dot_dimension_numbers<[2], [2], [1], [1], [0, 0, 0, 1, 1, 1], [0], [0]>} : vector<8x1x8xbf16>, vector<8x8x8xbf16>, vector<8x1x8xf32> -> vector<8x1x8xf32>
    "tpu.trace_stop"() : () -> ()
    %34 = arith.addf %33, %24 : vector<8x1x8xf32>
    %cst_25 = arith.constant dense<0xFF800000> : vector<8x1xf32>
    %35 = vector.multi_reduction <maximumf>, %34, %cst_25 [2] : vector<8x1x8xf32> to vector<8x1xf32>
    %36 = vector.shape_cast %35 : vector<8x1xf32> to vector<8x1x1xf32>
    %37 = vector.broadcast %36 : vector<8x1x1xf32> to vector<8x1x8xf32>
    %38 = arith.subf %34, %37 : vector<8x1x8xf32>
    %39 = math.exp %38 : vector<8x1x8xf32>
    %cst_26 = arith.constant dense<0.000000e+00> : vector<8x1xf32>
    %40 = vector.multi_reduction <add>, %39, %cst_26 [2] : vector<8x1x8xf32> to vector<8x1xf32>
    %41 = vector.shape_cast %40 : vector<8x1xf32> to vector<8x1x1xf32>
    %42 = tpu.reciprocal %41 {approx = true} : vector<8x1x1xf32> -> vector<8x1x1xf32>
    %43 = vector.broadcast %42 : vector<8x1x1xf32> to vector<8x1x8xf32>
    %44 = arith.mulf %39, %43 : vector<8x1x8xf32>
    %45 = arith.truncf %44 : vector<8x1x8xf32> to vector<8x1x8xbf16>
    "tpu.trace_start"() <{level = 10 : i32, message = "bqk,bkd->bqd"}> : () -> ()
    %cst_27 = arith.constant dense<0.000000e+00> : vector<8x1x8xf32>
    %46 = tpu.matmul %45, %32, %cst_27 {dimension_numbers = #tpu.dot_dimension_numbers<[2], [1], [1], [2], [0, 0, 0, 1, 1, 2], [0], [0]>} : vector<8x1x8xbf16>, vector<8x8x8xbf16>, vector<8x1x8xf32> -> vector<8x1x8xf32>
    "tpu.trace_stop"() : () -> ()
    %47 = vector.shape_cast %46 : vector<8x1x8xf32> to vector<8x8xf32>
    %48 = arith.truncf %47 : vector<8x8xf32> to vector<8x8xbf16>
    %49 = vector.extract_strided_slice %25 {offsets = [0, 0], sizes = [8, 32], strides = [1, 1]} : vector<32x32xbf16> to vector<8x32xbf16>
    %cst_28 = arith.constant dense<0.000000e+00> : vector<8x32xf32>
    %50 = tpu.matmul %48, %49, %cst_28 {dimension_numbers = #tpu.dot_dimension_numbers<[1], [0], [0], [1], [0, 0, 1, 1], [], []>} : vector<8x8xbf16>, vector<8x32xbf16>, vector<8x32xf32> -> vector<8x32xf32>
    %51 = arith.addf %29, %50 : vector<8x32xf32>
    %52 = vector.extract_strided_slice %18 {offsets = [0, 0, 8], sizes = [8, 1, 8], strides = [1, 1, 1]} : vector<8x1x32xbf16> to vector<8x1x8xbf16>
    %53 = vector.extract_strided_slice %20 {offsets = [0, 0, 8], sizes = [8, 8, 8], strides = [1, 1, 1]} : vector<8x8x32xbf16> to vector<8x8x8xbf16>
    %54 = vector.extract_strided_slice %22 {offsets = [0, 0, 8], sizes = [8, 8, 8], strides = [1, 1, 1]} : vector<8x8x32xbf16> to vector<8x8x8xbf16>
    "tpu.trace_start"() <{level = 10 : i32, message = "bqd,bkd->bqk"}> : () -> ()
    %cst_29 = arith.constant dense<0.000000e+00> : vector<8x1x8xf32>
    %55 = tpu.matmul %52, %53, %cst_29 {dimension_numbers = #tpu.dot_dimension_numbers<[2], [2], [1], [1], [0, 0, 0, 1, 1, 1], [0], [0]>} : vector<8x1x8xbf16>, vector<8x8x8xbf16>, vector<8x1x8xf32> -> vector<8x1x8xf32>
    "tpu.trace_stop"() : () -> ()
    %56 = arith.addf %55, %24 : vector<8x1x8xf32>
    %cst_30 = arith.constant dense<0xFF800000> : vector<8x1xf32>
    %57 = vector.multi_reduction <maximumf>, %56, %cst_30 [2] : vector<8x1x8xf32> to vector<8x1xf32>
    %58 = vector.shape_cast %57 : vector<8x1xf32> to vector<8x1x1xf32>
    %59 = vector.broadcast %58 : vector<8x1x1xf32> to vector<8x1x8xf32>
    %60 = arith.subf %56, %59 : vector<8x1x8xf32>
    %61 = math.exp %60 : vector<8x1x8xf32>
    %cst_31 = arith.constant dense<0.000000e+00> : vector<8x1xf32>
    %62 = vector.multi_reduction <add>, %61, %cst_31 [2] : vector<8x1x8xf32> to vector<8x1xf32>
    %63 = vector.shape_cast %62 : vector<8x1xf32> to vector<8x1x1xf32>
    %64 = tpu.reciprocal %63 {approx = true} : vector<8x1x1xf32> -> vector<8x1x1xf32>
    %65 = vector.broadcast %64 : vector<8x1x1xf32> to vector<8x1x8xf32>
    %66 = arith.mulf %61, %65 : vector<8x1x8xf32>
    %67 = arith.truncf %66 : vector<8x1x8xf32> to vector<8x1x8xbf16>
    "tpu.trace_start"() <{level = 10 : i32, message = "bqk,bkd->bqd"}> : () -> ()
    %cst_32 = arith.constant dense<0.000000e+00> : vector<8x1x8xf32>
    %68 = tpu.matmul %67, %54, %cst_32 {dimension_numbers = #tpu.dot_dimension_numbers<[2], [1], [1], [2], [0, 0, 0, 1, 1, 2], [0], [0]>} : vector<8x1x8xbf16>, vector<8x8x8xbf16>, vector<8x1x8xf32> -> vector<8x1x8xf32>
    "tpu.trace_stop"() : () -> ()
    %69 = vector.shape_cast %68 : vector<8x1x8xf32> to vector<8x8xf32>
    %70 = arith.truncf %69 : vector<8x8xf32> to vector<8x8xbf16>
    %71 = vector.extract_strided_slice %25 {offsets = [8, 0], sizes = [8, 32], strides = [1, 1]} : vector<32x32xbf16> to vector<8x32xbf16>
    %cst_33 = arith.constant dense<0.000000e+00> : vector<8x32xf32>
    %72 = tpu.matmul %70, %71, %cst_33 {dimension_numbers = #tpu.dot_dimension_numbers<[1], [0], [0], [1], [0, 0, 1, 1], [], []>} : vector<8x8xbf16>, vector<8x32xbf16>, vector<8x32xf32> -> vector<8x32xf32>
    %73 = arith.addf %51, %72 : vector<8x32xf32>
    %74 = vector.extract_strided_slice %18 {offsets = [0, 0, 16], sizes = [8, 1, 8], strides = [1, 1, 1]} : vector<8x1x32xbf16> to vector<8x1x8xbf16>
    %75 = vector.extract_strided_slice %20 {offsets = [0, 0, 16], sizes = [8, 8, 8], strides = [1, 1, 1]} : vector<8x8x32xbf16> to vector<8x8x8xbf16>
    %76 = vector.extract_strided_slice %22 {offsets = [0, 0, 16], sizes = [8, 8, 8], strides = [1, 1, 1]} : vector<8x8x32xbf16> to vector<8x8x8xbf16>
    "tpu.trace_start"() <{level = 10 : i32, message = "bqd,bkd->bqk"}> : () -> ()
    %cst_34 = arith.constant dense<0.000000e+00> : vector<8x1x8xf32>
    %77 = tpu.matmul %74, %75, %cst_34 {dimension_numbers = #tpu.dot_dimension_numbers<[2], [2], [1], [1], [0, 0, 0, 1, 1, 1], [0], [0]>} : vector<8x1x8xbf16>, vector<8x8x8xbf16>, vector<8x1x8xf32> -> vector<8x1x8xf32>
    "tpu.trace_stop"() : () -> ()
    %78 = arith.addf %77, %24 : vector<8x1x8xf32>
    %cst_35 = arith.constant dense<0xFF800000> : vector<8x1xf32>
    %79 = vector.multi_reduction <maximumf>, %78, %cst_35 [2] : vector<8x1x8xf32> to vector<8x1xf32>
    %80 = vector.shape_cast %79 : vector<8x1xf32> to vector<8x1x1xf32>
    %81 = vector.broadcast %80 : vector<8x1x1xf32> to vector<8x1x8xf32>
    %82 = arith.subf %78, %81 : vector<8x1x8xf32>
    %83 = math.exp %82 : vector<8x1x8xf32>
    %cst_36 = arith.constant dense<0.000000e+00> : vector<8x1xf32>
    %84 = vector.multi_reduction <add>, %83, %cst_36 [2] : vector<8x1x8xf32> to vector<8x1xf32>
    %85 = vector.shape_cast %84 : vector<8x1xf32> to vector<8x1x1xf32>
    %86 = tpu.reciprocal %85 {approx = true} : vector<8x1x1xf32> -> vector<8x1x1xf32>
    %87 = vector.broadcast %86 : vector<8x1x1xf32> to vector<8x1x8xf32>
    %88 = arith.mulf %83, %87 : vector<8x1x8xf32>
    %89 = arith.truncf %88 : vector<8x1x8xf32> to vector<8x1x8xbf16>
    "tpu.trace_start"() <{level = 10 : i32, message = "bqk,bkd->bqd"}> : () -> ()
    %cst_37 = arith.constant dense<0.000000e+00> : vector<8x1x8xf32>
    %90 = tpu.matmul %89, %76, %cst_37 {dimension_numbers = #tpu.dot_dimension_numbers<[2], [1], [1], [2], [0, 0, 0, 1, 1, 2], [0], [0]>} : vector<8x1x8xbf16>, vector<8x8x8xbf16>, vector<8x1x8xf32> -> vector<8x1x8xf32>
    "tpu.trace_stop"() : () -> ()
    %91 = vector.shape_cast %90 : vector<8x1x8xf32> to vector<8x8xf32>
    %92 = arith.truncf %91 : vector<8x8xf32> to vector<8x8xbf16>
    %93 = vector.extract_strided_slice %25 {offsets = [16, 0], sizes = [8, 32], strides = [1, 1]} : vector<32x32xbf16> to vector<8x32xbf16>
    %cst_38 = arith.constant dense<0.000000e+00> : vector<8x32xf32>
    %94 = tpu.matmul %92, %93, %cst_38 {dimension_numbers = #tpu.dot_dimension_numbers<[1], [0], [0], [1], [0, 0, 1, 1], [], []>} : vector<8x8xbf16>, vector<8x32xbf16>, vector<8x32xf32> -> vector<8x32xf32>
    %95 = arith.addf %73, %94 : vector<8x32xf32>
    %96 = vector.extract_strided_slice %18 {offsets = [0, 0, 24], sizes = [8, 1, 8], strides = [1, 1, 1]} : vector<8x1x32xbf16> to vector<8x1x8xbf16>
    %97 = vector.extract_strided_slice %20 {offsets = [0, 0, 24], sizes = [8, 8, 8], strides = [1, 1, 1]} : vector<8x8x32xbf16> to vector<8x8x8xbf16>
    %98 = vector.extract_strided_slice %22 {offsets = [0, 0, 24], sizes = [8, 8, 8], strides = [1, 1, 1]} : vector<8x8x32xbf16> to vector<8x8x8xbf16>
    "tpu.trace_start"() <{level = 10 : i32, message = "bqd,bkd->bqk"}> : () -> ()
    %cst_39 = arith.constant dense<0.000000e+00> : vector<8x1x8xf32>
    %99 = tpu.matmul %96, %97, %cst_39 {dimension_numbers = #tpu.dot_dimension_numbers<[2], [2], [1], [1], [0, 0, 0, 1, 1, 1], [0], [0]>} : vector<8x1x8xbf16>, vector<8x8x8xbf16>, vector<8x1x8xf32> -> vector<8x1x8xf32>
    "tpu.trace_stop"() : () -> ()
    %100 = arith.addf %99, %24 : vector<8x1x8xf32>
    %cst_40 = arith.constant dense<0xFF800000> : vector<8x1xf32>
    %101 = vector.multi_reduction <maximumf>, %100, %cst_40 [2] : vector<8x1x8xf32> to vector<8x1xf32>
    %102 = vector.shape_cast %101 : vector<8x1xf32> to vector<8x1x1xf32>
    %103 = vector.broadcast %102 : vector<8x1x1xf32> to vector<8x1x8xf32>
    %104 = arith.subf %100, %103 : vector<8x1x8xf32>
    %105 = math.exp %104 : vector<8x1x8xf32>
    %cst_41 = arith.constant dense<0.000000e+00> : vector<8x1xf32>
    %106 = vector.multi_reduction <add>, %105, %cst_41 [2] : vector<8x1x8xf32> to vector<8x1xf32>
    %107 = vector.shape_cast %106 : vector<8x1xf32> to vector<8x1x1xf32>
    %108 = tpu.reciprocal %107 {approx = true} : vector<8x1x1xf32> -> vector<8x1x1xf32>
    %109 = vector.broadcast %108 : vector<8x1x1xf32> to vector<8x1x8xf32>
    %110 = arith.mulf %105, %109 : vector<8x1x8xf32>
    %111 = arith.truncf %110 : vector<8x1x8xf32> to vector<8x1x8xbf16>
    "tpu.trace_start"() <{level = 10 : i32, message = "bqk,bkd->bqd"}> : () -> ()
    %cst_42 = arith.constant dense<0.000000e+00> : vector<8x1x8xf32>
    %112 = tpu.matmul %111, %98, %cst_42 {dimension_numbers = #tpu.dot_dimension_numbers<[2], [1], [1], [2], [0, 0, 0, 1, 1, 2], [0], [0]>} : vector<8x1x8xbf16>, vector<8x8x8xbf16>, vector<8x1x8xf32> -> vector<8x1x8xf32>
    "tpu.trace_stop"() : () -> ()
    %113 = vector.shape_cast %112 : vector<8x1x8xf32> to vector<8x8xf32>
    %114 = arith.truncf %113 : vector<8x8xf32> to vector<8x8xbf16>
    %115 = vector.extract_strided_slice %25 {offsets = [24, 0], sizes = [8, 32], strides = [1, 1]} : vector<32x32xbf16> to vector<8x32xbf16>
    %cst_43 = arith.constant dense<0.000000e+00> : vector<8x32xf32>
    %116 = tpu.matmul %114, %115, %cst_43 {dimension_numbers = #tpu.dot_dimension_numbers<[1], [0], [0], [1], [0, 0, 1, 1], [], []>} : vector<8x8xbf16>, vector<8x32xbf16>, vector<8x32xf32> -> vector<8x32xf32>
    %117 = arith.addf %95, %116 : vector<8x32xf32>
    %118 = arith.truncf %117 : vector<8x32xf32> to vector<8x32xbf16>
    %c0_44 = arith.constant 0 : index
    %c0_45 = arith.constant 0 : index
    %119 = vector.load %arg12[%c0_44, %c0_45] : memref<32x64xbf16, #tpu.memory_space<vmem>>, vector<32x64xbf16>
    %cst_46 = arith.constant dense<0.000000e+00> : vector<8x64xf32>
    %120 = tpu.matmul %118, %119, %cst_46 {dimension_numbers = #tpu.dot_dimension_numbers<[1], [0], [0], [1], [0, 0, 1, 1], [], []>} : vector<8x32xbf16>, vector<32x64xbf16>, vector<8x64xf32> -> vector<8x64xf32>
    %c0_47 = arith.constant 0 : index
    %c0_48 = arith.constant 0 : index
    %121 = vector.load %arg13[%c0_47, %c0_48] : memref<1x64xf32, #tpu.memory_space<vmem>>, vector<1x64xf32>
    %122 = vector.broadcast %121 : vector<1x64xf32> to vector<8x64xf32>
    %123 = arith.addf %120, %122 : vector<8x64xf32>
    %cst_49 = arith.constant 5.000000e-01 : f32
    %124 = vector.broadcast %cst_49 : f32 to vector<8x64xf32>
    %125 = arith.mulf %124, %123 : vector<8x64xf32>
    %cst_50 = arith.constant 0.707106769 : f32
    %126 = vector.broadcast %cst_50 : f32 to vector<8x64xf32>
    %127 = arith.mulf %123, %126 : vector<8x64xf32>
    %128 = math.erf %127 : vector<8x64xf32>
    %cst_51 = arith.constant 1.000000e+00 : f32
    %129 = vector.broadcast %cst_51 : f32 to vector<8x64xf32>
    %130 = arith.addf %129, %128 : vector<8x64xf32>
    %131 = arith.mulf %125, %130 : vector<8x64xf32>
    %132 = arith.truncf %131 : vector<8x64xf32> to vector<8x64xbf16>
    %c0_52 = arith.constant 0 : index
    %c0_53 = arith.constant 0 : index
    %133 = vector.load %arg14[%c0_52, %c0_53] : memref<64x32xbf16, #tpu.memory_space<vmem>>, vector<64x32xbf16>
    %cst_54 = arith.constant dense<0.000000e+00> : vector<8x32xf32>
    %134 = tpu.matmul %132, %133, %cst_54 {dimension_numbers = #tpu.dot_dimension_numbers<[1], [0], [0], [1], [0, 0, 1, 1], [], []>} : vector<8x64xbf16>, vector<64x32xbf16>, vector<8x32xf32> -> vector<8x32xf32>
    %c0_55 = arith.constant 0 : index
    %c0_56 = arith.constant 0 : index
    %135 = vector.load %arg15[%c0_55, %c0_56] : memref<1x32xf32, #tpu.memory_space<vmem>>, vector<1x32xf32>
    %136 = vector.broadcast %135 : vector<1x32xf32> to vector<8x32xf32>
    %137 = arith.addf %134, %136 : vector<8x32xf32>
    %cst_57 = arith.constant 5.000000e-01 : f32
    %138 = vector.broadcast %cst_57 : f32 to vector<8x32xf32>
    %139 = arith.mulf %138, %137 : vector<8x32xf32>
    %cst_58 = arith.constant 0.707106769 : f32
    %140 = vector.broadcast %cst_58 : f32 to vector<8x32xf32>
    %141 = arith.mulf %137, %140 : vector<8x32xf32>
    %142 = math.erf %141 : vector<8x32xf32>
    %cst_59 = arith.constant 1.000000e+00 : f32
    %143 = vector.broadcast %cst_59 : f32 to vector<8x32xf32>
    %144 = arith.addf %143, %142 : vector<8x32xf32>
    %145 = arith.mulf %139, %144 : vector<8x32xf32>
    %c0_60 = arith.constant 0 : index
    %c0_61 = arith.constant 0 : index
    %146 = vector.load %arg16[%c0_60, %c0_61] : memref<8x32xf32, #tpu.memory_space<vmem>>, vector<8x32xf32>
    tpu.vector_store %arg16[%c0_60, %c0_61], %145 {strides = array<i32>} : memref<8x32xf32, #tpu.memory_space<vmem>>, vector<8x32xf32>,
    return
  }
  func.func @transform_0(%arg0: i32) -> (i32, i32) {
    %c0_i32 = arith.constant 0 : i32
    %c0_i32_0 = arith.constant 0 : i32
    return %arg0, %c0_i32 : i32, i32
  }
  func.func @transform_1(%arg0: i32) -> (i32, i32) {
    %c0_i32 = arith.constant 0 : i32
    %c0_i32_0 = arith.constant 0 : i32
    return %arg0, %c0_i32 : i32, i32
  }
  func.func @transform_2(%arg0: i32) -> (i32, i32) {
    %c0_i32 = arith.constant 0 : i32
    %c0_i32_0 = arith.constant 0 : i32
    return %arg0, %c0_i32 : i32, i32
  }
  func.func @transform_3(%arg0: i32) -> (i32, i32) {
    %c0_i32 = arith.constant 0 : i32
    %c0_i32_0 = arith.constant 0 : i32
    %c0_i32_1 = arith.constant 0 : i32
    return %c0_i32, %c0_i32_0 : i32, i32
  }
  func.func @transform_4(%arg0: i32) -> (i32, i32) {
    %c0_i32 = arith.constant 0 : i32
    %c0_i32_0 = arith.constant 0 : i32
    %c0_i32_1 = arith.constant 0 : i32
    return %c0_i32, %c0_i32_0 : i32, i32
  }
  func.func @transform_5(%arg0: i32) -> (i32, i32) {
    %c0_i32 = arith.constant 0 : i32
    %c0_i32_0 = arith.constant 0 : i32
    %c0_i32_1 = arith.constant 0 : i32
    return %c0_i32, %c0_i32_0 : i32, i32
  }
  func.func @transform_6(%arg0: i32) -> (i32, i32) {
    %c0_i32 = arith.constant 0 : i32
    %c0_i32_0 = arith.constant 0 : i32
    %c0_i32_1 = arith.constant 0 : i32
    return %c0_i32, %c0_i32_0 : i32, i32
  }
  func.func @transform_7(%arg0: i32) -> (i32, i32) {
    %c0_i32 = arith.constant 0 : i32
    %c0_i32_0 = arith.constant 0 : i32
    %c0_i32_1 = arith.constant 0 : i32
    return %c0_i32, %c0_i32_0 : i32, i32
  }
  func.func @transform_8(%arg0: i32) -> (i32, i32) {
    %c0_i32 = arith.constant 0 : i32
    %c0_i32_0 = arith.constant 0 : i32
    %c0_i32_1 = arith.constant 0 : i32
    return %c0_i32, %c0_i32_0 : i32, i32
  }
  func.func @transform_9(%arg0: i32) -> (i32, i32) {
    %c0_i32 = arith.constant 0 : i32
    %c0_i32_0 = arith.constant 0 : i32
    %c0_i32_1 = arith.constant 0 : i32
    return %c0_i32, %c0_i32_0 : i32, i32
  }
  func.func @transform_10(%arg0: i32) -> (i32, i32) {
    %c0_i32 = arith.constant 0 : i32
    %c0_i32_0 = arith.constant 0 : i32
    %c0_i32_1 = arith.constant 0 : i32
    return %c0_i32, %c0_i32_0 : i32, i32
  }
  func.func @transform_11(%arg0: i32) -> (i32, i32) {
    %c0_i32 = arith.constant 0 : i32
    %c0_i32_0 = arith.constant 0 : i32
    %c0_i32_1 = arith.constant 0 : i32
    return %c0_i32, %c0_i32_0 : i32, i32
  }
  func.func @transform_12(%arg0: i32) -> (i32, i32) {
    %c0_i32 = arith.constant 0 : i32
    %c0_i32_0 = arith.constant 0 : i32
    %c0_i32_1 = arith.constant 0 : i32
    return %c0_i32, %c0_i32_0 : i32, i32
  }
  func.func @transform_13(%arg0: i32) -> (i32, i32) {
    %c0_i32 = arith.constant 0 : i32
    %c0_i32_0 = arith.constant 0 : i32
    %c0_i32_1 = arith.constant 0 : i32
    return %c0_i32, %c0_i32_0 : i32, i32
  }
  func.func @transform_14(%arg0: i32) -> (i32, i32) {
    %c0_i32 = arith.constant 0 : i32
    %c0_i32_0 = arith.constant 0 : i32
    %c0_i32_1 = arith.constant 0 : i32
    return %c0_i32, %c0_i32_0 : i32, i32
  }
  func.func @transform_15(%arg0: i32) -> (i32, i32) {
    %c0_i32 = arith.constant 0 : i32
    %c0_i32_0 = arith.constant 0 : i32
    return %arg0, %c0_i32 : i32, i32
  }
}

</mosaic_0001>

<llo_original>
// kernel: tpu_custom_call.1
$region0: #{tpu_custom_call.1}
  #allocation0 [shape = 'u32[]', space=smem, size = 0x4, offset = 0x4, fixed_abs, tag = 'smem constant byte address 0x4 - core index']
  #allocation1 [shape = 'u32[144,128]{1,0:T(1,128)}', space=vmem, size = 0x12000, scoped, tag = 'internal scratch']
  %s0 = inlined_call_operand.vmem [shape: bf16[16,32], index: 0, kind: input, shape index: {}]
  %s1 = inlined_call_operand.vmem [shape: bf16[128,32], index: 1, kind: input, shape index: {}]
  %s2 = inlined_call_operand.vmem [shape: f32[16,8], index: 2, kind: input, shape index: {}]
  %s3 = inlined_call_operand.vmem [shape: bf16[32,32], index: 3, kind: input, shape index: {}]
  %s4 = inlined_call_operand.vmem [shape: bf16[32,32], index: 4, kind: input, shape index: {}]
  %s5 = inlined_call_operand.vmem [shape: bf16[32,32], index: 5, kind: input, shape index: {}]
  %s6 = inlined_call_operand.vmem [shape: f32[1,32], index: 6, kind: input, shape index: {}]
  %s7 = inlined_call_operand.vmem [shape: f32[1,32], index: 7, kind: input, shape index: {}]
  %s8 = inlined_call_operand.vmem [shape: f32[1,32], index: 8, kind: input, shape index: {}]
  %s9 = inlined_call_operand.vmem [shape: bf16[32,32], index: 9, kind: input, shape index: {}]
  %s10 = inlined_call_operand.vmem [shape: f32[1,32], index: 10, kind: input, shape index: {}]
  %s11 = inlined_call_operand.vmem [shape: bf16[32,64], index: 11, kind: input, shape index: {}]
  %s12 = inlined_call_operand.vmem [shape: f32[1,64], index: 12, kind: input, shape index: {}]
  %s13 = inlined_call_operand.vmem [shape: bf16[64,32], index: 13, kind: input, shape index: {}]
  %s14 = inlined_call_operand.vmem [shape: f32[1,32], index: 14, kind: input, shape index: {}]
  %s15 = inlined_call_operand.hbm [shape: f32[16,32], index: 15, kind: output, shape index: {}]
  %s16 = sld [smem:[#allocation0]]
  $region93: #{tpu_custom_call.1} parent=0
    _
  %s18 = ssub.s32 1, %s16
  %s19 = scalar_select 0, %s18, %s16
  $region1: #{tpu_custom_call.1} parent=0
    #allocation2 [shape = 'u8[8192]{0}', space=vmem, size = 0x2000, scoped, tag = 'output window, operand 0']
    #allocation3 [shape = 's32[2]{0}', space=sflag, size = 0x8, scoped, tag = 'scoped memory for tpu_custom_call.1']
    %20 = vsyncpa [#allocation3], 0
    %s21 = scalar_lea.sflag [#allocation3], 1
    %22 = vsyncpa %s21, 0
    loop: start=0, step=1, limit=4
    $region2: #{tpu_custom_call.1} parent=1 // loop_pre_header
      _
    $region3: #{tpu_custom_call.1} parent=1 // loop_header
      %s24 = sphi 0, %s28
      %p25 = scmp.ge.s32.totalorder %s24, 4
      %s34 = sphi 0, %s36
      %s37 = sphi 0, %s34
      %s38 = sphi 0, %s37
      %s54 = sphi 0, %s38
      %s60 = sphi 0, %s62
      %s63 = sphi 0, %s60
      %s64 = sphi 0, %s63
      %s80 = sphi 0, %s64
      %s86 = sphi 0, %s88
      %s89 = sphi 0, %s86
      %s90 = sphi 0, %s89
      %s106 = sphi 0, %s90
      %s110 = sphi 0, %s110
      %s112 = sphi 0, %s110
      %s113 = sphi 0, %s112
      %s127 = sphi 0, %s113
      %s131 = sphi 0, %s131
      %s133 = sphi 0, %s131
      %s134 = sphi 0, %s133
      %s148 = sphi 0, %s134
      %s152 = sphi 0, %s152
      %s154 = sphi 0, %s152
      %s155 = sphi 0, %s154
      %s169 = sphi 0, %s155
      %s173 = sphi 0, %s173
      %s175 = sphi 0, %s173
      %s176 = sphi 0, %s175
      %s190 = sphi 0, %s176
      %s194 = sphi 0, %s194
      %s196 = sphi 0, %s194
      %s197 = sphi 0, %s196
      %s211 = sphi 0, %s197
      %s215 = sphi 0, %s215
      %s217 = sphi 0, %s215
      %s218 = sphi 0, %s217
      %s232 = sphi 0, %s218
      %s236 = sphi 0, %s236
      %s238 = sphi 0, %s236
      %s239 = sphi 0, %s238
      %s253 = sphi 0, %s239
      %s257 = sphi 0, %s257
      %s259 = sphi 0, %s257
      %s260 = sphi 0, %s259
      %s274 = sphi 0, %s260
      %s278 = sphi 0, %s278
      %s280 = sphi 0, %s278
      %s281 = sphi 0, %s280
      %s295 = sphi 0, %s281
      %s299 = sphi 0, %s299
      %s301 = sphi 0, %s299
      %s302 = sphi 0, %s301
      %s316 = sphi 0, %s302
      %s320 = sphi 0, %s320
      %s322 = sphi 0, %s320
      %s323 = sphi 0, %s322
      %s337 = sphi 0, %s323
      %s341 = sphi 0, %s341
      %s343 = sphi 0, %s341
      %s344 = sphi 0, %s343
      %s358 = sphi 0, %s344
      %s364 = sphi 0, %s366
      %s367 = sphi 0, %s364
      %s368 = sphi 0, %s367
      %s384 = sphi 0, %s368
    $region4: #{tpu_custom_call.1} parent=1 // loop_header_branch
      %27 = sbr.rel (%p25) target = $region8
    $region5: #{tpu_custom_call.1} parent=1 // loop_body
      %s29 = ssub.s32 %s24, 1
      %s30 = ssub.s32 %s24, 2
      %s31 = sadd.s32 %s24, 1
      %s32 = ssub.s32 %s24, %s31
      %p33 = scmp.eq.s32.totalorder %s32, 0
      %s35 = sadd.s32 %s34, 1
      %s36 = scalar_select %p33, %s34, %s35
      %p39 = pneg %p33
      %p40 = scmp.eq.s32.totalorder %s24, 1
      %p41 = por %p39, %p40
      %p42 = scmp.ne.s32.totalorder %s34, %s37
      %p43 = scmp.eq.s32.totalorder %s24, 0
      %p44 = por %p42, %p43
      %p45 = scmp.ne.s32.totalorder %s34, %s37
      %p46 = scmp.eq.s32.totalorder %s29, 1
      %p47 = por %p45, %p46
      %p48 = scmp.ne.s32.totalorder %s37, %s38
      %p49 = scmp.eq.s32.totalorder %s29, 0
      %p50 = por %p48, %p49
      %p51 = scmp.ne.s32.totalorder %s37, %s38
      %p52 = scmp.eq.s32.totalorder %s30, 1
      %p53 = por %p51, %p52
      %p55 = scmp.ne.s32.totalorder %s38, %s54
      %p56 = scmp.eq.s32.totalorder %s30, 0
      %p57 = por %p55, %p56
      %s58 = ssub.s32 %s24, %s31
      %p59 = scmp.eq.s32.totalorder %s58, 0
      %s61 = sadd.s32 %s60, 1
      %s62 = scalar_select %p59, %s60, %s61
      %p65 = pneg %p59
      %p66 = scmp.eq.s32.totalorder %s24, 1
      %p67 = por %p65, %p66
      %p68 = scmp.ne.s32.totalorder %s60, %s63
      %p69 = scmp.eq.s32.totalorder %s24, 0
      %p70 = por %p68, %p69
      %p71 = scmp.ne.s32.totalorder %s60, %s63
      %p72 = scmp.eq.s32.totalorder %s29, 1
      %p73 = por %p71, %p72
      %p74 = scmp.ne.s32.totalorder %s63, %s64
      %p75 = scmp.eq.s32.totalorder %s29, 0
      %p76 = por %p74, %p75
      %p77 = scmp.ne.s32.totalorder %s63, %s64
      %p78 = scmp.eq.s32.totalorder %s30, 1
      %p79 = por %p77, %p78
      %p81 = scmp.ne.s32.totalorder %s64, %s80
      %p82 = scmp.eq.s32.totalorder %s30, 0
      %p83 = por %p81, %p82
      %s84 = ssub.s32 %s24, %s31
      %p85 = scmp.eq.s32.totalorder %s84, 0
      %s87 = sadd.s32 %s86, 1
      %s88 = scalar_select %p85, %s86, %s87
      %p91 = pneg %p85
      %p92 = scmp.eq.s32.totalorder %s24, 1
      %p93 = por %p91, %p92
      %p94 = scmp.ne.s32.totalorder %s86, %s89
      %p95 = scmp.eq.s32.totalorder %s24, 0
      %p96 = por %p94, %p95
      %p97 = scmp.ne.s32.totalorder %s86, %s89
      %p98 = scmp.eq.s32.totalorder %s29, 1
      %p99 = por %p97, %p98
      %p100 = scmp.ne.s32.totalorder %s89, %s90
      %p101 = scmp.eq.s32.totalorder %s29, 0
      %p102 = por %p100, %p101
      %p103 = scmp.ne.s32.totalorder %s89, %s90
      %p104 = scmp.eq.s32.totalorder %s30, 1
      %p105 = por %p103, %p104
      %p107 = scmp.ne.s32.totalorder %s90, %s106
      %p108 = scmp.eq.s32.totalorder %s30, 0
      %p109 = por %p107, %p108
      %s111 = sadd.s32 %s110, 1
      %p114 = scmp.eq.s32.totalorder %s24, 1
      %p115 = scmp.ne.s32.totalorder %s110, %s112
      %p116 = scmp.eq.s32.totalorder %s24, 0
      %p117 = por %p115, %p116
      %p118 = scmp.ne.s32.totalorder %s110, %s112
      %p119 = scmp.eq.s32.totalorder %s29, 1
      %p120 = por %p118, %p119
      %p121 = scmp.ne.s32.totalorder %s112, %s113
      %p122 = scmp.eq.s32.totalorder %s29, 0
      %p123 = por %p121, %p122
      %p124 = scmp.ne.s32.totalorder %s112, %s113
      %p125 = scmp.eq.s32.totalorder %s30, 1
      %p126 = por %p124, %p125
      %p128 = scmp.ne.s32.totalorder %s113, %s127
      %p129 = scmp.eq.s32.totalorder %s30, 0
      %p130 = por %p128, %p129
      %s132 = sadd.s32 %s131, 1
      %p135 = scmp.eq.s32.totalorder %s24, 1
      %p136 = scmp.ne.s32.totalorder %s131, %s133
      %p137 = scmp.eq.s32.totalorder %s24, 0
      %p138 = por %p136, %p137
      %p139 = scmp.ne.s32.totalorder %s131, %s133
      %p140 = scmp.eq.s32.totalorder %s29, 1
      %p141 = por %p139, %p140
      %p142 = scmp.ne.s32.totalorder %s133, %s134
      %p143 = scmp.eq.s32.totalorder %s29, 0
      %p144 = por %p142, %p143
      %p145 = scmp.ne.s32.totalorder %s133, %s134
      %p146 = scmp.eq.s32.totalorder %s30, 1
      %p147 = por %p145, %p146
      %p149 = scmp.ne.s32.totalorder %s134, %s148
      %p150 = scmp.eq.s32.totalorder %s30, 0
      %p151 = por %p149, %p150
      %s153 = sadd.s32 %s152, 1
      %p156 = scmp.eq.s32.totalorder %s24, 1
      %p157 = scmp.ne.s32.totalorder %s152, %s154
      %p158 = scmp.eq.s32.totalorder %s24, 0
      %p159 = por %p157, %p158
      %p160 = scmp.ne.s32.totalorder %s152, %s154
      %p161 = scmp.eq.s32.totalorder %s29, 1
      %p162 = por %p160, %p161
      %p163 = scmp.ne.s32.totalorder %s154, %s155
      %p164 = scmp.eq.s32.totalorder %s29, 0
      %p165 = por %p163, %p164
      %p166 = scmp.ne.s32.totalorder %s154, %s155
      %p167 = scmp.eq.s32.totalorder %s30, 1
      %p168 = por %p166, %p167
      %p170 = scmp.ne.s32.totalorder %s155, %s169
      %p171 = scmp.eq.s32.totalorder %s30, 0
      %p172 = por %p170, %p171
      %s174 = sadd.s32 %s173, 1
      %p177 = scmp.eq.s32.totalorder %s24, 1
      %p178 = scmp.ne.s32.totalorder %s173, %s175
      %p179 = scmp.eq.s32.totalorder %s24, 0
      %p180 = por %p178, %p179
      %p181 = scmp.ne.s32.totalorder %s173, %s175
      %p182 = scmp.eq.s32.totalorder %s29, 1
      %p183 = por %p181, %p182
      %p184 = scmp.ne.s32.totalorder %s175, %s176
      %p185 = scmp.eq.s32.totalorder %s29, 0
      %p186 = por %p184, %p185
      %p187 = scmp.ne.s32.totalorder %s175, %s176
      %p188 = scmp.eq.s32.totalorder %s30, 1
      %p189 = por %p187, %p188
      %p191 = scmp.ne.s32.totalorder %s176, %s190
      %p192 = scmp.eq.s32.totalorder %s30, 0
      %p193 = por %p191, %p192
      %s195 = sadd.s32 %s194, 1
      %p198 = scmp.eq.s32.totalorder %s24, 1
      %p199 = scmp.ne.s32.totalorder %s194, %s196
      %p200 = scmp.eq.s32.totalorder %s24, 0
      %p201 = por %p199, %p200
      %p202 = scmp.ne.s32.totalorder %s194, %s196
      %p203 = scmp.eq.s32.totalorder %s29, 1
      %p204 = por %p202, %p203
      %p205 = scmp.ne.s32.totalorder %s196, %s197
      %p206 = scmp.eq.s32.totalorder %s29, 0
      %p207 = por %p205, %p206
      %p208 = scmp.ne.s32.totalorder %s196, %s197
      %p209 = scmp.eq.s32.totalorder %s30, 1
      %p210 = por %p208, %p209
      %p212 = scmp.ne.s32.totalorder %s197, %s211
      %p213 = scmp.eq.s32.totalorder %s30, 0
      %p214 = por %p212, %p213
      %s216 = sadd.s32 %s215, 1
      %p219 = scmp.eq.s32.totalorder %s24, 1
      %p220 = scmp.ne.s32.totalorder %s215, %s217
      %p221 = scmp.eq.s32.totalorder %s24, 0
      %p222 = por %p220, %p221
      %p223 = scmp.ne.s32.totalorder %s215, %s217
      %p224 = scmp.eq.s32.totalorder %s29, 1
      %p225 = por %p223, %p224
      %p226 = scmp.ne.s32.totalorder %s217, %s218
      %p227 = scmp.eq.s32.totalorder %s29, 0
      %p228 = por %p226, %p227
      %p229 = scmp.ne.s32.totalorder %s217, %s218
      %p230 = scmp.eq.s32.totalorder %s30, 1
      %p231 = por %p229, %p230
      %p233 = scmp.ne.s32.totalorder %s218, %s232
      %p234 = scmp.eq.s32.totalorder %s30, 0
      %p235 = por %p233, %p234
      %s237 = sadd.s32 %s236, 1
      %p240 = scmp.eq.s32.totalorder %s24, 1
      %p241 = scmp.ne.s32.totalorder %s236, %s238
      %p242 = scmp.eq.s32.totalorder %s24, 0
      %p243 = por %p241, %p242
      %p244 = scmp.ne.s32.totalorder %s236, %s238
      %p245 = scmp.eq.s32.totalorder %s29, 1
      %p246 = por %p244, %p245
      %p247 = scmp.ne.s32.totalorder %s238, %s239
      %p248 = scmp.eq.s32.totalorder %s29, 0
      %p249 = por %p247, %p248
      %p250 = scmp.ne.s32.totalorder %s238, %s239
      %p251 = scmp.eq.s32.totalorder %s30, 1
      %p252 = por %p250, %p251
      %p254 = scmp.ne.s32.totalorder %s239, %s253
      %p255 = scmp.eq.s32.totalorder %s30, 0
      %p256 = por %p254, %p255
      %s258 = sadd.s32 %s257, 1
      %p261 = scmp.eq.s32.totalorder %s24, 1
      %p262 = scmp.ne.s32.totalorder %s257, %s259
      %p263 = scmp.eq.s32.totalorder %s24, 0
      %p264 = por %p262, %p263
      %p265 = scmp.ne.s32.totalorder %s257, %s259
      %p266 = scmp.eq.s32.totalorder %s29, 1
      %p267 = por %p265, %p266
      %p268 = scmp.ne.s32.totalorder %s259, %s260
      %p269 = scmp.eq.s32.totalorder %s29, 0
      %p270 = por %p268, %p269
      %p271 = scmp.ne.s32.totalorder %s259, %s260
      %p272 = scmp.eq.s32.totalorder %s30, 1
      %p273 = por %p271, %p272
      %p275 = scmp.ne.s32.totalorder %s260, %s274
      %p276 = scmp.eq.s32.totalorder %s30, 0
      %p277 = por %p275, %p276
      %s279 = sadd.s32 %s278, 1
      %p282 = scmp.eq.s32.totalorder %s24, 1
      %p283 = scmp.ne.s32.totalorder %s278, %s280
      %p284 = scmp.eq.s32.totalorder %s24, 0
      %p285 = por %p283, %p284
      %p286 = scmp.ne.s32.totalorder %s278, %s280
      %p287 = scmp.eq.s32.totalorder %s29, 1
      %p288 = por %p286, %p287
      %p289 = scmp.ne.s32.totalorder %s280, %s281
      %p290 = scmp.eq.s32.totalorder %s29, 0
      %p291 = por %p289, %p290
      %p292 = scmp.ne.s32.totalorder %s280, %s281
      %p293 = scmp.eq.s32.totalorder %s30, 1
      %p294 = por %p292, %p293
      %p296 = scmp.ne.s32.totalorder %s281, %s295
      %p297 = scmp.eq.s32.totalorder %s30, 0
      %p298 = por %p296, %p297
      %s300 = sadd.s32 %s299, 1
      %p303 = scmp.eq.s32.totalorder %s24, 1
      %p304 = scmp.ne.s32.totalorder %s299, %s301
      %p305 = scmp.eq.s32.totalorder %s24, 0
      %p306 = por %p304, %p305
      %p307 = scmp.ne.s32.totalorder %s299, %s301
      %p308 = scmp.eq.s32.totalorder %s29, 1
      %p309 = por %p307, %p308
      %p310 = scmp.ne.s32.totalorder %s301, %s302
      %p311 = scmp.eq.s32.totalorder %s29, 0
      %p312 = por %p310, %p311
      %p313 = scmp.ne.s32.totalorder %s301, %s302
      %p314 = scmp.eq.s32.totalorder %s30, 1
      %p315 = por %p313, %p314
      %p317 = scmp.ne.s32.totalorder %s302, %s316
      %p318 = scmp.eq.s32.totalorder %s30, 0
      %p319 = por %p317, %p318
      %s321 = sadd.s32 %s320, 1
      %p324 = scmp.eq.s32.totalorder %s24, 1
      %p325 = scmp.ne.s32.totalorder %s320, %s322
      %p326 = scmp.eq.s32.totalorder %s24, 0
      %p327 = por %p325, %p326
      %p328 = scmp.ne.s32.totalorder %s320, %s322
      %p329 = scmp.eq.s32.totalorder %s29, 1
      %p330 = por %p328, %p329
      %p331 = scmp.ne.s32.totalorder %s322, %s323
      %p332 = scmp.eq.s32.totalorder %s29, 0
      %p333 = por %p331, %p332
      %p334 = scmp.ne.s32.totalorder %s322, %s323
      %p335 = scmp.eq.s32.totalorder %s30, 1
      %p336 = por %p334, %p335
      %p338 = scmp.ne.s32.totalorder %s323, %s337
      %p339 = scmp.eq.s32.totalorder %s30, 0
      %p340 = por %p338, %p339
      %s342 = sadd.s32 %s341, 1
      %p345 = scmp.eq.s32.totalorder %s24, 1
      %p346 = scmp.ne.s32.totalorder %s341, %s343
      %p347 = scmp.eq.s32.totalorder %s24, 0
      %p348 = por %p346, %p347
      %p349 = scmp.ne.s32.totalorder %s341, %s343
      %p350 = scmp.eq.s32.totalorder %s29, 1
      %p351 = por %p349, %p350
      %p352 = scmp.ne.s32.totalorder %s343, %s344
      %p353 = scmp.eq.s32.totalorder %s29, 0
      %p354 = por %p352, %p353
      %p355 = scmp.ne.s32.totalorder %s343, %s344
      %p356 = scmp.eq.s32.totalorder %s30, 1
      %p357 = por %p355, %p356
      %p359 = scmp.ne.s32.totalorder %s344, %s358
      %p360 = scmp.eq.s32.totalorder %s30, 0
      %p361 = por %p359, %p360
      %s362 = ssub.s32 %s24, %s31
      %p363 = scmp.eq.s32.totalorder %s362, 0
      %s365 = sadd.s32 %s364, 1
      %s366 = scalar_select %p363, %s364, %s365
      %p369 = pneg %p363
      %p370 = scmp.eq.s32.totalorder %s24, 1
      %p371 = por %p369, %p370
      %p372 = scmp.ne.s32.totalorder %s364, %s367
      %p373 = scmp.eq.s32.totalorder %s24, 0
      %p374 = por %p372, %p373
      %p375 = scmp.ne.s32.totalorder %s364, %s367
      %p376 = scmp.eq.s32.totalorder %s29, 1
      %p377 = por %p375, %p376
      %p378 = scmp.ne.s32.totalorder %s367, %s368
      %p379 = scmp.eq.s32.totalorder %s29, 0
      %p380 = por %p378, %p379
      %p381 = scmp.ne.s32.totalorder %s367, %s368
      %p382 = scmp.eq.s32.totalorder %s30, 1
      %p383 = por %p381, %p382
      %p385 = scmp.ne.s32.totalorder %s368, %s384
      %p386 = scmp.eq.s32.totalorder %s30, 0
      %p387 = por %p385, %p386
      %p388 = scmp.le.s32.totalorder 1, %s24
      %p389 = scmp.lt.s32.totalorder %s24, 3
      %p390 = pnand %p388, %p389
      %p391 = pneg %p390
      // Predicated region
      $region9: #{tpu_custom_call.1} parent=5 // pred_check
        _
      $region10: #{tpu_custom_call.1} parent=5 // pred_check_branch
        %393 = sbr.rel (%p390) target = $region12
      $region11: #{tpu_custom_call.1} parent=5 // pred_region
        %s394 = ssub.s32 %s24, 1
        // Predicated region
        $region13: #{tpu_custom_call.1} parent=11 // pred_check
          %p395 = pneg %p123
        $region14: #{tpu_custom_call.1} parent=11 // pred_check_branch
          %397 = sbr.rel (%p395) target = $region16
        $region15: #{tpu_custom_call.1} parent=11 // pred_region
          _
        $region16: #{tpu_custom_call.1} parent=11 // pred_fallthru
          _
        // Predicated region
        $region17: #{tpu_custom_call.1} parent=11 // pred_check
          %p398 = pneg %p144
        $region18: #{tpu_custom_call.1} parent=11 // pred_check_branch
          %400 = sbr.rel (%p398) target = $region20
        $region19: #{tpu_custom_call.1} parent=11 // pred_region
          _
        $region20: #{tpu_custom_call.1} parent=11 // pred_fallthru
          _
        // Predicated region
        $region21: #{tpu_custom_call.1} parent=11 // pred_check
          %p401 = pneg %p165
        $region22: #{tpu_custom_call.1} parent=11 // pred_check_branch
          %403 = sbr.rel (%p401) target = $region24
        $region23: #{tpu_custom_call.1} parent=11 // pred_region
          _
        $region24: #{tpu_custom_call.1} parent=11 // pred_fallthru
          _
        // Predicated region
        $region25: #{tpu_custom_call.1} parent=11 // pred_check
          %p404 = pneg %p186
        $region26: #{tpu_custom_call.1} parent=11 // pred_check_branch
          %406 = sbr.rel (%p404) target = $region28
        $region27: #{tpu_custom_call.1} parent=11 // pred_region
          _
        $region28: #{tpu_custom_call.1} parent=11 // pred_fallthru
          _
        // Predicated region
        $region29: #{tpu_custom_call.1} parent=11 // pred_check
          %p407 = pneg %p207
        $region30: #{tpu_custom_call.1} parent=11 // pred_check_branch
          %409 = sbr.rel (%p407) target = $region32
        $region31: #{tpu_custom_call.1} parent=11 // pred_region
          _
        $region32: #{tpu_custom_call.1} parent=11 // pred_fallthru
          _
        // Predicated region
        $region33: #{tpu_custom_call.1} parent=11 // pred_check
          %p410 = pneg %p228
        $region34: #{tpu_custom_call.1} parent=11 // pred_check_branch
          %412 = sbr.rel (%p410) target = $region36
        $region35: #{tpu_custom_call.1} parent=11 // pred_region
          _
        $region36: #{tpu_custom_call.1} parent=11 // pred_fallthru
          _
        // Predicated region
        $region37: #{tpu_custom_call.1} parent=11 // pred_check
          %p413 = pneg %p249
        $region38: #{tpu_custom_call.1} parent=11 // pred_check_branch
          %415 = sbr.rel (%p413) target = $region40
        $region39: #{tpu_custom_call.1} parent=11 // pred_region
          _
        $region40: #{tpu_custom_call.1} parent=11 // pred_fallthru
          _
        // Predicated region
        $region41: #{tpu_custom_call.1} parent=11 // pred_check
          %p416 = pneg %p270
        $region42: #{tpu_custom_call.1} parent=11 // pred_check_branch
          %418 = sbr.rel (%p416) target = $region44
        $region43: #{tpu_custom_call.1} parent=11 // pred_region
          _
        $region44: #{tpu_custom_call.1} parent=11 // pred_fallthru
          _
        // Predicated region
        $region45: #{tpu_custom_call.1} parent=11 // pred_check
          %p419 = pneg %p291
        $region46: #{tpu_custom_call.1} parent=11 // pred_check_branch
          %421 = sbr.rel (%p419) target = $region48
        $region47: #{tpu_custom_call.1} parent=11 // pred_region
          _
        $region48: #{tpu_custom_call.1} parent=11 // pred_fallthru
          _
        // Predicated region
        $region49: #{tpu_custom_call.1} parent=11 // pred_check
          %p422 = pneg %p312
        $region50: #{tpu_custom_call.1} parent=11 // pred_check_branch
          %424 = sbr.rel (%p422) target = $region52
        $region51: #{tpu_custom_call.1} parent=11 // pred_region
          _
        $region52: #{tpu_custom_call.1} parent=11 // pred_fallthru
          _
        // Predicated region
        $region53: #{tpu_custom_call.1} parent=11 // pred_check
          %p425 = pneg %p333
        $region54: #{tpu_custom_call.1} parent=11 // pred_check_branch
          %427 = sbr.rel (%p425) target = $region56
        $region55: #{tpu_custom_call.1} parent=11 // pred_region
          _
        $region56: #{tpu_custom_call.1} parent=11 // pred_fallthru
          _
        // Predicated region
        $region57: #{tpu_custom_call.1} parent=11 // pred_check
          %p428 = pneg %p354
        $region58: #{tpu_custom_call.1} parent=11 // pred_check_branch
          %430 = sbr.rel (%p428) target = $region60
        $region59: #{tpu_custom_call.1} parent=11 // pred_region
          _
        $region60: #{tpu_custom_call.1} parent=11 // pred_fallthru
          _
      $region12: #{tpu_custom_call.1} parent=5 // pred_fallthru
        _
      %p431 = scmp.lt.s32.totalorder %s24, 2
      // Predicated region
      $region61: #{tpu_custom_call.1} parent=5 // pred_check
        %p432 = pneg %p431
      $region62: #{tpu_custom_call.1} parent=5 // pred_check_branch
        %434 = sbr.rel (%p432) target = $region64
      $region63: #{tpu_custom_call.1} parent=5 // pred_region
        // Predicated region
        $region65: #{tpu_custom_call.1} parent=63 // pred_check
          %p435 = pneg %p44
        $region66: #{tpu_custom_call.1} parent=63 // pred_check_branch
          %437 = sbr.rel (%p435) target = $region68
        $region67: #{tpu_custom_call.1} parent=63 // pred_region
          %p438 = scmp.lt.s32.totalorder %s24, 1
          %s439 = scalar_select %p438, %s24, 1
          %s440 = smul.addr %s439, 4
          %s441 = scalar_lea.vmem %s0, %s440
        $region68: #{tpu_custom_call.1} parent=63 // pred_fallthru
          _
        // Predicated region
        $region69: #{tpu_custom_call.1} parent=63 // pred_check
          %p442 = pneg %p70
        $region70: #{tpu_custom_call.1} parent=63 // pred_check_branch
          %444 = sbr.rel (%p442) target = $region72
        $region71: #{tpu_custom_call.1} parent=63 // pred_region
          %s445 = smul.u32 8, %s24
          %p446 = scmp.lt.s32.totalorder %s445, 15
          %s447 = scalar_select %p446, %s445, 15
          %s448 = smul.addr %s447, 4
          %s449 = scalar_lea.vmem %s1, %s448
          %s450 = smul.u32 8, %s24
        $region72: #{tpu_custom_call.1} parent=63 // pred_fallthru
          _
        // Predicated region
        $region73: #{tpu_custom_call.1} parent=63 // pred_check
          %p451 = pneg %p96
        $region74: #{tpu_custom_call.1} parent=63 // pred_check_branch
          %453 = sbr.rel (%p451) target = $region76
        $region75: #{tpu_custom_call.1} parent=63 // pred_region
          %p454 = scmp.lt.s32.totalorder %s24, 1
          %s455 = scalar_select %p454, %s24, 1
          %s456 = smul.addr %s455, 8
          %s457 = scalar_lea.vmem %s2, %s456
        $region76: #{tpu_custom_call.1} parent=63 // pred_fallthru
          _
      $region64: #{tpu_custom_call.1} parent=5 // pred_fallthru
        _
      %p458 = scmp.le.s32.totalorder 1, %s24
      %p459 = scmp.lt.s32.totalorder %s24, 3
      %p460 = pnand %p458, %p459
      %p461 = pneg %p460
      // Predicated region
      $region77: #{tpu_custom_call.1} parent=5 // pred_check
        _
      $region78: #{tpu_custom_call.1} parent=5 // pred_check_branch
        %463 = sbr.rel (%p460) target = $region80
      $region79: #{tpu_custom_call.1} parent=5 // pred_region
        %s464 = ssub.s32 %s24, 1
        %p465 = scmp.lt.s32.totalorder %s29, 1
        %s466 = scalar_select %p465, %s29, 1
        %s467 = smul.addr %s466, 4
        %s468 = scalar_lea.vmem %s0, %s467
        %p469 = pneg %p50
        %p470 = pneg %p47
        %s471 = smul.u32 8, %s29
        %p472 = scmp.lt.s32.totalorder %s471, 15
        %s473 = scalar_select %p472, %s471, 15
        %s474 = smul.addr %s473, 4
        %s475 = scalar_lea.vmem %s1, %s474
        %p476 = pneg %p76
        %p477 = pneg %p73
        %p478 = scmp.lt.s32.totalorder %s29, 1
        %s479 = scalar_select %p478, %s29, 1
        %s480 = smul.addr %s479, 8
        %s481 = scalar_lea.vmem %s2, %s480
        %p482 = pneg %p102
        %p483 = pneg %p99
        %p484 = pneg %p123
        %p485 = pneg %p120
        %p486 = pneg %p144
        %p487 = pneg %p141
        %p488 = pneg %p165
        %p489 = pneg %p162
        %p490 = pneg %p186
        %p491 = pneg %p183
        %p492 = pneg %p207
        %p493 = pneg %p204
        %p494 = pneg %p228
        %p495 = pneg %p225
        %p496 = pneg %p249
        %p497 = pneg %p246
        %p498 = pneg %p270
        %p499 = pneg %p267
        %p500 = pneg %p291
        %p501 = pneg %p288
        %p502 = pneg %p312
        %p503 = pneg %p309
        %p504 = pneg %p333
        %p505 = pneg %p330
        %p506 = pneg %p354
        %p507 = pneg %p351
        %p508 = pneg %p380
        %p509 = pneg %p377
        %s510 = sand.u32 %s367, 1
        %s511 = scalar_lea.sflag [#allocation3], %s510
        %s512 = sand.u32 %s367, 1
        %s513 = smul.addr %s512, 8
        %s514 = scalar_lea.vmem [#allocation2], %s513
        %p515 = scmp.lt.s32.totalorder %s29, 1
        %s516 = scalar_select %p515, %s29, 1
        %s517 = smul.addr %s516, 4
        %s518 = scalar_lea.vmem %s0, %s517
        %s519 = smul.u32 8, %s29
        %p520 = scmp.lt.s32.totalorder %s519, 15
        %s521 = scalar_select %p520, %s519, 15
        %s522 = smul.addr %s521, 4
        %s523 = scalar_lea.vmem %s1, %s522
        %s524 = smul.u32 8, %s29
        %p525 = scmp.lt.s32.totalorder %s29, 1
        %s526 = scalar_select %p525, %s29, 1
        %s527 = smul.addr %s526, 8
        %s528 = scalar_lea.vmem %s2, %s527
        %v530 = vld [vmem:[%s518] sm:$0xf]
        %v531 = vld [vmem:[%s523] sm:$0xf]
        %v532 = vld [vmem:[%s523 + $0x4] sm:$0xf]
        %v533 = vld [vmem:[%s523 + $0x8] sm:$0xf]
        %v534 = vld [vmem:[%s523 + $0xc] sm:$0xf]
        %v535 = vld [vmem:[%s523 + $0x10] sm:$0xf]
        %v536 = vld [vmem:[%s523 + $0x14] sm:$0xf]
        %v537 = vld [vmem:[%s523 + $0x18] sm:$0xf]
        %v538 = vld [vmem:[%s523 + $0x1c] sm:$0xf]
        %v539 = vld [vmem:[%s3] sm:$0xf]
        %v540 = vld [vmem:[%s3 + $0x4] sm:$0xf]
        %v541 = vld [vmem:[%s3 + $0x8] sm:$0xf]
        %v542 = vld [vmem:[%s3 + $0xc] sm:$0xf]
        %v543 = vld [vmem:[%s6] sm:$0x1]
        %v545 = vlaneseq
        %v546 = vshrl.u32 %v545, 7
        %v547 = vsub.s32 0, %v546
        %v548 = vrot.slane %v543, %v547
        %v554 = vunpack.c.l.b16 %v539
        %v555 = vunpack.c.l.b16 %v540
        %v556 = vunpack.c.l.b16 %v541
        %v557 = vunpack.c.l.b16 %v542
        %v558 = vpack.c.b16 %v555, %v554
        %v559 = vpack.c.b16 %v557, %v556
        %vm562 = vcmask 261120
        %v564 = vsel %vm562, %v530, 0
        %566 = vmatprep.subr.bf16.mxu0 0
        %567 = vmatpush1.bf16.msra.mxu0 0
        %568 = vmatprep.subr.bf16.mxu0 0
        %569 = vmatpush1.bf16.msra.mxu0 0
        %570 = vmatprep.subr.bf16.mxu0 0
        %571 = vmatpush1.bf16.msra.mxu0 0
        %572 = vmatprep.subr.bf16.mxu0 0
        %573 = vmatpush1.bf16.msra.mxu0 0
        %574 = vmatprep.subr.bf16.mxu0 0
        %575 = vmatpush1.bf16.msra.mxu0 0
        %576 = vmatprep.subr.bf16.mxu0 0
        %577 = vmatpush1.bf16.msra.mxu0 0
        %578 = vmatprep.subr.bf16.mxu0 0
        %579 = vmatpush1.bf16.msra.mxu0 %v559
        %580 = vmatprep.subr.bf16.mxu0 0
        %581 = vmatpush1.bf16.msra.mxu0 %v558
        %582 = vmatprep.subr.bf16.mxu0 0
        %583 = vmatpush2.bf16.msra.mxu0 0
        %584 = vmatprep.subr.bf16.mxu0 0
        %585 = vmatpush2.bf16.msra.mxu0 0
        %586 = vmatprep.subr.bf16.mxu0 0
        %587 = vmatpush2.bf16.msra.mxu0 0
        %588 = vmatprep.subr.bf16.mxu0 0
        %589 = vmatpush2.bf16.msra.mxu0 0
        %590 = vmatprep.subr.bf16.mxu0 0
        %591 = vmatpush2.bf16.msra.mxu0 0
        %592 = vmatprep.subr.bf16.mxu0 0
        %593 = vmatpush2.bf16.msra.mxu0 0
        %594 = vmatprep.subr.bf16.mxu0 0
        %595 = vmatpush2.bf16.msra.mxu0 0
        %596 = vmatprep.subr.bf16.mxu0 0
        %597 = vmatpush2.bf16.msra.mxu0 0
        %598 = vmatprep.mubr.bf16.mxu0 0
        %599 = vmatmul.mubr.bf16.gmra.mxu0 %v564
        %v600 = vpop.f32.mrf.mxu0
        %v601 = vadd.f32 %v548, %v600
        %v602 = vpop.f32.mrf.mxu0
        %v603 = vpop.f32.mrf.mxu0
        %v604 = vpop.f32.mrf.mxu0
        %605 = vdwg.mxu0
        %v606 = vld [vmem:[%s4] sm:$0xf]
        %v607 = vld [vmem:[%s4 + $0x4] sm:$0xf]
        %v608 = vld [vmem:[%s4 + $0x8] sm:$0xf]
        %v609 = vld [vmem:[%s4 + $0xc] sm:$0xf]
        %v610 = vld [vmem:[%s7] sm:$0x1]
        %v612 = vlaneseq
        %v613 = vshrl.u32 %v612, 7
        %v614 = vsub.s32 0, %v613
        %v615 = vrot.slane %v610, %v614
        %v625 = vunpack.c.l.b16 %v531
        %v626 = vunpack.c.l.b16 %v532
        %v627 = vunpack.c.l.b16 %v533
        %v628 = vunpack.c.l.b16 %v534
        %v629 = vunpack.c.l.b16 %v535
        %v630 = vunpack.c.l.b16 %v536
        %v631 = vunpack.c.l.b16 %v537
        %v632 = vunpack.c.l.b16 %v538
        %v633 = vpack.c.b16 %v626, %v625
        %v634 = vpack.c.b16 %v628, %v627
        %v635 = vpack.c.b16 %v630, %v629
        %v636 = vpack.c.b16 %v632, %v631
        %v641 = vunpack.c.l.b16 %v606
        %v642 = vunpack.c.l.b16 %v607
        %v643 = vunpack.c.l.b16 %v608
        %v644 = vunpack.c.l.b16 %v609
        %v645 = vpack.c.b16 %v642, %v641
        %v646 = vpack.c.b16 %v644, %v643
        %v650 = vsel %vm562, %v633, 0
        %v653 = vsel %vm562, %v634, 0
        %v656 = vsel %vm562, %v635, 0
        %v659 = vsel %vm562, %v636, 0
        %661 = vmatprep.subr.bf16.mxu0 0
        %662 = vmatpush1.bf16.msra.mxu0 0
        %663 = vmatprep.subr.bf16.mxu0 0
        %664 = vmatpush1.bf16.msra.mxu0 0
        %665 = vmatprep.subr.bf16.mxu0 0
        %666 = vmatpush1.bf16.msra.mxu0 0
        %667 = vmatprep.subr.bf16.mxu0 0
        %668 = vmatpush1.bf16.msra.mxu0 0
        %669 = vmatprep.subr.bf16.mxu0 0
        %670 = vmatpush1.bf16.msra.mxu0 0
        %671 = vmatprep.subr.bf16.mxu0 0
        %672 = vmatpush1.bf16.msra.mxu0 0
        %673 = vmatprep.subr.bf16.mxu0 0
        %674 = vmatpush1.bf16.msra.mxu0 %v646
        %675 = vmatprep.subr.bf16.mxu0 0
        %676 = vmatpush1.bf16.msra.mxu0 %v645
        %677 = vmatprep.subr.bf16.mxu0 0
        %678 = vmatpush2.bf16.msra.mxu0 0
        %679 = vmatprep.subr.bf16.mxu0 0
        %680 = vmatpush2.bf16.msra.mxu0 0
        %681 = vmatprep.subr.bf16.mxu0 0
        %682 = vmatpush2.bf16.msra.mxu0 0
        %683 = vmatprep.subr.bf16.mxu0 0
        %684 = vmatpush2.bf16.msra.mxu0 0
        %685 = vmatprep.subr.bf16.mxu0 0
        %686 = vmatpush2.bf16.msra.mxu0 0
        %687 = vmatprep.subr.bf16.mxu0 0
        %688 = vmatpush2.bf16.msra.mxu0 0
        %689 = vmatprep.subr.bf16.mxu0 0
        %690 = vmatpush2.bf16.msra.mxu0 0
        %691 = vmatprep.subr.bf16.mxu0 0
        %692 = vmatpush2.bf16.msra.mxu0 0
        %693 = vmatprep.mubr.bf16.mxu0 0
        %694 = vmatmul.mubr.bf16.gmra.mxu0 %v650
        %v695 = vpop.f32.mrf.mxu0
        %v696 = vadd.f32 %v615, %v695
        %v697 = vpop.f32.mrf.mxu0
        %v698 = vpop.f32.mrf.mxu0
        %v699 = vadd.f32 %v615, %v698
        %v700 = vpop.f32.mrf.mxu0
        %701 = vmatprep.mubr.bf16.mxu0 0
        %702 = vmatmul.mubr.bf16.gmra.mxu0 %v653
        %v703 = vpop.f32.mrf.mxu0
        %v704 = vadd.f32 %v615, %v703
        %v705 = vpop.f32.mrf.mxu0
        %v706 = vpop.f32.mrf.mxu0
        %v707 = vadd.f32 %v615, %v706
        %v708 = vpop.f32.mrf.mxu0
        %709 = vmatprep.mubr.bf16.mxu0 0
        %710 = vmatmul.mubr.bf16.gmra.mxu0 %v656
        %v711 = vpop.f32.mrf.mxu0
        %v712 = vadd.f32 %v615, %v711
        %v713 = vpop.f32.mrf.mxu0
        %v714 = vpop.f32.mrf.mxu0
        %v715 = vadd.f32 %v615, %v714
        %v716 = vpop.f32.mrf.mxu0
        %717 = vmatprep.mubr.bf16.mxu0 0
        %718 = vmatmul.mubr.bf16.gmra.mxu0 %v659
        %v719 = vpop.f32.mrf.mxu0
        %v720 = vadd.f32 %v615, %v719
        %v721 = vpop.f32.mrf.mxu0
        %v722 = vpop.f32.mrf.mxu0
        %v723 = vadd.f32 %v615, %v722
        %v724 = vpop.f32.mrf.mxu0
        %725 = vdwg.mxu0
        %v726 = vld [vmem:[%s5] sm:$0xf]
        %v727 = vld [vmem:[%s5 + $0x4] sm:$0xf]
        %v728 = vld [vmem:[%s5 + $0x8] sm:$0xf]
        %v729 = vld [vmem:[%s5 + $0xc] sm:$0xf]
        %v730 = vld [vmem:[%s8] sm:$0x1]
        %v732 = vlaneseq
        %v733 = vshrl.u32 %v732, 7
        %v734 = vsub.s32 0, %v733
        %v735 = vrot.slane %v730, %v734
        %v741 = vunpack.c.l.b16 %v726
        %v742 = vunpack.c.l.b16 %v727
        %v743 = vunpack.c.l.b16 %v728
        %v744 = vunpack.c.l.b16 %v729
        %v745 = vpack.c.b16 %v742, %v741
        %v746 = vpack.c.b16 %v744, %v743
        %749 = vmatprep.subr.bf16.mxu0 0
        %750 = vmatpush1.bf16.msra.mxu0 0
        %751 = vmatprep.subr.bf16.mxu0 0
        %752 = vmatpush1.bf16.msra.mxu0 0
        %753 = vmatprep.subr.bf16.mxu0 0
        %754 = vmatpush1.bf16.msra.mxu0 0
        %755 = vmatprep.subr.bf16.mxu0 0
        %756 = vmatpush1.bf16.msra.mxu0 0
        %757 = vmatprep.subr.bf16.mxu0 0
        %758 = vmatpush1.bf16.msra.mxu0 0
        %759 = vmatprep.subr.bf16.mxu0 0
        %760 = vmatpush1.bf16.msra.mxu0 0
        %761 = vmatprep.subr.bf16.mxu0 0
        %762 = vmatpush1.bf16.msra.mxu0 %v746
        %763 = vmatprep.subr.bf16.mxu0 0
        %764 = vmatpush1.bf16.msra.mxu0 %v745
        %765 = vmatprep.subr.bf16.mxu0 0
        %766 = vmatpush2.bf16.msra.mxu0 0
        %767 = vmatprep.subr.bf16.mxu0 0
        %768 = vmatpush2.bf16.msra.mxu0 0
        %769 = vmatprep.subr.bf16.mxu0 0
        %770 = vmatpush2.bf16.msra.mxu0 0
        %771 = vmatprep.subr.bf16.mxu0 0
        %772 = vmatpush2.bf16.msra.mxu0 0
        %773 = vmatprep.subr.bf16.mxu0 0
        %774 = vmatpush2.bf16.msra.mxu0 0
        %775 = vmatprep.subr.bf16.mxu0 0
        %776 = vmatpush2.bf16.msra.mxu0 0
        %777 = vmatprep.subr.bf16.mxu0 0
        %778 = vmatpush2.bf16.msra.mxu0 0
        %779 = vmatprep.subr.bf16.mxu0 0
        %780 = vmatpush2.bf16.msra.mxu0 0
        %781 = vmatprep.mubr.bf16.mxu0 0
        %782 = vmatmul.mubr.bf16.gmra.mxu0 %v650
        %v783 = vpop.f32.mrf.mxu0
        %v784 = vadd.f32 %v735, %v783
        %v785 = vpop.f32.mrf.mxu0
        %v786 = vpop.f32.mrf.mxu0
        %v787 = vadd.f32 %v735, %v786
        %v788 = vpop.f32.mrf.mxu0
        %789 = vmatprep.mubr.bf16.mxu0 0
        %790 = vmatmul.mubr.bf16.gmra.mxu0 %v653
        %v791 = vpop.f32.mrf.mxu0
        %v792 = vadd.f32 %v735, %v791
        %v793 = vpop.f32.mrf.mxu0
        %v794 = vpop.f32.mrf.mxu0
        %v795 = vadd.f32 %v735, %v794
        %v796 = vpop.f32.mrf.mxu0
        %797 = vmatprep.mubr.bf16.mxu0 0
        %798 = vmatmul.mubr.bf16.gmra.mxu0 %v656
        %v799 = vpop.f32.mrf.mxu0
        %v800 = vadd.f32 %v735, %v799
        %v801 = vpop.f32.mrf.mxu0
        %v802 = vpop.f32.mrf.mxu0
        %v803 = vadd.f32 %v735, %v802
        %v804 = vpop.f32.mrf.mxu0
        %805 = vmatprep.mubr.bf16.mxu0 0
        %806 = vmatmul.mubr.bf16.gmra.mxu0 %v659
        %v807 = vpop.f32.mrf.mxu0
        %v808 = vadd.f32 %v735, %v807
        %v809 = vpop.f32.mrf.mxu0
        %v810 = vpop.f32.mrf.mxu0
        %v811 = vadd.f32 %v735, %v810
        %v812 = vpop.f32.mrf.mxu0
        %813 = vdwg.mxu0
        %v815 = vcombine.high %v601, %v601
        %v817 = vunpack.c.l.s4 1966171168
        %v818 = vunpack.c.0.s8 %v817
        %v819 = vlaneseq
        %v820 = vshrl.u32 %v819, 7
        %v821 = vsub.s32 %v818, %v820
        %v822 = vrot.slane %v601, %v821
        %v824 = vunpack.c.l.s4 1966171168
        %v825 = vunpack.c.0.s8 %v824
        %v826 = vlaneseq
        %v827 = vshrl.u32 %v826, 7
        %v828 = vsub.s32 %v825, %v827
        %v829 = vrot.slane %v815, %v828
        %v830 = vcombine.high %v822, %v822
        %v831 = vcombine.high %v829, %v829
        %v833 = vunpack.c.l.s4 1966171168
        %v834 = vunpack.c.0.s8 %v833
        %v835 = vlaneseq
        %v836 = vshrl.u32 %v835, 7
        %v837 = vsub.s32 %v834, %v836
        %v838 = vrot.slane %v822, %v837
        %v840 = vunpack.c.l.s4 1966171168
        %v841 = vunpack.c.0.s8 %v840
        %v842 = vlaneseq
        %v843 = vshrl.u32 %v842, 7
        %v844 = vsub.s32 %v841, %v843
        %v845 = vrot.slane %v829, %v844
        %v847 = vunpack.c.l.s4 1966171168
        %v848 = vunpack.c.0.s8 %v847
        %v849 = vlaneseq
        %v850 = vshrl.u32 %v849, 7
        %v851 = vsub.s32 %v848, %v850
        %v852 = vrot.slane %v830, %v851
        %v854 = vunpack.c.l.s4 1966171168
        %v855 = vunpack.c.0.s8 %v854
        %v856 = vlaneseq
        %v857 = vshrl.u32 %v856, 7
        %v858 = vsub.s32 %v855, %v857
        %v859 = vrot.slane %v831, %v858
        %v860 = vcombine.high %v838, %v838
        %v861 = vcombine.high %v845, %v845
        %v862 = vcombine.high %v852, %v852
        %v863 = vcombine.high %v859, %v859
        %v872 = vpack.c.bf16 %v838, %v838
        %v873 = vpack.c.bf16 %v852, %v852
        %v874 = vpack.c.bf16 %v860, %v860
        %v875 = vpack.c.bf16 %v862, %v862
        %v876 = vpack.c.bf16 %v845, %v845
        %v877 = vpack.c.bf16 %v859, %v859
        %v878 = vpack.c.bf16 %v861, %v861
        %v879 = vpack.c.bf16 %v863, %v863
        %v880 = vpack.c.bf16 %v696, %v696
        %v881 = vpack.c.bf16 %v699, %v699
        %v882 = vpack.c.bf16 %v704, %v704
        %v883 = vpack.c.bf16 %v707, %v707
        %v884 = vpack.c.bf16 %v712, %v712
        %v885 = vpack.c.bf16 %v715, %v715
        %v886 = vpack.c.bf16 %v720, %v720
        %v887 = vpack.c.bf16 %v723, %v723
        %v888 = vpack.c.bf16 %v784, %v784
        %v889 = vpack.c.bf16 %v787, %v787
        %v890 = vpack.c.bf16 %v792, %v792
        %v891 = vpack.c.bf16 %v795, %v795
        %v892 = vpack.c.bf16 %v800, %v800
        %v893 = vpack.c.bf16 %v803, %v803
        %v894 = vpack.c.bf16 %v808, %v808
        %v895 = vpack.c.bf16 %v811, %v811
        %v896 = vld [vmem:[%s528] sm:$0xff]
        %v898 = vcombine.high %v896, %v896
        %v900 = vunpack.c.l.s4 1966171168
        %v901 = vunpack.c.0.s8 %v900
        %v902 = vlaneseq
        %v903 = vshrl.u32 %v902, 7
        %v904 = vsub.s32 %v901, %v903
        %v905 = vrot.slane %v896, %v904
        %v907 = vunpack.c.l.s4 1966171168
        %v908 = vunpack.c.0.s8 %v907
        %v909 = vlaneseq
        %v910 = vshrl.u32 %v909, 7
        %v911 = vsub.s32 %v908, %v910
        %v912 = vrot.slane %v898, %v911
        %v913 = vcombine.high %v905, %v905
        %v914 = vcombine.high %v912, %v912
        %v916 = vunpack.c.l.s4 1966171168
        %v917 = vunpack.c.0.s8 %v916
        %v918 = vlaneseq
        %v919 = vshrl.u32 %v918, 7
        %v920 = vsub.s32 %v917, %v919
        %v921 = vrot.slane %v905, %v920
        %v923 = vunpack.c.l.s4 1966171168
        %v924 = vunpack.c.0.s8 %v923
        %v925 = vlaneseq
        %v926 = vshrl.u32 %v925, 7
        %v927 = vsub.s32 %v924, %v926
        %v928 = vrot.slane %v912, %v927
        %v930 = vunpack.c.l.s4 1966171168
        %v931 = vunpack.c.0.s8 %v930
        %v932 = vlaneseq
        %v933 = vshrl.u32 %v932, 7
        %v934 = vsub.s32 %v931, %v933
        %v935 = vrot.slane %v913, %v934
        %v937 = vunpack.c.l.s4 1966171168
        %v938 = vunpack.c.0.s8 %v937
        %v939 = vlaneseq
        %v940 = vshrl.u32 %v939, 7
        %v941 = vsub.s32 %v938, %v940
        %v942 = vrot.slane %v914, %v941
        %v943 = vcombine.high %v921, %v921
        %v944 = vcombine.high %v928, %v928
        %v945 = vcombine.high %v935, %v935
        %v946 = vcombine.high %v942, %v942
        %v955 = vld [vmem:[%s9] sm:$0xf]
        %v956 = vld [vmem:[%s9 + $0x4] sm:$0xf]
        %v957 = vld [vmem:[%s9 + $0x8] sm:$0xf]
        %v958 = vld [vmem:[%s9 + $0xc] sm:$0xf]
        %v959 = vld [vmem:[%s10] sm:$0x1]
        %v961 = vlaneseq
        %v962 = vshrl.u32 %v961, 7
        %v963 = vsub.s32 0, %v962
        %v964 = vrot.slane %v959, %v963
        %v966 = vadd.f32 %v964, 0.0
        %vm967 = vcmask 64512
        %v969 = vsel %vm967, %v872, 0
        %v972 = vsel %vm967, %v880, 0
        %974 = vmatprep.subr.bf16.mxu0 0
        %975 = vmatpush1.bf16.xpose.msra.mxu0 0
        %976 = vmatprep.subr.bf16.mxu0 0
        %977 = vmatpush1.bf16.xpose.msra.mxu0 0
        %978 = vmatprep.subr.bf16.mxu0 0
        %979 = vmatpush1.bf16.xpose.msra.mxu0 0
        %980 = vmatprep.subr.bf16.mxu0 0
        %981 = vmatpush1.bf16.xpose.msra.mxu0 0
        %982 = vmatprep.subr.bf16.mxu0 0
        %983 = vmatpush1.bf16.xpose.msra.mxu0 0
        %984 = vmatprep.subr.bf16.mxu0 0
        %985 = vmatpush1.bf16.xpose.msra.mxu0 0
        %986 = vmatprep.subr.bf16.mxu0 0
        %987 = vmatpush1.bf16.xpose.msra.mxu0 0
        %988 = vmatprep.subr.bf16.mxu0 0
        %989 = vmatpush1.bf16.xpose.msra.mxu0 %v972
        %990 = vmatprep.subr.bf16.mxu0 0
        %991 = vmatpush2.bf16.xpose.msra.mxu0 0
        %992 = vmatprep.subr.bf16.mxu0 0
        %993 = vmatpush2.bf16.xpose.msra.mxu0 0
        %994 = vmatprep.subr.bf16.mxu0 0
        %995 = vmatpush2.bf16.xpose.msra.mxu0 0
        %996 = vmatprep.subr.bf16.mxu0 0
        %997 = vmatpush2.bf16.xpose.msra.mxu0 0
        %998 = vmatprep.subr.bf16.mxu0 0
        %999 = vmatpush2.bf16.xpose.msra.mxu0 0
        %1000 = vmatprep.subr.bf16.mxu0 0
        %1001 = vmatpush2.bf16.xpose.msra.mxu0 0
        %1002 = vmatprep.subr.bf16.mxu0 0
        %1003 = vmatpush2.bf16.xpose.msra.mxu0 0
        %1004 = vmatprep.subr.bf16.mxu0 0
        %1005 = vmatpush2.bf16.xpose.msra.mxu0 0
        %1006 = vmatprep.mubr.bf16.mxu0 0
        %1007 = vmatmul.mubr.bf16.gmra.mxu0 %v969
        %v1008 = vpop.f32.mrf.mxu0
        %v1009 = vadd.f32 %v921, %v1008
        %v1010 = vpop.f32.mrf.mxu0
        %v1011 = vpop.f32.mrf.mxu0
        %v1012 = vpop.f32.mrf.mxu0
        %1013 = vdwg.mxu0
        %v1015 = vsel %vm967, %v873, 0
        %v1018 = vsel %vm967, %v881, 0
        %1020 = vmatprep.subr.bf16.mxu0 0
        %1021 = vmatpush1.bf16.xpose.msra.mxu0 0
        %1022 = vmatprep.subr.bf16.mxu0 0
        %1023 = vmatpush1.bf16.xpose.msra.mxu0 0
        %1024 = vmatprep.subr.bf16.mxu0 0
        %1025 = vmatpush1.bf16.xpose.msra.mxu0 0
        %1026 = vmatprep.subr.bf16.mxu0 0
        %1027 = vmatpush1.bf16.xpose.msra.mxu0 0
        %1028 = vmatprep.subr.bf16.mxu0 0
        %1029 = vmatpush1.bf16.xpose.msra.mxu0 0
        %1030 = vmatprep.subr.bf16.mxu0 0
        %1031 = vmatpush1.bf16.xpose.msra.mxu0 0
        %1032 = vmatprep.subr.bf16.mxu0 0
        %1033 = vmatpush1.bf16.xpose.msra.mxu0 0
        %1034 = vmatprep.subr.bf16.mxu0 0
        %1035 = vmatpush1.bf16.xpose.msra.mxu0 %v1018
        %1036 = vmatprep.subr.bf16.mxu0 0
        %1037 = vmatpush2.bf16.xpose.msra.mxu0 0
        %1038 = vmatprep.subr.bf16.mxu0 0
        %1039 = vmatpush2.bf16.xpose.msra.mxu0 0
        %1040 = vmatprep.subr.bf16.mxu0 0
        %1041 = vmatpush2.bf16.xpose.msra.mxu0 0
        %1042 = vmatprep.subr.bf16.mxu0 0
        %1043 = vmatpush2.bf16.xpose.msra.mxu0 0
        %1044 = vmatprep.subr.bf16.mxu0 0
        %1045 = vmatpush2.bf16.xpose.msra.mxu0 0
        %1046 = vmatprep.subr.bf16.mxu0 0
        %1047 = vmatpush2.bf16.xpose.msra.mxu0 0
        %1048 = vmatprep.subr.bf16.mxu0 0
        %1049 = vmatpush2.bf16.xpose.msra.mxu0 0
        %1050 = vmatprep.subr.bf16.mxu0 0
        %1051 = vmatpush2.bf16.xpose.msra.mxu0 0
        %1052 = vmatprep.mubr.bf16.mxu0 0
        %1053 = vmatmul.mubr.bf16.gmra.mxu0 %v1015
        %v1054 = vpop.f32.mrf.mxu0
        %v1055 = vadd.f32 %v935, %v1054
        %v1056 = vpop.f32.mrf.mxu0
        %v1057 = vpop.f32.mrf.mxu0
        %v1058 = vpop.f32.mrf.mxu0
        %1059 = vdwg.mxu0
        %v1061 = vsel %vm967, %v874, 0
        %v1064 = vsel %vm967, %v882, 0
        %1066 = vmatprep.subr.bf16.mxu0 0
        %1067 = vmatpush1.bf16.xpose.msra.mxu0 0
        %1068 = vmatprep.subr.bf16.mxu0 0
        %1069 = vmatpush1.bf16.xpose.msra.mxu0 0
        %1070 = vmatprep.subr.bf16.mxu0 0
        %1071 = vmatpush1.bf16.xpose.msra.mxu0 0
        %1072 = vmatprep.subr.bf16.mxu0 0
        %1073 = vmatpush1.bf16.xpose.msra.mxu0 0
        %1074 = vmatprep.subr.bf16.mxu0 0
        %1075 = vmatpush1.bf16.xpose.msra.mxu0 0
        %1076 = vmatprep.subr.bf16.mxu0 0
        %1077 = vmatpush1.bf16.xpose.msra.mxu0 0
        %1078 = vmatprep.subr.bf16.mxu0 0
        %1079 = vmatpush1.bf16.xpose.msra.mxu0 0
        %1080 = vmatprep.subr.bf16.mxu0 0
        %1081 = vmatpush1.bf16.xpose.msra.mxu0 %v1064
        %1082 = vmatprep.subr.bf16.mxu0 0
        %1083 = vmatpush2.bf16.xpose.msra.mxu0 0
        %1084 = vmatprep.subr.bf16.mxu0 0
        %1085 = vmatpush2.bf16.xpose.msra.mxu0 0
        %1086 = vmatprep.subr.bf16.mxu0 0
        %1087 = vmatpush2.bf16.xpose.msra.mxu0 0
        %1088 = vmatprep.subr.bf16.mxu0 0
        %1089 = vmatpush2.bf16.xpose.msra.mxu0 0
        %1090 = vmatprep.subr.bf16.mxu0 0
        %1091 = vmatpush2.bf16.xpose.msra.mxu0 0
        %1092 = vmatprep.subr.bf16.mxu0 0
        %1093 = vmatpush2.bf16.xpose.msra.mxu0 0
        %1094 = vmatprep.subr.bf16.mxu0 0
        %1095 = vmatpush2.bf16.xpose.msra.mxu0 0
        %1096 = vmatprep.subr.bf16.mxu0 0
        %1097 = vmatpush2.bf16.xpose.msra.mxu0 0
        %1098 = vmatprep.mubr.bf16.mxu0 0
        %1099 = vmatmul.mubr.bf16.gmra.mxu0 %v1061
        %v1100 = vpop.f32.mrf.mxu0
        %v1101 = vadd.f32 %v943, %v1100
        %v1102 = vpop.f32.mrf.mxu0
        %v1103 = vpop.f32.mrf.mxu0
        %v1104 = vpop.f32.mrf.mxu0
        %1105 = vdwg.mxu0
        %v1107 = vsel %vm967, %v875, 0
        %v1110 = vsel %vm967, %v883, 0
        %1112 = vmatprep.subr.bf16.mxu0 0
        %1113 = vmatpush1.bf16.xpose.msra.mxu0 0
        %1114 = vmatprep.subr.bf16.mxu0 0
        %1115 = vmatpush1.bf16.xpose.msra.mxu0 0
        %1116 = vmatprep.subr.bf16.mxu0 0
        %1117 = vmatpush1.bf16.xpose.msra.mxu0 0
        %1118 = vmatprep.subr.bf16.mxu0 0
        %1119 = vmatpush1.bf16.xpose.msra.mxu0 0
        %1120 = vmatprep.subr.bf16.mxu0 0
        %1121 = vmatpush1.bf16.xpose.msra.mxu0 0
        %1122 = vmatprep.subr.bf16.mxu0 0
        %1123 = vmatpush1.bf16.xpose.msra.mxu0 0
        %1124 = vmatprep.subr.bf16.mxu0 0
        %1125 = vmatpush1.bf16.xpose.msra.mxu0 0
        %1126 = vmatprep.subr.bf16.mxu0 0
        %1127 = vmatpush1.bf16.xpose.msra.mxu0 %v1110
        %1128 = vmatprep.subr.bf16.mxu0 0
        %1129 = vmatpush2.bf16.xpose.msra.mxu0 0
        %1130 = vmatprep.subr.bf16.mxu0 0
        %1131 = vmatpush2.bf16.xpose.msra.mxu0 0
        %1132 = vmatprep.subr.bf16.mxu0 0
        %1133 = vmatpush2.bf16.xpose.msra.mxu0 0
        %1134 = vmatprep.subr.bf16.mxu0 0
        %1135 = vmatpush2.bf16.xpose.msra.mxu0 0
        %1136 = vmatprep.subr.bf16.mxu0 0
        %1137 = vmatpush2.bf16.xpose.msra.mxu0 0
        %1138 = vmatprep.subr.bf16.mxu0 0
        %1139 = vmatpush2.bf16.xpose.msra.mxu0 0
        %1140 = vmatprep.subr.bf16.mxu0 0
        %1141 = vmatpush2.bf16.xpose.msra.mxu0 0
        %1142 = vmatprep.subr.bf16.mxu0 0
        %1143 = vmatpush2.bf16.xpose.msra.mxu0 0
        %1144 = vmatprep.mubr.bf16.mxu0 0
        %1145 = vmatmul.mubr.bf16.gmra.mxu0 %v1107
        %v1146 = vpop.f32.mrf.mxu0
        %v1147 = vadd.f32 %v945, %v1146
        %v1148 = vpop.f32.mrf.mxu0
        %v1149 = vpop.f32.mrf.mxu0
        %v1150 = vpop.f32.mrf.mxu0
        %1151 = vdwg.mxu0
        %v1153 = vsel %vm967, %v876, 0
        %v1156 = vsel %vm967, %v884, 0
        %1158 = vmatprep.subr.bf16.mxu0 0
        %1159 = vmatpush1.bf16.xpose.msra.mxu0 0
        %1160 = vmatprep.subr.bf16.mxu0 0
        %1161 = vmatpush1.bf16.xpose.msra.mxu0 0
        %1162 = vmatprep.subr.bf16.mxu0 0
        %1163 = vmatpush1.bf16.xpose.msra.mxu0 0
        %1164 = vmatprep.subr.bf16.mxu0 0
        %1165 = vmatpush1.bf16.xpose.msra.mxu0 0
        %1166 = vmatprep.subr.bf16.mxu0 0
        %1167 = vmatpush1.bf16.xpose.msra.mxu0 0
        %1168 = vmatprep.subr.bf16.mxu0 0
        %1169 = vmatpush1.bf16.xpose.msra.mxu0 0
        %1170 = vmatprep.subr.bf16.mxu0 0
        %1171 = vmatpush1.bf16.xpose.msra.mxu0 0
        %1172 = vmatprep.subr.bf16.mxu0 0
        %1173 = vmatpush1.bf16.xpose.msra.mxu0 %v1156
        %1174 = vmatprep.subr.bf16.mxu0 0
        %1175 = vmatpush2.bf16.xpose.msra.mxu0 0
        %1176 = vmatprep.subr.bf16.mxu0 0
        %1177 = vmatpush2.bf16.xpose.msra.mxu0 0
        %1178 = vmatprep.subr.bf16.mxu0 0
        %1179 = vmatpush2.bf16.xpose.msra.mxu0 0
        %1180 = vmatprep.subr.bf16.mxu0 0
        %1181 = vmatpush2.bf16.xpose.msra.mxu0 0
        %1182 = vmatprep.subr.bf16.mxu0 0
        %1183 = vmatpush2.bf16.xpose.msra.mxu0 0
        %1184 = vmatprep.subr.bf16.mxu0 0
        %1185 = vmatpush2.bf16.xpose.msra.mxu0 0
        %1186 = vmatprep.subr.bf16.mxu0 0
        %1187 = vmatpush2.bf16.xpose.msra.mxu0 0
        %1188 = vmatprep.subr.bf16.mxu0 0
        %1189 = vmatpush2.bf16.xpose.msra.mxu0 0
        %1190 = vmatprep.mubr.bf16.mxu0 0
        %1191 = vmatmul.mubr.bf16.gmra.mxu0 %v1153
        %v1192 = vpop.f32.mrf.mxu0
        %v1193 = vadd.f32 %v928, %v1192
        %v1194 = vpop.f32.mrf.mxu0
        %v1195 = vpop.f32.mrf.mxu0
        %v1196 = vpop.f32.mrf.mxu0
        %1197 = vdwg.mxu0
        %v1199 = vsel %vm967, %v877, 0
        %v1202 = vsel %vm967, %v885, 0
        %1204 = vmatprep.subr.bf16.mxu0 0
        %1205 = vmatpush1.bf16.xpose.msra.mxu0 0
        %1206 = vmatprep.subr.bf16.mxu0 0
        %1207 = vmatpush1.bf16.xpose.msra.mxu0 0
        %1208 = vmatprep.subr.bf16.mxu0 0
        %1209 = vmatpush1.bf16.xpose.msra.mxu0 0
        %1210 = vmatprep.subr.bf16.mxu0 0
        %1211 = vmatpush1.bf16.xpose.msra.mxu0 0
        %1212 = vmatprep.subr.bf16.mxu0 0
        %1213 = vmatpush1.bf16.xpose.msra.mxu0 0
        %1214 = vmatprep.subr.bf16.mxu0 0
        %1215 = vmatpush1.bf16.xpose.msra.mxu0 0
        %1216 = vmatprep.subr.bf16.mxu0 0
        %1217 = vmatpush1.bf16.xpose.msra.mxu0 0
        %1218 = vmatprep.subr.bf16.mxu0 0
        %1219 = vmatpush1.bf16.xpose.msra.mxu0 %v1202
        %1220 = vmatprep.subr.bf16.mxu0 0
        %1221 = vmatpush2.bf16.xpose.msra.mxu0 0
        %1222 = vmatprep.subr.bf16.mxu0 0
        %1223 = vmatpush2.bf16.xpose.msra.mxu0 0
        %1224 = vmatprep.subr.bf16.mxu0 0
        %1225 = vmatpush2.bf16.xpose.msra.mxu0 0
        %1226 = vmatprep.subr.bf16.mxu0 0
        %1227 = vmatpush2.bf16.xpose.msra.mxu0 0
        %1228 = vmatprep.subr.bf16.mxu0 0
        %1229 = vmatpush2.bf16.xpose.msra.mxu0 0
        %1230 = vmatprep.subr.bf16.mxu0 0
        %1231 = vmatpush2.bf16.xpose.msra.mxu0 0
        %1232 = vmatprep.subr.bf16.mxu0 0
        %1233 = vmatpush2.bf16.xpose.msra.mxu0 0
        %1234 = vmatprep.subr.bf16.mxu0 0
        %1235 = vmatpush2.bf16.xpose.msra.mxu0 0
        %1236 = vmatprep.mubr.bf16.mxu0 0
        %1237 = vmatmul.mubr.bf16.gmra.mxu0 %v1199
        %v1238 = vpop.f32.mrf.mxu0
        %v1239 = vadd.f32 %v942, %v1238
        %v1240 = vpop.f32.mrf.mxu0
        %v1241 = vpop.f32.mrf.mxu0
        %v1242 = vpop.f32.mrf.mxu0
        %1243 = vdwg.mxu0
        %v1245 = vsel %vm967, %v878, 0
        %v1248 = vsel %vm967, %v886, 0
        %1250 = vmatprep.subr.bf16.mxu0 0
        %1251 = vmatpush1.bf16.xpose.msra.mxu0 0
        %1252 = vmatprep.subr.bf16.mxu0 0
        %1253 = vmatpush1.bf16.xpose.msra.mxu0 0
        %1254 = vmatprep.subr.bf16.mxu0 0
        %1255 = vmatpush1.bf16.xpose.msra.mxu0 0
        %1256 = vmatprep.subr.bf16.mxu0 0
        %1257 = vmatpush1.bf16.xpose.msra.mxu0 0
        %1258 = vmatprep.subr.bf16.mxu0 0
        %1259 = vmatpush1.bf16.xpose.msra.mxu0 0
        %1260 = vmatprep.subr.bf16.mxu0 0
        %1261 = vmatpush1.bf16.xpose.msra.mxu0 0
        %1262 = vmatprep.subr.bf16.mxu0 0
        %1263 = vmatpush1.bf16.xpose.msra.mxu0 0
        %1264 = vmatprep.subr.bf16.mxu0 0
        %1265 = vmatpush1.bf16.xpose.msra.mxu0 %v1248
        %1266 = vmatprep.subr.bf16.mxu0 0
        %1267 = vmatpush2.bf16.xpose.msra.mxu0 0
        %1268 = vmatprep.subr.bf16.mxu0 0
        %1269 = vmatpush2.bf16.xpose.msra.mxu0 0
        %1270 = vmatprep.subr.bf16.mxu0 0
        %1271 = vmatpush2.bf16.xpose.msra.mxu0 0
        %1272 = vmatprep.subr.bf16.mxu0 0
        %1273 = vmatpush2.bf16.xpose.msra.mxu0 0
        %1274 = vmatprep.subr.bf16.mxu0 0
        %1275 = vmatpush2.bf16.xpose.msra.mxu0 0
        %1276 = vmatprep.subr.bf16.mxu0 0
        %1277 = vmatpush2.bf16.xpose.msra.mxu0 0
        %1278 = vmatprep.subr.bf16.mxu0 0
        %1279 = vmatpush2.bf16.xpose.msra.mxu0 0
        %1280 = vmatprep.subr.bf16.mxu0 0
        %1281 = vmatpush2.bf16.xpose.msra.mxu0 0
        %1282 = vmatprep.mubr.bf16.mxu0 0
        %1283 = vmatmul.mubr.bf16.gmra.mxu0 %v1245
        %v1284 = vpop.f32.mrf.mxu0
        %v1285 = vadd.f32 %v944, %v1284
        %v1286 = vpop.f32.mrf.mxu0
        %v1287 = vpop.f32.mrf.mxu0
        %v1288 = vpop.f32.mrf.mxu0
        %1289 = vdwg.mxu0
        %v1291 = vsel %vm967, %v879, 0
        %v1294 = vsel %vm967, %v887, 0
        %1296 = vmatprep.subr.bf16.mxu0 0
        %1297 = vmatpush1.bf16.xpose.msra.mxu0 0
        %1298 = vmatprep.subr.bf16.mxu0 0
        %1299 = vmatpush1.bf16.xpose.msra.mxu0 0
        %1300 = vmatprep.subr.bf16.mxu0 0
        %1301 = vmatpush1.bf16.xpose.msra.mxu0 0
        %1302 = vmatprep.subr.bf16.mxu0 0
        %1303 = vmatpush1.bf16.xpose.msra.mxu0 0
        %1304 = vmatprep.subr.bf16.mxu0 0
        %1305 = vmatpush1.bf16.xpose.msra.mxu0 0
        %1306 = vmatprep.subr.bf16.mxu0 0
        %1307 = vmatpush1.bf16.xpose.msra.mxu0 0
        %1308 = vmatprep.subr.bf16.mxu0 0
        %1309 = vmatpush1.bf16.xpose.msra.mxu0 0
        %1310 = vmatprep.subr.bf16.mxu0 0
        %1311 = vmatpush1.bf16.xpose.msra.mxu0 %v1294
        %1312 = vmatprep.subr.bf16.mxu0 0
        %1313 = vmatpush2.bf16.xpose.msra.mxu0 0
        %1314 = vmatprep.subr.bf16.mxu0 0
        %1315 = vmatpush2.bf16.xpose.msra.mxu0 0
        %1316 = vmatprep.subr.bf16.mxu0 0
        %1317 = vmatpush2.bf16.xpose.msra.mxu0 0
        %1318 = vmatprep.subr.bf16.mxu0 0
        %1319 = vmatpush2.bf16.xpose.msra.mxu0 0
        %1320 = vmatprep.subr.bf16.mxu0 0
        %1321 = vmatpush2.bf16.xpose.msra.mxu0 0
        %1322 = vmatprep.subr.bf16.mxu0 0
        %1323 = vmatpush2.bf16.xpose.msra.mxu0 0
        %1324 = vmatprep.subr.bf16.mxu0 0
        %1325 = vmatpush2.bf16.xpose.msra.mxu0 0
        %1326 = vmatprep.subr.bf16.mxu0 0
        %1327 = vmatpush2.bf16.xpose.msra.mxu0 0
        %1328 = vmatprep.mubr.bf16.mxu0 0
        %1329 = vmatmul.mubr.bf16.gmra.mxu0 %v1291
        %v1330 = vpop.f32.mrf.mxu0
        %v1331 = vadd.f32 %v946, %v1330
        %v1332 = vpop.f32.mrf.mxu0
        %v1333 = vpop.f32.mrf.mxu0
        %v1334 = vpop.f32.mrf.mxu0
        %1335 = vdwg.mxu0
        %vm1336 = vcmask 57344
        %v1337 = vsel %vm1336, %v1009, -inf
        %1338 = vmax.xlane.f32.xlu0 %v1337
        %v1339 = vpop.xlane.xlu0 %1338
        %v1340 = vsel %vm1336, %v1055, -inf
        %1341 = vmax.xlane.f32.xlu0 %v1340
        %v1342 = vpop.xlane.xlu0 %1341
        %v1343 = vsel %vm1336, %v1101, -inf
        %1344 = vmax.xlane.f32.xlu0 %v1343
        %v1345 = vpop.xlane.xlu0 %1344
        %v1346 = vsel %vm1336, %v1147, -inf
        %1347 = vmax.xlane.f32.xlu0 %v1346
        %v1348 = vpop.xlane.xlu0 %1347
        %v1349 = vsel %vm1336, %v1193, -inf
        %1350 = vmax.xlane.f32.xlu0 %v1349
        %v1351 = vpop.xlane.xlu0 %1350
        %v1352 = vsel %vm1336, %v1239, -inf
        %1353 = vmax.xlane.f32.xlu0 %v1352
        %v1354 = vpop.xlane.xlu0 %1353
        %v1355 = vsel %vm1336, %v1285, -inf
        %1356 = vmax.xlane.f32.xlu0 %v1355
        %v1357 = vpop.xlane.xlu0 %1356
        %v1358 = vsel %vm1336, %v1331, -inf
        %1359 = vmax.xlane.f32.xlu0 %v1358
        %v1360 = vpop.xlane.xlu0 %1359
        %v1361 = vsub.f32 %v1009, %v1339
        %v1362 = vsub.f32 %v1055, %v1342
        %v1363 = vsub.f32 %v1101, %v1345
        %v1364 = vsub.f32 %v1147, %v1348
        %v1365 = vsub.f32 %v1193, %v1351
        %v1366 = vsub.f32 %v1239, %v1354
        %v1367 = vsub.f32 %v1285, %v1357
        %v1368 = vsub.f32 %v1331, %v1360
        %v1369 = vmul.f32 %v1361, 1.442695
        %v1370 = vpow.pop %v1369
        %v1371 = vmul.f32 %v1362, 1.442695
        %v1372 = vpow.pop %v1371
        %v1373 = vmul.f32 %v1363, 1.442695
        %v1374 = vpow.pop %v1373
        %v1375 = vmul.f32 %v1364, 1.442695
        %v1376 = vpow.pop %v1375
        %v1377 = vmul.f32 %v1365, 1.442695
        %v1378 = vpow.pop %v1377
        %v1379 = vmul.f32 %v1366, 1.442695
        %v1380 = vpow.pop %v1379
        %v1381 = vmul.f32 %v1367, 1.442695
        %v1382 = vpow.pop %v1381
        %v1383 = vmul.f32 %v1368, 1.442695
        %v1384 = vpow.pop %v1383
        %v1385 = vsel %vm1336, %v1370, 0.0
        %1386 = vadd.xlane.f32.xlu0 %v1385
        %v1387 = vpop.xlane.xlu0 %1386
        %v1388 = vsel %vm1336, %v1372, 0.0
        %1389 = vadd.xlane.f32.xlu0 %v1388
        %v1390 = vpop.xlane.xlu0 %1389
        %v1391 = vsel %vm1336, %v1374, 0.0
        %1392 = vadd.xlane.f32.xlu0 %v1391
        %v1393 = vpop.xlane.xlu0 %1392
        %v1394 = vsel %vm1336, %v1376, 0.0
        %1395 = vadd.xlane.f32.xlu0 %v1394
        %v1396 = vpop.xlane.xlu0 %1395
        %v1397 = vsel %vm1336, %v1378, 0.0
        %1398 = vadd.xlane.f32.xlu0 %v1397
        %v1399 = vpop.xlane.xlu0 %1398
        %v1400 = vsel %vm1336, %v1380, 0.0
        %1401 = vadd.xlane.f32.xlu0 %v1400
        %v1402 = vpop.xlane.xlu0 %1401
        %v1403 = vsel %vm1336, %v1382, 0.0
        %1404 = vadd.xlane.f32.xlu0 %v1403
        %v1405 = vpop.xlane.xlu0 %1404
        %v1406 = vsel %vm1336, %v1384, 0.0
        %1407 = vadd.xlane.f32.xlu0 %v1406
        %v1408 = vpop.xlane.xlu0 %1407
        %v1409 = vrcp.pop %v1387
        %v1410 = vrcp.pop %v1390
        %v1411 = vrcp.pop %v1393
        %v1412 = vrcp.pop %v1396
        %v1413 = vrcp.pop %v1399
        %v1414 = vrcp.pop %v1402
        %v1415 = vrcp.pop %v1405
        %v1416 = vrcp.pop %v1408
        %v1417 = vmul.f32 %v1370, %v1409
        %v1418 = vmul.f32 %v1372, %v1410
        %v1419 = vmul.f32 %v1374, %v1411
        %v1420 = vmul.f32 %v1376, %v1412
        %v1421 = vmul.f32 %v1378, %v1413
        %v1422 = vmul.f32 %v1380, %v1414
        %v1423 = vmul.f32 %v1382, %v1415
        %v1424 = vmul.f32 %v1384, %v1416
        %v1425 = vpack.c.bf16 %v1417, %v1417
        %v1426 = vpack.c.bf16 %v1418, %v1418
        %v1427 = vpack.c.bf16 %v1419, %v1419
        %v1428 = vpack.c.bf16 %v1420, %v1420
        %v1429 = vpack.c.bf16 %v1421, %v1421
        %v1430 = vpack.c.bf16 %v1422, %v1422
        %v1431 = vpack.c.bf16 %v1423, %v1423
        %v1432 = vpack.c.bf16 %v1424, %v1424
        %v1434 = vsel %vm967, %v1425, 0
        %vm1436 = vcmask 1043456
        %v1438 = vsel %vm1436, %v888, 0
        %1440 = vmatprep.subr.bf16.mxu0 0
        %1441 = vmatpush1.bf16.msra.mxu0 0
        %1442 = vmatprep.subr.bf16.mxu0 0
        %1443 = vmatpush1.bf16.msra.mxu0 0
        %1444 = vmatprep.subr.bf16.mxu0 0
        %1445 = vmatpush1.bf16.msra.mxu0 0
        %1446 = vmatprep.subr.bf16.mxu0 0
        %1447 = vmatpush1.bf16.msra.mxu0 0
        %1448 = vmatprep.subr.bf16.mxu0 0
        %1449 = vmatpush1.bf16.msra.mxu0 0
        %1450 = vmatprep.subr.bf16.mxu0 0
        %1451 = vmatpush1.bf16.msra.mxu0 0
        %1452 = vmatprep.subr.bf16.mxu0 0
        %1453 = vmatpush1.bf16.msra.mxu0 0
        %1454 = vmatprep.subr.bf16.mxu0 0
        %1455 = vmatpush1.bf16.msra.mxu0 %v1438
        %1456 = vmatprep.subr.bf16.mxu0 0
        %1457 = vmatpush2.bf16.msra.mxu0 0
        %1458 = vmatprep.subr.bf16.mxu0 0
        %1459 = vmatpush2.bf16.msra.mxu0 0
        %1460 = vmatprep.subr.bf16.mxu0 0
        %1461 = vmatpush2.bf16.msra.mxu0 0
        %1462 = vmatprep.subr.bf16.mxu0 0
        %1463 = vmatpush2.bf16.msra.mxu0 0
        %1464 = vmatprep.subr.bf16.mxu0 0
        %1465 = vmatpush2.bf16.msra.mxu0 0
        %1466 = vmatprep.subr.bf16.mxu0 0
        %1467 = vmatpush2.bf16.msra.mxu0 0
        %1468 = vmatprep.subr.bf16.mxu0 0
        %1469 = vmatpush2.bf16.msra.mxu0 0
        %1470 = vmatprep.subr.bf16.mxu0 0
        %1471 = vmatpush2.bf16.msra.mxu0 0
        %1472 = vmatprep.mubr.bf16.mxu0 0
        %1473 = vmatmul.mubr.bf16.gmra.mxu0 %v1434
        %v1474 = vpop.f32.mrf.mxu0
        %v1475 = vadd.f32 0.0, %v1474
        %v1476 = vpop.f32.mrf.mxu0
        %v1477 = vpop.f32.mrf.mxu0
        %v1478 = vpop.f32.mrf.mxu0
        %1479 = vdwg.mxu0
        %v1481 = vsel %vm967, %v1426, 0
        %v1484 = vsel %vm1436, %v889, 0
        %1486 = vmatprep.subr.bf16.mxu0 0
        %1487 = vmatpush1.bf16.msra.mxu0 0
        %1488 = vmatprep.subr.bf16.mxu0 0
        %1489 = vmatpush1.bf16.msra.mxu0 0
        %1490 = vmatprep.subr.bf16.mxu0 0
        %1491 = vmatpush1.bf16.msra.mxu0 0
        %1492 = vmatprep.subr.bf16.mxu0 0
        %1493 = vmatpush1.bf16.msra.mxu0 0
        %1494 = vmatprep.subr.bf16.mxu0 0
        %1495 = vmatpush1.bf16.msra.mxu0 0
        %1496 = vmatprep.subr.bf16.mxu0 0
        %1497 = vmatpush1.bf16.msra.mxu0 0
        %1498 = vmatprep.subr.bf16.mxu0 0
        %1499 = vmatpush1.bf16.msra.mxu0 0
        %1500 = vmatprep.subr.bf16.mxu0 0
        %1501 = vmatpush1.bf16.msra.mxu0 %v1484
        %1502 = vmatprep.subr.bf16.mxu0 0
        %1503 = vmatpush2.bf16.msra.mxu0 0
        %1504 = vmatprep.subr.bf16.mxu0 0
        %1505 = vmatpush2.bf16.msra.mxu0 0
        %1506 = vmatprep.subr.bf16.mxu0 0
        %1507 = vmatpush2.bf16.msra.mxu0 0
        %1508 = vmatprep.subr.bf16.mxu0 0
        %1509 = vmatpush2.bf16.msra.mxu0 0
        %1510 = vmatprep.subr.bf16.mxu0 0
        %1511 = vmatpush2.bf16.msra.mxu0 0
        %1512 = vmatprep.subr.bf16.mxu0 0
        %1513 = vmatpush2.bf16.msra.mxu0 0
        %1514 = vmatprep.subr.bf16.mxu0 0
        %1515 = vmatpush2.bf16.msra.mxu0 0
        %1516 = vmatprep.subr.bf16.mxu0 0
        %1517 = vmatpush2.bf16.msra.mxu0 0
        %1518 = vmatprep.mubr.bf16.mxu0 0
        %1519 = vmatmul.mubr.bf16.gmra.mxu0 %v1481
        %v1520 = vpop.f32.mrf.mxu0
        %v1521 = vadd.f32 0.0, %v1520
        %v1522 = vpop.f32.mrf.mxu0
        %v1523 = vpop.f32.mrf.mxu0
        %v1524 = vpop.f32.mrf.mxu0
        %1525 = vdwg.mxu0
        %v1527 = vsel %vm967, %v1427, 0
        %v1530 = vsel %vm1436, %v890, 0
        %1532 = vmatprep.subr.bf16.mxu0 0
        %1533 = vmatpush1.bf16.msra.mxu0 0
        %1534 = vmatprep.subr.bf16.mxu0 0
        %1535 = vmatpush1.bf16.msra.mxu0 0
        %1536 = vmatprep.subr.bf16.mxu0 0
        %1537 = vmatpush1.bf16.msra.mxu0 0
        %1538 = vmatprep.subr.bf16.mxu0 0
        %1539 = vmatpush1.bf16.msra.mxu0 0
        %1540 = vmatprep.subr.bf16.mxu0 0
        %1541 = vmatpush1.bf16.msra.mxu0 0
        %1542 = vmatprep.subr.bf16.mxu0 0
        %1543 = vmatpush1.bf16.msra.mxu0 0
        %1544 = vmatprep.subr.bf16.mxu0 0
        %1545 = vmatpush1.bf16.msra.mxu0 0
        %1546 = vmatprep.subr.bf16.mxu0 0
        %1547 = vmatpush1.bf16.msra.mxu0 %v1530
        %1548 = vmatprep.subr.bf16.mxu0 0
        %1549 = vmatpush2.bf16.msra.mxu0 0
        %1550 = vmatprep.subr.bf16.mxu0 0
        %1551 = vmatpush2.bf16.msra.mxu0 0
        %1552 = vmatprep.subr.bf16.mxu0 0
        %1553 = vmatpush2.bf16.msra.mxu0 0
        %1554 = vmatprep.subr.bf16.mxu0 0
        %1555 = vmatpush2.bf16.msra.mxu0 0
        %1556 = vmatprep.subr.bf16.mxu0 0
        %1557 = vmatpush2.bf16.msra.mxu0 0
        %1558 = vmatprep.subr.bf16.mxu0 0
        %1559 = vmatpush2.bf16.msra.mxu0 0
        %1560 = vmatprep.subr.bf16.mxu0 0
        %1561 = vmatpush2.bf16.msra.mxu0 0
        %1562 = vmatprep.subr.bf16.mxu0 0
        %1563 = vmatpush2.bf16.msra.mxu0 0
        %1564 = vmatprep.mubr.bf16.mxu0 0
        %1565 = vmatmul.mubr.bf16.gmra.mxu0 %v1527
        %v1566 = vpop.f32.mrf.mxu0
        %v1567 = vadd.f32 0.0, %v1566
        %v1568 = vpop.f32.mrf.mxu0
        %v1569 = vpop.f32.mrf.mxu0
        %v1570 = vpop.f32.mrf.mxu0
        %1571 = vdwg.mxu0
        %v1573 = vsel %vm967, %v1428, 0
        %v1576 = vsel %vm1436, %v891, 0
        %1578 = vmatprep.subr.bf16.mxu0 0
        %1579 = vmatpush1.bf16.msra.mxu0 0
        %1580 = vmatprep.subr.bf16.mxu0 0
        %1581 = vmatpush1.bf16.msra.mxu0 0
        %1582 = vmatprep.subr.bf16.mxu0 0
        %1583 = vmatpush1.bf16.msra.mxu0 0
        %1584 = vmatprep.subr.bf16.mxu0 0
        %1585 = vmatpush1.bf16.msra.mxu0 0
        %1586 = vmatprep.subr.bf16.mxu0 0
        %1587 = vmatpush1.bf16.msra.mxu0 0
        %1588 = vmatprep.subr.bf16.mxu0 0
        %1589 = vmatpush1.bf16.msra.mxu0 0
        %1590 = vmatprep.subr.bf16.mxu0 0
        %1591 = vmatpush1.bf16.msra.mxu0 0
        %1592 = vmatprep.subr.bf16.mxu0 0
        %1593 = vmatpush1.bf16.msra.mxu0 %v1576
        %1594 = vmatprep.subr.bf16.mxu0 0
        %1595 = vmatpush2.bf16.msra.mxu0 0
        %1596 = vmatprep.subr.bf16.mxu0 0
        %1597 = vmatpush2.bf16.msra.mxu0 0
        %1598 = vmatprep.subr.bf16.mxu0 0
        %1599 = vmatpush2.bf16.msra.mxu0 0
        %1600 = vmatprep.subr.bf16.mxu0 0
        %1601 = vmatpush2.bf16.msra.mxu0 0
        %1602 = vmatprep.subr.bf16.mxu0 0
        %1603 = vmatpush2.bf16.msra.mxu0 0
        %1604 = vmatprep.subr.bf16.mxu0 0
        %1605 = vmatpush2.bf16.msra.mxu0 0
        %1606 = vmatprep.subr.bf16.mxu0 0
        %1607 = vmatpush2.bf16.msra.mxu0 0
        %1608 = vmatprep.subr.bf16.mxu0 0
        %1609 = vmatpush2.bf16.msra.mxu0 0
        %1610 = vmatprep.mubr.bf16.mxu0 0
        %1611 = vmatmul.mubr.bf16.gmra.mxu0 %v1573
        %v1612 = vpop.f32.mrf.mxu0
        %v1613 = vadd.f32 0.0, %v1612
        %v1614 = vpop.f32.mrf.mxu0
        %v1615 = vpop.f32.mrf.mxu0
        %v1616 = vpop.f32.mrf.mxu0
        %1617 = vdwg.mxu0
        %v1619 = vsel %vm967, %v1429, 0
        %v1622 = vsel %vm1436, %v892, 0
        %1624 = vmatprep.subr.bf16.mxu0 0
        %1625 = vmatpush1.bf16.msra.mxu0 0
        %1626 = vmatprep.subr.bf16.mxu0 0
        %1627 = vmatpush1.bf16.msra.mxu0 0
        %1628 = vmatprep.subr.bf16.mxu0 0
        %1629 = vmatpush1.bf16.msra.mxu0 0
        %1630 = vmatprep.subr.bf16.mxu0 0
        %1631 = vmatpush1.bf16.msra.mxu0 0
        %1632 = vmatprep.subr.bf16.mxu0 0
        %1633 = vmatpush1.bf16.msra.mxu0 0
        %1634 = vmatprep.subr.bf16.mxu0 0
        %1635 = vmatpush1.bf16.msra.mxu0 0
        %1636 = vmatprep.subr.bf16.mxu0 0
        %1637 = vmatpush1.bf16.msra.mxu0 0
        %1638 = vmatprep.subr.bf16.mxu0 0
        %1639 = vmatpush1.bf16.msra.mxu0 %v1622
        %1640 = vmatprep.subr.bf16.mxu0 0
        %1641 = vmatpush2.bf16.msra.mxu0 0
        %1642 = vmatprep.subr.bf16.mxu0 0
        %1643 = vmatpush2.bf16.msra.mxu0 0
        %1644 = vmatprep.subr.bf16.mxu0 0
        %1645 = vmatpush2.bf16.msra.mxu0 0
        %1646 = vmatprep.subr.bf16.mxu0 0
        %1647 = vmatpush2.bf16.msra.mxu0 0
        %1648 = vmatprep.subr.bf16.mxu0 0
        %1649 = vmatpush2.bf16.msra.mxu0 0
        %1650 = vmatprep.subr.bf16.mxu0 0
        %1651 = vmatpush2.bf16.msra.mxu0 0
        %1652 = vmatprep.subr.bf16.mxu0 0
        %1653 = vmatpush2.bf16.msra.mxu0 0
        %1654 = vmatprep.subr.bf16.mxu0 0
        %1655 = vmatpush2.bf16.msra.mxu0 0
        %1656 = vmatprep.mubr.bf16.mxu0 0
        %1657 = vmatmul.mubr.bf16.gmra.mxu0 %v1619
        %v1658 = vpop.f32.mrf.mxu0
        %v1659 = vadd.f32 0.0, %v1658
        %v1660 = vpop.f32.mrf.mxu0
        %v1661 = vpop.f32.mrf.mxu0
        %v1662 = vpop.f32.mrf.mxu0
        %1663 = vdwg.mxu0
        %v1665 = vsel %vm967, %v1430, 0
        %v1668 = vsel %vm1436, %v893, 0
        %1670 = vmatprep.subr.bf16.mxu0 0
        %1671 = vmatpush1.bf16.msra.mxu0 0
        %1672 = vmatprep.subr.bf16.mxu0 0
        %1673 = vmatpush1.bf16.msra.mxu0 0
        %1674 = vmatprep.subr.bf16.mxu0 0
        %1675 = vmatpush1.bf16.msra.mxu0 0
        %1676 = vmatprep.subr.bf16.mxu0 0
        %1677 = vmatpush1.bf16.msra.mxu0 0
        %1678 = vmatprep.subr.bf16.mxu0 0
        %1679 = vmatpush1.bf16.msra.mxu0 0
        %1680 = vmatprep.subr.bf16.mxu0 0
        %1681 = vmatpush1.bf16.msra.mxu0 0
        %1682 = vmatprep.subr.bf16.mxu0 0
        %1683 = vmatpush1.bf16.msra.mxu0 0
        %1684 = vmatprep.subr.bf16.mxu0 0
        %1685 = vmatpush1.bf16.msra.mxu0 %v1668
        %1686 = vmatprep.subr.bf16.mxu0 0
        %1687 = vmatpush2.bf16.msra.mxu0 0
        %1688 = vmatprep.subr.bf16.mxu0 0
        %1689 = vmatpush2.bf16.msra.mxu0 0
        %1690 = vmatprep.subr.bf16.mxu0 0
        %1691 = vmatpush2.bf16.msra.mxu0 0
        %1692 = vmatprep.subr.bf16.mxu0 0
        %1693 = vmatpush2.bf16.msra.mxu0 0
        %1694 = vmatprep.subr.bf16.mxu0 0
        %1695 = vmatpush2.bf16.msra.mxu0 0
        %1696 = vmatprep.subr.bf16.mxu0 0
        %1697 = vmatpush2.bf16.msra.mxu0 0
        %1698 = vmatprep.subr.bf16.mxu0 0
        %1699 = vmatpush2.bf16.msra.mxu0 0
        %1700 = vmatprep.subr.bf16.mxu0 0
        %1701 = vmatpush2.bf16.msra.mxu0 0
        %1702 = vmatprep.mubr.bf16.mxu0 0
        %1703 = vmatmul.mubr.bf16.gmra.mxu0 %v1665
        %v1704 = vpop.f32.mrf.mxu0
        %v1705 = vadd.f32 0.0, %v1704
        %v1706 = vpop.f32.mrf.mxu0
        %v1707 = vpop.f32.mrf.mxu0
        %v1708 = vpop.f32.mrf.mxu0
        %1709 = vdwg.mxu0
        %v1711 = vsel %vm967, %v1431, 0
        %v1714 = vsel %vm1436, %v894, 0
        %1716 = vmatprep.subr.bf16.mxu0 0
        %1717 = vmatpush1.bf16.msra.mxu0 0
        %1718 = vmatprep.subr.bf16.mxu0 0
        %1719 = vmatpush1.bf16.msra.mxu0 0
        %1720 = vmatprep.subr.bf16.mxu0 0
        %1721 = vmatpush1.bf16.msra.mxu0 0
        %1722 = vmatprep.subr.bf16.mxu0 0
        %1723 = vmatpush1.bf16.msra.mxu0 0
        %1724 = vmatprep.subr.bf16.mxu0 0
        %1725 = vmatpush1.bf16.msra.mxu0 0
        %1726 = vmatprep.subr.bf16.mxu0 0
        %1727 = vmatpush1.bf16.msra.mxu0 0
        %1728 = vmatprep.subr.bf16.mxu0 0
        %1729 = vmatpush1.bf16.msra.mxu0 0
        %1730 = vmatprep.subr.bf16.mxu0 0
        %1731 = vmatpush1.bf16.msra.mxu0 %v1714
        %1732 = vmatprep.subr.bf16.mxu0 0
        %1733 = vmatpush2.bf16.msra.mxu0 0
        %1734 = vmatprep.subr.bf16.mxu0 0
        %1735 = vmatpush2.bf16.msra.mxu0 0
        %1736 = vmatprep.subr.bf16.mxu0 0
        %1737 = vmatpush2.bf16.msra.mxu0 0
        %1738 = vmatprep.subr.bf16.mxu0 0
        %1739 = vmatpush2.bf16.msra.mxu0 0
        %1740 = vmatprep.subr.bf16.mxu0 0
        %1741 = vmatpush2.bf16.msra.mxu0 0
        %1742 = vmatprep.subr.bf16.mxu0 0
        %1743 = vmatpush2.bf16.msra.mxu0 0
        %1744 = vmatprep.subr.bf16.mxu0 0
        %1745 = vmatpush2.bf16.msra.mxu0 0
        %1746 = vmatprep.subr.bf16.mxu0 0
        %1747 = vmatpush2.bf16.msra.mxu0 0
        %1748 = vmatprep.mubr.bf16.mxu0 0
        %1749 = vmatmul.mubr.bf16.gmra.mxu0 %v1711
        %v1750 = vpop.f32.mrf.mxu0
        %v1751 = vadd.f32 0.0, %v1750
        %v1752 = vpop.f32.mrf.mxu0
        %v1753 = vpop.f32.mrf.mxu0
        %v1754 = vpop.f32.mrf.mxu0
        %1755 = vdwg.mxu0
        %v1757 = vsel %vm967, %v1432, 0
        %v1760 = vsel %vm1436, %v895, 0
        %1762 = vmatprep.subr.bf16.mxu0 0
        %1763 = vmatpush1.bf16.msra.mxu0 0
        %1764 = vmatprep.subr.bf16.mxu0 0
        %1765 = vmatpush1.bf16.msra.mxu0 0
        %1766 = vmatprep.subr.bf16.mxu0 0
        %1767 = vmatpush1.bf16.msra.mxu0 0
        %1768 = vmatprep.subr.bf16.mxu0 0
        %1769 = vmatpush1.bf16.msra.mxu0 0
        %1770 = vmatprep.subr.bf16.mxu0 0
        %1771 = vmatpush1.bf16.msra.mxu0 0
        %1772 = vmatprep.subr.bf16.mxu0 0
        %1773 = vmatpush1.bf16.msra.mxu0 0
        %1774 = vmatprep.subr.bf16.mxu0 0
        %1775 = vmatpush1.bf16.msra.mxu0 0
        %1776 = vmatprep.subr.bf16.mxu0 0
        %1777 = vmatpush1.bf16.msra.mxu0 %v1760
        %1778 = vmatprep.subr.bf16.mxu0 0
        %1779 = vmatpush2.bf16.msra.mxu0 0
        %1780 = vmatprep.subr.bf16.mxu0 0
        %1781 = vmatpush2.bf16.msra.mxu0 0
        %1782 = vmatprep.subr.bf16.mxu0 0
        %1783 = vmatpush2.bf16.msra.mxu0 0
        %1784 = vmatprep.subr.bf16.mxu0 0
        %1785 = vmatpush2.bf16.msra.mxu0 0
        %1786 = vmatprep.subr.bf16.mxu0 0
        %1787 = vmatpush2.bf16.msra.mxu0 0
        %1788 = vmatprep.subr.bf16.mxu0 0
        %1789 = vmatpush2.bf16.msra.mxu0 0
        %1790 = vmatprep.subr.bf16.mxu0 0
        %1791 = vmatpush2.bf16.msra.mxu0 0
        %1792 = vmatprep.subr.bf16.mxu0 0
        %1793 = vmatpush2.bf16.msra.mxu0 0
        %1794 = vmatprep.mubr.bf16.mxu0 0
        %1795 = vmatmul.mubr.bf16.gmra.mxu0 %v1757
        %v1796 = vpop.f32.mrf.mxu0
        %v1797 = vadd.f32 0.0, %v1796
        %v1798 = vpop.f32.mrf.mxu0
        %v1799 = vpop.f32.mrf.mxu0
        %v1800 = vpop.f32.mrf.mxu0
        %1801 = vdwg.mxu0
        %v1802 = vpack.c.bf16 %v1475, %v1475
        %v1803 = vpack.c.bf16 %v1521, %v1521
        %v1804 = vpack.c.bf16 %v1567, %v1567
        %v1805 = vpack.c.bf16 %v1613, %v1613
        %v1806 = vpack.c.bf16 %v1659, %v1659
        %v1807 = vpack.c.bf16 %v1705, %v1705
        %v1808 = vpack.c.bf16 %v1751, %v1751
        %v1809 = vpack.c.bf16 %v1797, %v1797
        %v1818 = vunpack.c.l.b16 %v1802
        %v1819 = vunpack.c.l.b16 %v1803
        %v1820 = vunpack.c.l.b16 %v1804
        %v1821 = vunpack.c.l.b16 %v1805
        %v1822 = vunpack.c.l.b16 %v1806
        %v1823 = vunpack.c.l.b16 %v1807
        %v1824 = vunpack.c.l.b16 %v1808
        %v1825 = vunpack.c.l.b16 %v1809
        %v1826 = vrot.slane %v1819, 7
        %vm1827 = vcmask 1041409
        %v1828 = vsel %vm1827, %v1826, %v1818
        %v1829 = vrot.slane %v1820, 6
        %vm1830 = vcmask 1042434
        %v1831 = vsel %vm1830, %v1829, %v1828
        %v1832 = vrot.slane %v1821, 5
        %vm1833 = vcmask 1043459
        %v1834 = vsel %vm1833, %v1832, %v1831
        %v1835 = vrot.slane %v1822, 4
        %vm1836 = vcmask 1044484
        %v1837 = vsel %vm1836, %v1835, %v1834
        %v1838 = vrot.slane %v1823, 3
        %vm1839 = vcmask 1045509
        %v1840 = vsel %vm1839, %v1838, %v1837
        %v1841 = vrot.slane %v1824, 2
        %vm1842 = vcmask 1046534
        %v1843 = vsel %vm1842, %v1841, %v1840
        %v1844 = vrot.slane %v1825, 1
        %vm1845 = vcmask 1047559
        %v1846 = vsel %vm1845, %v1844, %v1843
        %v1847 = vpack.c.b16 %v1846, %v1846
        %v1849 = vsel %vm967, %v1847, 0
        %v1852 = vsel %vm1436, %v955, 0
        %1854 = vmatprep.subr.bf16.mxu0 0
        %1855 = vmatpush1.bf16.msra.mxu0 0
        %1856 = vmatprep.subr.bf16.mxu0 0
        %1857 = vmatpush1.bf16.msra.mxu0 0
        %1858 = vmatprep.subr.bf16.mxu0 0
        %1859 = vmatpush1.bf16.msra.mxu0 0
        %1860 = vmatprep.subr.bf16.mxu0 0
        %1861 = vmatpush1.bf16.msra.mxu0 0
        %1862 = vmatprep.subr.bf16.mxu0 0
        %1863 = vmatpush1.bf16.msra.mxu0 0
        %1864 = vmatprep.subr.bf16.mxu0 0
        %1865 = vmatpush1.bf16.msra.mxu0 0
        %1866 = vmatprep.subr.bf16.mxu0 0
        %1867 = vmatpush1.bf16.msra.mxu0 0
        %1868 = vmatprep.subr.bf16.mxu0 0
        %1869 = vmatpush1.bf16.msra.mxu0 %v1852
        %1870 = vmatprep.subr.bf16.mxu0 0
        %1871 = vmatpush2.bf16.msra.mxu0 0
        %1872 = vmatprep.subr.bf16.mxu0 0
        %1873 = vmatpush2.bf16.msra.mxu0 0
        %1874 = vmatprep.subr.bf16.mxu0 0
        %1875 = vmatpush2.bf16.msra.mxu0 0
        %1876 = vmatprep.subr.bf16.mxu0 0
        %1877 = vmatpush2.bf16.msra.mxu0 0
        %1878 = vmatprep.subr.bf16.mxu0 0
        %1879 = vmatpush2.bf16.msra.mxu0 0
        %1880 = vmatprep.subr.bf16.mxu0 0
        %1881 = vmatpush2.bf16.msra.mxu0 0
        %1882 = vmatprep.subr.bf16.mxu0 0
        %1883 = vmatpush2.bf16.msra.mxu0 0
        %1884 = vmatprep.subr.bf16.mxu0 0
        %1885 = vmatpush2.bf16.msra.mxu0 0
        %1886 = vmatprep.mubr.bf16.mxu0 0
        %1887 = vmatmul.mubr.bf16.gmra.mxu0 %v1849
        %v1888 = vpop.f32.mrf.mxu0
        %v1889 = vadd.f32 0.0, %v1888
        %v1890 = vpop.f32.mrf.mxu0
        %v1891 = vpop.f32.mrf.mxu0
        %v1892 = vpop.f32.mrf.mxu0
        %1893 = vdwg.mxu0
        %v1894 = vadd.f32 %v966, %v1889
        %1896 = vrot.lane.b32.xlu0 %v872, 120
        %v1897 = vpop.permute.xlu0 %1896
        %1899 = vrot.lane.b32.xlu0 %v880, 120
        %v1900 = vpop.permute.xlu0 %1899
        %v1902 = vsel %vm967, %v1897, 0
        %v1905 = vsel %vm967, %v1900, 0
        %1907 = vmatprep.subr.bf16.mxu0 0
        %1908 = vmatpush1.bf16.xpose.msra.mxu0 0
        %1909 = vmatprep.subr.bf16.mxu0 0
        %1910 = vmatpush1.bf16.xpose.msra.mxu0 0
        %1911 = vmatprep.subr.bf16.mxu0 0
        %1912 = vmatpush1.bf16.xpose.msra.mxu0 0
        %1913 = vmatprep.subr.bf16.mxu0 0
        %1914 = vmatpush1.bf16.xpose.msra.mxu0 0
        %1915 = vmatprep.subr.bf16.mxu0 0
        %1916 = vmatpush1.bf16.xpose.msra.mxu0 0
        %1917 = vmatprep.subr.bf16.mxu0 0
        %1918 = vmatpush1.bf16.xpose.msra.mxu0 0
        %1919 = vmatprep.subr.bf16.mxu0 0
        %1920 = vmatpush1.bf16.xpose.msra.mxu0 0
        %1921 = vmatprep.subr.bf16.mxu0 0
        %1922 = vmatpush1.bf16.xpose.msra.mxu0 %v1905
        %1923 = vmatprep.subr.bf16.mxu0 0
        %1924 = vmatpush2.bf16.xpose.msra.mxu0 0
        %1925 = vmatprep.subr.bf16.mxu0 0
        %1926 = vmatpush2.bf16.xpose.msra.mxu0 0
        %1927 = vmatprep.subr.bf16.mxu0 0
        %1928 = vmatpush2.bf16.xpose.msra.mxu0 0
        %1929 = vmatprep.subr.bf16.mxu0 0
        %1930 = vmatpush2.bf16.xpose.msra.mxu0 0
        %1931 = vmatprep.subr.bf16.mxu0 0
        %1932 = vmatpush2.bf16.xpose.msra.mxu0 0
        %1933 = vmatprep.subr.bf16.mxu0 0
        %1934 = vmatpush2.bf16.xpose.msra.mxu0 0
        %1935 = vmatprep.subr.bf16.mxu0 0
        %1936 = vmatpush2.bf16.xpose.msra.mxu0 0
        %1937 = vmatprep.subr.bf16.mxu0 0
        %1938 = vmatpush2.bf16.xpose.msra.mxu0 0
        %1939 = vmatprep.mubr.bf16.mxu0 0
        %1940 = vmatmul.mubr.bf16.gmra.mxu0 %v1902
        %v1941 = vpop.f32.mrf.mxu0
        %v1942 = vadd.f32 %v921, %v1941
        %v1943 = vpop.f32.mrf.mxu0
        %v1944 = vpop.f32.mrf.mxu0
        %v1945 = vpop.f32.mrf.mxu0
        %1946 = vdwg.mxu0
        %1948 = vrot.lane.b32.xlu0 %v873, 120
        %v1949 = vpop.permute.xlu0 %1948
        %1951 = vrot.lane.b32.xlu0 %v881, 120
        %v1952 = vpop.permute.xlu0 %1951
        %v1954 = vsel %vm967, %v1949, 0
        %v1957 = vsel %vm967, %v1952, 0
        %1959 = vmatprep.subr.bf16.mxu0 0
        %1960 = vmatpush1.bf16.xpose.msra.mxu0 0
        %1961 = vmatprep.subr.bf16.mxu0 0
        %1962 = vmatpush1.bf16.xpose.msra.mxu0 0
        %1963 = vmatprep.subr.bf16.mxu0 0
        %1964 = vmatpush1.bf16.xpose.msra.mxu0 0
        %1965 = vmatprep.subr.bf16.mxu0 0
        %1966 = vmatpush1.bf16.xpose.msra.mxu0 0
        %1967 = vmatprep.subr.bf16.mxu0 0
        %1968 = vmatpush1.bf16.xpose.msra.mxu0 0
        %1969 = vmatprep.subr.bf16.mxu0 0
        %1970 = vmatpush1.bf16.xpose.msra.mxu0 0
        %1971 = vmatprep.subr.bf16.mxu0 0
        %1972 = vmatpush1.bf16.xpose.msra.mxu0 0
        %1973 = vmatprep.subr.bf16.mxu0 0
        %1974 = vmatpush1.bf16.xpose.msra.mxu0 %v1957
        %1975 = vmatprep.subr.bf16.mxu0 0
        %1976 = vmatpush2.bf16.xpose.msra.mxu0 0
        %1977 = vmatprep.subr.bf16.mxu0 0
        %1978 = vmatpush2.bf16.xpose.msra.mxu0 0
        %1979 = vmatprep.subr.bf16.mxu0 0
        %1980 = vmatpush2.bf16.xpose.msra.mxu0 0
        %1981 = vmatprep.subr.bf16.mxu0 0
        %1982 = vmatpush2.bf16.xpose.msra.mxu0 0
        %1983 = vmatprep.subr.bf16.mxu0 0
        %1984 = vmatpush2.bf16.xpose.msra.mxu0 0
        %1985 = vmatprep.subr.bf16.mxu0 0
        %1986 = vmatpush2.bf16.xpose.msra.mxu0 0
        %1987 = vmatprep.subr.bf16.mxu0 0
        %1988 = vmatpush2.bf16.xpose.msra.mxu0 0
        %1989 = vmatprep.subr.bf16.mxu0 0
        %1990 = vmatpush2.bf16.xpose.msra.mxu0 0
        %1991 = vmatprep.mubr.bf16.mxu0 0
        %1992 = vmatmul.mubr.bf16.gmra.mxu0 %v1954
        %v1993 = vpop.f32.mrf.mxu0
        %v1994 = vadd.f32 %v935, %v1993
        %v1995 = vpop.f32.mrf.mxu0
        %v1996 = vpop.f32.mrf.mxu0
        %v1997 = vpop.f32.mrf.mxu0
        %1998 = vdwg.mxu0
        %2000 = vrot.lane.b32.xlu0 %v874, 120
        %v2001 = vpop.permute.xlu0 %2000
        %2003 = vrot.lane.b32.xlu0 %v882, 120
        %v2004 = vpop.permute.xlu0 %2003
        %v2006 = vsel %vm967, %v2001, 0
        %v2009 = vsel %vm967, %v2004, 0
        %2011 = vmatprep.subr.bf16.mxu0 0
        %2012 = vmatpush1.bf16.xpose.msra.mxu0 0
        %2013 = vmatprep.subr.bf16.mxu0 0
        %2014 = vmatpush1.bf16.xpose.msra.mxu0 0
        %2015 = vmatprep.subr.bf16.mxu0 0
        %2016 = vmatpush1.bf16.xpose.msra.mxu0 0
        %2017 = vmatprep.subr.bf16.mxu0 0
        %2018 = vmatpush1.bf16.xpose.msra.mxu0 0
        %2019 = vmatprep.subr.bf16.mxu0 0
        %2020 = vmatpush1.bf16.xpose.msra.mxu0 0
        %2021 = vmatprep.subr.bf16.mxu0 0
        %2022 = vmatpush1.bf16.xpose.msra.mxu0 0
        %2023 = vmatprep.subr.bf16.mxu0 0
        %2024 = vmatpush1.bf16.xpose.msra.mxu0 0
        %2025 = vmatprep.subr.bf16.mxu0 0
        %2026 = vmatpush1.bf16.xpose.msra.mxu0 %v2009
        %2027 = vmatprep.subr.bf16.mxu0 0
        %2028 = vmatpush2.bf16.xpose.msra.mxu0 0
        %2029 = vmatprep.subr.bf16.mxu0 0
        %2030 = vmatpush2.bf16.xpose.msra.mxu0 0
        %2031 = vmatprep.subr.bf16.mxu0 0
        %2032 = vmatpush2.bf16.xpose.msra.mxu0 0
        %2033 = vmatprep.subr.bf16.mxu0 0
        %2034 = vmatpush2.bf16.xpose.msra.mxu0 0
        %2035 = vmatprep.subr.bf16.mxu0 0
        %2036 = vmatpush2.bf16.xpose.msra.mxu0 0
        %2037 = vmatprep.subr.bf16.mxu0 0
        %2038 = vmatpush2.bf16.xpose.msra.mxu0 0
        %2039 = vmatprep.subr.bf16.mxu0 0
        %2040 = vmatpush2.bf16.xpose.msra.mxu0 0
        %2041 = vmatprep.subr.bf16.mxu0 0
        %2042 = vmatpush2.bf16.xpose.msra.mxu0 0
        %2043 = vmatprep.mubr.bf16.mxu0 0
        %2044 = vmatmul.mubr.bf16.gmra.mxu0 %v2006
        %v2045 = vpop.f32.mrf.mxu0
        %v2046 = vadd.f32 %v943, %v2045
        %v2047 = vpop.f32.mrf.mxu0
        %v2048 = vpop.f32.mrf.mxu0
        %v2049 = vpop.f32.mrf.mxu0
        %2050 = vdwg.mxu0
        %2052 = vrot.lane.b32.xlu0 %v875, 120
        %v2053 = vpop.permute.xlu0 %2052
        %2055 = vrot.lane.b32.xlu0 %v883, 120
        %v2056 = vpop.permute.xlu0 %2055
        %v2058 = vsel %vm967, %v2053, 0
        %v2061 = vsel %vm967, %v2056, 0
        %2063 = vmatprep.subr.bf16.mxu0 0
        %2064 = vmatpush1.bf16.xpose.msra.mxu0 0
        %2065 = vmatprep.subr.bf16.mxu0 0
        %2066 = vmatpush1.bf16.xpose.msra.mxu0 0
        %2067 = vmatprep.subr.bf16.mxu0 0
        %2068 = vmatpush1.bf16.xpose.msra.mxu0 0
        %2069 = vmatprep.subr.bf16.mxu0 0
        %2070 = vmatpush1.bf16.xpose.msra.mxu0 0
        %2071 = vmatprep.subr.bf16.mxu0 0
        %2072 = vmatpush1.bf16.xpose.msra.mxu0 0
        %2073 = vmatprep.subr.bf16.mxu0 0
        %2074 = vmatpush1.bf16.xpose.msra.mxu0 0
        %2075 = vmatprep.subr.bf16.mxu0 0
        %2076 = vmatpush1.bf16.xpose.msra.mxu0 0
        %2077 = vmatprep.subr.bf16.mxu0 0
        %2078 = vmatpush1.bf16.xpose.msra.mxu0 %v2061
        %2079 = vmatprep.subr.bf16.mxu0 0
        %2080 = vmatpush2.bf16.xpose.msra.mxu0 0
        %2081 = vmatprep.subr.bf16.mxu0 0
        %2082 = vmatpush2.bf16.xpose.msra.mxu0 0
        %2083 = vmatprep.subr.bf16.mxu0 0
        %2084 = vmatpush2.bf16.xpose.msra.mxu0 0
        %2085 = vmatprep.subr.bf16.mxu0 0
        %2086 = vmatpush2.bf16.xpose.msra.mxu0 0
        %2087 = vmatprep.subr.bf16.mxu0 0
        %2088 = vmatpush2.bf16.xpose.msra.mxu0 0
        %2089 = vmatprep.subr.bf16.mxu0 0
        %2090 = vmatpush2.bf16.xpose.msra.mxu0 0
        %2091 = vmatprep.subr.bf16.mxu0 0
        %2092 = vmatpush2.bf16.xpose.msra.mxu0 0
        %2093 = vmatprep.subr.bf16.mxu0 0
        %2094 = vmatpush2.bf16.xpose.msra.mxu0 0
        %2095 = vmatprep.mubr.bf16.mxu0 0
        %2096 = vmatmul.mubr.bf16.gmra.mxu0 %v2058
        %v2097 = vpop.f32.mrf.mxu0
        %v2098 = vadd.f32 %v945, %v2097
        %v2099 = vpop.f32.mrf.mxu0
        %v2100 = vpop.f32.mrf.mxu0
        %v2101 = vpop.f32.mrf.mxu0
        %2102 = vdwg.mxu0
        %2104 = vrot.lane.b32.xlu0 %v876, 120
        %v2105 = vpop.permute.xlu0 %2104
        %2107 = vrot.lane.b32.xlu0 %v884, 120
        %v2108 = vpop.permute.xlu0 %2107
        %v2110 = vsel %vm967, %v2105, 0
        %v2113 = vsel %vm967, %v2108, 0
        %2115 = vmatprep.subr.bf16.mxu0 0
        %2116 = vmatpush1.bf16.xpose.msra.mxu0 0
        %2117 = vmatprep.subr.bf16.mxu0 0
        %2118 = vmatpush1.bf16.xpose.msra.mxu0 0
        %2119 = vmatprep.subr.bf16.mxu0 0
        %2120 = vmatpush1.bf16.xpose.msra.mxu0 0
        %2121 = vmatprep.subr.bf16.mxu0 0
        %2122 = vmatpush1.bf16.xpose.msra.mxu0 0
        %2123 = vmatprep.subr.bf16.mxu0 0
        %2124 = vmatpush1.bf16.xpose.msra.mxu0 0
        %2125 = vmatprep.subr.bf16.mxu0 0
        %2126 = vmatpush1.bf16.xpose.msra.mxu0 0
        %2127 = vmatprep.subr.bf16.mxu0 0
        %2128 = vmatpush1.bf16.xpose.msra.mxu0 0
        %2129 = vmatprep.subr.bf16.mxu0 0
        %2130 = vmatpush1.bf16.xpose.msra.mxu0 %v2113
        %2131 = vmatprep.subr.bf16.mxu0 0
        %2132 = vmatpush2.bf16.xpose.msra.mxu0 0
        %2133 = vmatprep.subr.bf16.mxu0 0
        %2134 = vmatpush2.bf16.xpose.msra.mxu0 0
        %2135 = vmatprep.subr.bf16.mxu0 0
        %2136 = vmatpush2.bf16.xpose.msra.mxu0 0
        %2137 = vmatprep.subr.bf16.mxu0 0
        %2138 = vmatpush2.bf16.xpose.msra.mxu0 0
        %2139 = vmatprep.subr.bf16.mxu0 0
        %2140 = vmatpush2.bf16.xpose.msra.mxu0 0
        %2141 = vmatprep.subr.bf16.mxu0 0
        %2142 = vmatpush2.bf16.xpose.msra.mxu0 0
        %2143 = vmatprep.subr.bf16.mxu0 0
        %2144 = vmatpush2.bf16.xpose.msra.mxu0 0
        %2145 = vmatprep.subr.bf16.mxu0 0
        %2146 = vmatpush2.bf16.xpose.msra.mxu0 0
        %2147 = vmatprep.mubr.bf16.mxu0 0
        %2148 = vmatmul.mubr.bf16.gmra.mxu0 %v2110
        %v2149 = vpop.f32.mrf.mxu0
        %v2150 = vadd.f32 %v928, %v2149
        %v2151 = vpop.f32.mrf.mxu0
        %v2152 = vpop.f32.mrf.mxu0
        %v2153 = vpop.f32.mrf.mxu0
        %2154 = vdwg.mxu0
        %2156 = vrot.lane.b32.xlu0 %v877, 120
        %v2157 = vpop.permute.xlu0 %2156
        %2159 = vrot.lane.b32.xlu0 %v885, 120
        %v2160 = vpop.permute.xlu0 %2159
        %v2162 = vsel %vm967, %v2157, 0
        %v2165 = vsel %vm967, %v2160, 0
        %2167 = vmatprep.subr.bf16.mxu0 0
        %2168 = vmatpush1.bf16.xpose.msra.mxu0 0
        %2169 = vmatprep.subr.bf16.mxu0 0
        %2170 = vmatpush1.bf16.xpose.msra.mxu0 0
        %2171 = vmatprep.subr.bf16.mxu0 0
        %2172 = vmatpush1.bf16.xpose.msra.mxu0 0
        %2173 = vmatprep.subr.bf16.mxu0 0
        %2174 = vmatpush1.bf16.xpose.msra.mxu0 0
        %2175 = vmatprep.subr.bf16.mxu0 0
        %2176 = vmatpush1.bf16.xpose.msra.mxu0 0
        %2177 = vmatprep.subr.bf16.mxu0 0
        %2178 = vmatpush1.bf16.xpose.msra.mxu0 0
        %2179 = vmatprep.subr.bf16.mxu0 0
        %2180 = vmatpush1.bf16.xpose.msra.mxu0 0
        %2181 = vmatprep.subr.bf16.mxu0 0
        %2182 = vmatpush1.bf16.xpose.msra.mxu0 %v2165
        %2183 = vmatprep.subr.bf16.mxu0 0
        %2184 = vmatpush2.bf16.xpose.msra.mxu0 0
        %2185 = vmatprep.subr.bf16.mxu0 0
        %2186 = vmatpush2.bf16.xpose.msra.mxu0 0
        %2187 = vmatprep.subr.bf16.mxu0 0
        %2188 = vmatpush2.bf16.xpose.msra.mxu0 0
        %2189 = vmatprep.subr.bf16.mxu0 0
        %2190 = vmatpush2.bf16.xpose.msra.mxu0 0
        %2191 = vmatprep.subr.bf16.mxu0 0
        %2192 = vmatpush2.bf16.xpose.msra.mxu0 0
        %2193 = vmatprep.subr.bf16.mxu0 0
        %2194 = vmatpush2.bf16.xpose.msra.mxu0 0
        %2195 = vmatprep.subr.bf16.mxu0 0
        %2196 = vmatpush2.bf16.xpose.msra.mxu0 0
        %2197 = vmatprep.subr.bf16.mxu0 0
        %2198 = vmatpush2.bf16.xpose.msra.mxu0 0
        %2199 = vmatprep.mubr.bf16.mxu0 0
        %2200 = vmatmul.mubr.bf16.gmra.mxu0 %v2162
        %v2201 = vpop.f32.mrf.mxu0
        %v2202 = vadd.f32 %v942, %v2201
        %v2203 = vpop.f32.mrf.mxu0
        %v2204 = vpop.f32.mrf.mxu0
        %v2205 = vpop.f32.mrf.mxu0
        %2206 = vdwg.mxu0
        %2208 = vrot.lane.b32.xlu0 %v878, 120
        %v2209 = vpop.permute.xlu0 %2208
        %2211 = vrot.lane.b32.xlu0 %v886, 120
        %v2212 = vpop.permute.xlu0 %2211
        %v2214 = vsel %vm967, %v2209, 0
        %v2217 = vsel %vm967, %v2212, 0
        %2219 = vmatprep.subr.bf16.mxu0 0
        %2220 = vmatpush1.bf16.xpose.msra.mxu0 0
        %2221 = vmatprep.subr.bf16.mxu0 0
        %2222 = vmatpush1.bf16.xpose.msra.mxu0 0
        %2223 = vmatprep.subr.bf16.mxu0 0
        %2224 = vmatpush1.bf16.xpose.msra.mxu0 0
        %2225 = vmatprep.subr.bf16.mxu0 0
        %2226 = vmatpush1.bf16.xpose.msra.mxu0 0
        %2227 = vmatprep.subr.bf16.mxu0 0
        %2228 = vmatpush1.bf16.xpose.msra.mxu0 0
        %2229 = vmatprep.subr.bf16.mxu0 0
        %2230 = vmatpush1.bf16.xpose.msra.mxu0 0
        %2231 = vmatprep.subr.bf16.mxu0 0
        %2232 = vmatpush1.bf16.xpose.msra.mxu0 0
        %2233 = vmatprep.subr.bf16.mxu0 0
        %2234 = vmatpush1.bf16.xpose.msra.mxu0 %v2217
        %2235 = vmatprep.subr.bf16.mxu0 0
        %2236 = vmatpush2.bf16.xpose.msra.mxu0 0
        %2237 = vmatprep.subr.bf16.mxu0 0
        %2238 = vmatpush2.bf16.xpose.msra.mxu0 0
        %2239 = vmatprep.subr.bf16.mxu0 0
        %2240 = vmatpush2.bf16.xpose.msra.mxu0 0
        %2241 = vmatprep.subr.bf16.mxu0 0
        %2242 = vmatpush2.bf16.xpose.msra.mxu0 0
        %2243 = vmatprep.subr.bf16.mxu0 0
        %2244 = vmatpush2.bf16.xpose.msra.mxu0 0
        %2245 = vmatprep.subr.bf16.mxu0 0
        %2246 = vmatpush2.bf16.xpose.msra.mxu0 0
        %2247 = vmatprep.subr.bf16.mxu0 0
        %2248 = vmatpush2.bf16.xpose.msra.mxu0 0
        %2249 = vmatprep.subr.bf16.mxu0 0
        %2250 = vmatpush2.bf16.xpose.msra.mxu0 0
        %2251 = vmatprep.mubr.bf16.mxu0 0
        %2252 = vmatmul.mubr.bf16.gmra.mxu0 %v2214
        %v2253 = vpop.f32.mrf.mxu0
        %v2254 = vadd.f32 %v944, %v2253
        %v2255 = vpop.f32.mrf.mxu0
        %v2256 = vpop.f32.mrf.mxu0
        %v2257 = vpop.f32.mrf.mxu0
        %2258 = vdwg.mxu0
        %2260 = vrot.lane.b32.xlu0 %v879, 120
        %v2261 = vpop.permute.xlu0 %2260
        %2263 = vrot.lane.b32.xlu0 %v887, 120
        %v2264 = vpop.permute.xlu0 %2263
        %v2266 = vsel %vm967, %v2261, 0
        %v2269 = vsel %vm967, %v2264, 0
        %2271 = vmatprep.subr.bf16.mxu0 0
        %2272 = vmatpush1.bf16.xpose.msra.mxu0 0
        %2273 = vmatprep.subr.bf16.mxu0 0
        %2274 = vmatpush1.bf16.xpose.msra.mxu0 0
        %2275 = vmatprep.subr.bf16.mxu0 0
        %2276 = vmatpush1.bf16.xpose.msra.mxu0 0
        %2277 = vmatprep.subr.bf16.mxu0 0
        %2278 = vmatpush1.bf16.xpose.msra.mxu0 0
        %2279 = vmatprep.subr.bf16.mxu0 0
        %2280 = vmatpush1.bf16.xpose.msra.mxu0 0
        %2281 = vmatprep.subr.bf16.mxu0 0
        %2282 = vmatpush1.bf16.xpose.msra.mxu0 0
        %2283 = vmatprep.subr.bf16.mxu0 0
        %2284 = vmatpush1.bf16.xpose.msra.mxu0 0
        %2285 = vmatprep.subr.bf16.mxu0 0
        %2286 = vmatpush1.bf16.xpose.msra.mxu0 %v2269
        %2287 = vmatprep.subr.bf16.mxu0 0
        %2288 = vmatpush2.bf16.xpose.msra.mxu0 0
        %2289 = vmatprep.subr.bf16.mxu0 0
        %2290 = vmatpush2.bf16.xpose.msra.mxu0 0
        %2291 = vmatprep.subr.bf16.mxu0 0
        %2292 = vmatpush2.bf16.xpose.msra.mxu0 0
        %2293 = vmatprep.subr.bf16.mxu0 0
        %2294 = vmatpush2.bf16.xpose.msra.mxu0 0
        %2295 = vmatprep.subr.bf16.mxu0 0
        %2296 = vmatpush2.bf16.xpose.msra.mxu0 0
        %2297 = vmatprep.subr.bf16.mxu0 0
        %2298 = vmatpush2.bf16.xpose.msra.mxu0 0
        %2299 = vmatprep.subr.bf16.mxu0 0
        %2300 = vmatpush2.bf16.xpose.msra.mxu0 0
        %2301 = vmatprep.subr.bf16.mxu0 0
        %2302 = vmatpush2.bf16.xpose.msra.mxu0 0
        %2303 = vmatprep.mubr.bf16.mxu0 0
        %2304 = vmatmul.mubr.bf16.gmra.mxu0 %v2266
        %v2305 = vpop.f32.mrf.mxu0
        %v2306 = vadd.f32 %v946, %v2305
        %v2307 = vpop.f32.mrf.mxu0
        %v2308 = vpop.f32.mrf.mxu0
        %v2309 = vpop.f32.mrf.mxu0
        %2310 = vdwg.mxu0
        %v2311 = vsel %vm1336, %v1942, -inf
        %2312 = vmax.xlane.f32.xlu0 %v2311
        %v2313 = vpop.xlane.xlu0 %2312
        %v2314 = vsel %vm1336, %v1994, -inf
        %2315 = vmax.xlane.f32.xlu0 %v2314
        %v2316 = vpop.xlane.xlu0 %2315
        %v2317 = vsel %vm1336, %v2046, -inf
        %2318 = vmax.xlane.f32.xlu0 %v2317
        %v2319 = vpop.xlane.xlu0 %2318
        %v2320 = vsel %vm1336, %v2098, -inf
        %2321 = vmax.xlane.f32.xlu0 %v2320
        %v2322 = vpop.xlane.xlu0 %2321
        %v2323 = vsel %vm1336, %v2150, -inf
        %2324 = vmax.xlane.f32.xlu0 %v2323
        %v2325 = vpop.xlane.xlu0 %2324
        %v2326 = vsel %vm1336, %v2202, -inf
        %2327 = vmax.xlane.f32.xlu0 %v2326
        %v2328 = vpop.xlane.xlu0 %2327
        %v2329 = vsel %vm1336, %v2254, -inf
        %2330 = vmax.xlane.f32.xlu0 %v2329
        %v2331 = vpop.xlane.xlu0 %2330
        %v2332 = vsel %vm1336, %v2306, -inf
        %2333 = vmax.xlane.f32.xlu0 %v2332
        %v2334 = vpop.xlane.xlu0 %2333
        %v2335 = vsub.f32 %v1942, %v2313
        %v2336 = vsub.f32 %v1994, %v2316
        %v2337 = vsub.f32 %v2046, %v2319
        %v2338 = vsub.f32 %v2098, %v2322
        %v2339 = vsub.f32 %v2150, %v2325
        %v2340 = vsub.f32 %v2202, %v2328
        %v2341 = vsub.f32 %v2254, %v2331
        %v2342 = vsub.f32 %v2306, %v2334
        %v2343 = vmul.f32 %v2335, 1.442695
        %v2344 = vpow.pop %v2343
        %v2345 = vmul.f32 %v2336, 1.442695
        %v2346 = vpow.pop %v2345
        %v2347 = vmul.f32 %v2337, 1.442695
        %v2348 = vpow.pop %v2347
        %v2349 = vmul.f32 %v2338, 1.442695
        %v2350 = vpow.pop %v2349
        %v2351 = vmul.f32 %v2339, 1.442695
        %v2352 = vpow.pop %v2351
        %v2353 = vmul.f32 %v2340, 1.442695
        %v2354 = vpow.pop %v2353
        %v2355 = vmul.f32 %v2341, 1.442695
        %v2356 = vpow.pop %v2355
        %v2357 = vmul.f32 %v2342, 1.442695
        %v2358 = vpow.pop %v2357
        %v2359 = vsel %vm1336, %v2344, 0.0
        %2360 = vadd.xlane.f32.xlu0 %v2359
        %v2361 = vpop.xlane.xlu0 %2360
        %v2362 = vsel %vm1336, %v2346, 0.0
        %2363 = vadd.xlane.f32.xlu0 %v2362
        %v2364 = vpop.xlane.xlu0 %2363
        %v2365 = vsel %vm1336, %v2348, 0.0
        %2366 = vadd.xlane.f32.xlu0 %v2365
        %v2367 = vpop.xlane.xlu0 %2366
        %v2368 = vsel %vm1336, %v2350, 0.0
        %2369 = vadd.xlane.f32.xlu0 %v2368
        %v2370 = vpop.xlane.xlu0 %2369
        %v2371 = vsel %vm1336, %v2352, 0.0
        %2372 = vadd.xlane.f32.xlu0 %v2371
        %v2373 = vpop.xlane.xlu0 %2372
        %v2374 = vsel %vm1336, %v2354, 0.0
        %2375 = vadd.xlane.f32.xlu0 %v2374
        %v2376 = vpop.xlane.xlu0 %2375
        %v2377 = vsel %vm1336, %v2356, 0.0
        %2378 = vadd.xlane.f32.xlu0 %v2377
        %v2379 = vpop.xlane.xlu0 %2378
        %v2380 = vsel %vm1336, %v2358, 0.0
        %2381 = vadd.xlane.f32.xlu0 %v2380
        %v2382 = vpop.xlane.xlu0 %2381
        %v2383 = vrcp.pop %v2361
        %v2384 = vrcp.pop %v2364
        %v2385 = vrcp.pop %v2367
        %v2386 = vrcp.pop %v2370
        %v2387 = vrcp.pop %v2373
        %v2388 = vrcp.pop %v2376
        %v2389 = vrcp.pop %v2379
        %v2390 = vrcp.pop %v2382
        %v2391 = vmul.f32 %v2344, %v2383
        %v2392 = vmul.f32 %v2346, %v2384
        %v2393 = vmul.f32 %v2348, %v2385
        %v2394 = vmul.f32 %v2350, %v2386
        %v2395 = vmul.f32 %v2352, %v2387
        %v2396 = vmul.f32 %v2354, %v2388
        %v2397 = vmul.f32 %v2356, %v2389
        %v2398 = vmul.f32 %v2358, %v2390
        %v2399 = vpack.c.bf16 %v2391, %v2391
        %v2400 = vpack.c.bf16 %v2392, %v2392
        %v2401 = vpack.c.bf16 %v2393, %v2393
        %v2402 = vpack.c.bf16 %v2394, %v2394
        %v2403 = vpack.c.bf16 %v2395, %v2395
        %v2404 = vpack.c.bf16 %v2396, %v2396
        %v2405 = vpack.c.bf16 %v2397, %v2397
        %v2406 = vpack.c.bf16 %v2398, %v2398
        %2408 = vrot.lane.b32.xlu0 %v888, 120
        %v2409 = vpop.permute.xlu0 %2408
        %v2411 = vsel %vm967, %v2399, 0
        %v2414 = vsel %vm1436, %v2409, 0
        %2416 = vmatprep.subr.bf16.mxu0 0
        %2417 = vmatpush1.bf16.msra.mxu0 0
        %2418 = vmatprep.subr.bf16.mxu0 0
        %2419 = vmatpush1.bf16.msra.mxu0 0
        %2420 = vmatprep.subr.bf16.mxu0 0
        %2421 = vmatpush1.bf16.msra.mxu0 0
        %2422 = vmatprep.subr.bf16.mxu0 0
        %2423 = vmatpush1.bf16.msra.mxu0 0
        %2424 = vmatprep.subr.bf16.mxu0 0
        %2425 = vmatpush1.bf16.msra.mxu0 0
        %2426 = vmatprep.subr.bf16.mxu0 0
        %2427 = vmatpush1.bf16.msra.mxu0 0
        %2428 = vmatprep.subr.bf16.mxu0 0
        %2429 = vmatpush1.bf16.msra.mxu0 0
        %2430 = vmatprep.subr.bf16.mxu0 0
        %2431 = vmatpush1.bf16.msra.mxu0 %v2414
        %2432 = vmatprep.subr.bf16.mxu0 0
        %2433 = vmatpush2.bf16.msra.mxu0 0
        %2434 = vmatprep.subr.bf16.mxu0 0
        %2435 = vmatpush2.bf16.msra.mxu0 0
        %2436 = vmatprep.subr.bf16.mxu0 0
        %2437 = vmatpush2.bf16.msra.mxu0 0
        %2438 = vmatprep.subr.bf16.mxu0 0
        %2439 = vmatpush2.bf16.msra.mxu0 0
        %2440 = vmatprep.subr.bf16.mxu0 0
        %2441 = vmatpush2.bf16.msra.mxu0 0
        %2442 = vmatprep.subr.bf16.mxu0 0
        %2443 = vmatpush2.bf16.msra.mxu0 0
        %2444 = vmatprep.subr.bf16.mxu0 0
        %2445 = vmatpush2.bf16.msra.mxu0 0
        %2446 = vmatprep.subr.bf16.mxu0 0
        %2447 = vmatpush2.bf16.msra.mxu0 0
        %2448 = vmatprep.mubr.bf16.mxu0 0
        %2449 = vmatmul.mubr.bf16.gmra.mxu0 %v2411
        %v2450 = vpop.f32.mrf.mxu0
        %v2451 = vadd.f32 0.0, %v2450
        %v2452 = vpop.f32.mrf.mxu0
        %v2453 = vpop.f32.mrf.mxu0
        %v2454 = vpop.f32.mrf.mxu0
        %2455 = vdwg.mxu0
        %2457 = vrot.lane.b32.xlu0 %v889, 120
        %v2458 = vpop.permute.xlu0 %2457
        %v2460 = vsel %vm967, %v2400, 0
        %v2463 = vsel %vm1436, %v2458, 0
        %2465 = vmatprep.subr.bf16.mxu0 0
        %2466 = vmatpush1.bf16.msra.mxu0 0
        %2467 = vmatprep.subr.bf16.mxu0 0
        %2468 = vmatpush1.bf16.msra.mxu0 0
        %2469 = vmatprep.subr.bf16.mxu0 0
        %2470 = vmatpush1.bf16.msra.mxu0 0
        %2471 = vmatprep.subr.bf16.mxu0 0
        %2472 = vmatpush1.bf16.msra.mxu0 0
        %2473 = vmatprep.subr.bf16.mxu0 0
        %2474 = vmatpush1.bf16.msra.mxu0 0
        %2475 = vmatprep.subr.bf16.mxu0 0
        %2476 = vmatpush1.bf16.msra.mxu0 0
        %2477 = vmatprep.subr.bf16.mxu0 0
        %2478 = vmatpush1.bf16.msra.mxu0 0
        %2479 = vmatprep.subr.bf16.mxu0 0
        %2480 = vmatpush1.bf16.msra.mxu0 %v2463
        %2481 = vmatprep.subr.bf16.mxu0 0
        %2482 = vmatpush2.bf16.msra.mxu0 0
        %2483 = vmatprep.subr.bf16.mxu0 0
        %2484 = vmatpush2.bf16.msra.mxu0 0
        %2485 = vmatprep.subr.bf16.mxu0 0
        %2486 = vmatpush2.bf16.msra.mxu0 0
        %2487 = vmatprep.subr.bf16.mxu0 0
        %2488 = vmatpush2.bf16.msra.mxu0 0
        %2489 = vmatprep.subr.bf16.mxu0 0
        %2490 = vmatpush2.bf16.msra.mxu0 0
        %2491 = vmatprep.subr.bf16.mxu0 0
        %2492 = vmatpush2.bf16.msra.mxu0 0
        %2493 = vmatprep.subr.bf16.mxu0 0
        %2494 = vmatpush2.bf16.msra.mxu0 0
        %2495 = vmatprep.subr.bf16.mxu0 0
        %2496 = vmatpush2.bf16.msra.mxu0 0
        %2497 = vmatprep.mubr.bf16.mxu0 0
        %2498 = vmatmul.mubr.bf16.gmra.mxu0 %v2460
        %v2499 = vpop.f32.mrf.mxu0
        %v2500 = vadd.f32 0.0, %v2499
        %v2501 = vpop.f32.mrf.mxu0
        %v2502 = vpop.f32.mrf.mxu0
        %v2503 = vpop.f32.mrf.mxu0
        %2504 = vdwg.mxu0
        %2506 = vrot.lane.b32.xlu0 %v890, 120
        %v2507 = vpop.permute.xlu0 %2506
        %v2509 = vsel %vm967, %v2401, 0
        %v2512 = vsel %vm1436, %v2507, 0
        %2514 = vmatprep.subr.bf16.mxu0 0
        %2515 = vmatpush1.bf16.msra.mxu0 0
        %2516 = vmatprep.subr.bf16.mxu0 0
        %2517 = vmatpush1.bf16.msra.mxu0 0
        %2518 = vmatprep.subr.bf16.mxu0 0
        %2519 = vmatpush1.bf16.msra.mxu0 0
        %2520 = vmatprep.subr.bf16.mxu0 0
        %2521 = vmatpush1.bf16.msra.mxu0 0
        %2522 = vmatprep.subr.bf16.mxu0 0
        %2523 = vmatpush1.bf16.msra.mxu0 0
        %2524 = vmatprep.subr.bf16.mxu0 0
        %2525 = vmatpush1.bf16.msra.mxu0 0
        %2526 = vmatprep.subr.bf16.mxu0 0
        %2527 = vmatpush1.bf16.msra.mxu0 0
        %2528 = vmatprep.subr.bf16.mxu0 0
        %2529 = vmatpush1.bf16.msra.mxu0 %v2512
        %2530 = vmatprep.subr.bf16.mxu0 0
        %2531 = vmatpush2.bf16.msra.mxu0 0
        %2532 = vmatprep.subr.bf16.mxu0 0
        %2533 = vmatpush2.bf16.msra.mxu0 0
        %2534 = vmatprep.subr.bf16.mxu0 0
        %2535 = vmatpush2.bf16.msra.mxu0 0
        %2536 = vmatprep.subr.bf16.mxu0 0
        %2537 = vmatpush2.bf16.msra.mxu0 0
        %2538 = vmatprep.subr.bf16.mxu0 0
        %2539 = vmatpush2.bf16.msra.mxu0 0
        %2540 = vmatprep.subr.bf16.mxu0 0
        %2541 = vmatpush2.bf16.msra.mxu0 0
        %2542 = vmatprep.subr.bf16.mxu0 0
        %2543 = vmatpush2.bf16.msra.mxu0 0
        %2544 = vmatprep.subr.bf16.mxu0 0
        %2545 = vmatpush2.bf16.msra.mxu0 0
        %2546 = vmatprep.mubr.bf16.mxu0 0
        %2547 = vmatmul.mubr.bf16.gmra.mxu0 %v2509
        %v2548 = vpop.f32.mrf.mxu0
        %v2549 = vadd.f32 0.0, %v2548
        %v2550 = vpop.f32.mrf.mxu0
        %v2551 = vpop.f32.mrf.mxu0
        %v2552 = vpop.f32.mrf.mxu0
        %2553 = vdwg.mxu0
        %2555 = vrot.lane.b32.xlu0 %v891, 120
        %v2556 = vpop.permute.xlu0 %2555
        %v2558 = vsel %vm967, %v2402, 0
        %v2561 = vsel %vm1436, %v2556, 0
        %2563 = vmatprep.subr.bf16.mxu0 0
        %2564 = vmatpush1.bf16.msra.mxu0 0
        %2565 = vmatprep.subr.bf16.mxu0 0
        %2566 = vmatpush1.bf16.msra.mxu0 0
        %2567 = vmatprep.subr.bf16.mxu0 0
        %2568 = vmatpush1.bf16.msra.mxu0 0
        %2569 = vmatprep.subr.bf16.mxu0 0
        %2570 = vmatpush1.bf16.msra.mxu0 0
        %2571 = vmatprep.subr.bf16.mxu0 0
        %2572 = vmatpush1.bf16.msra.mxu0 0
        %2573 = vmatprep.subr.bf16.mxu0 0
        %2574 = vmatpush1.bf16.msra.mxu0 0
        %2575 = vmatprep.subr.bf16.mxu0 0
        %2576 = vmatpush1.bf16.msra.mxu0 0
        %2577 = vmatprep.subr.bf16.mxu0 0
        %2578 = vmatpush1.bf16.msra.mxu0 %v2561
        %2579 = vmatprep.subr.bf16.mxu0 0
        %2580 = vmatpush2.bf16.msra.mxu0 0
        %2581 = vmatprep.subr.bf16.mxu0 0
        %2582 = vmatpush2.bf16.msra.mxu0 0
        %2583 = vmatprep.subr.bf16.mxu0 0
        %2584 = vmatpush2.bf16.msra.mxu0 0
        %2585 = vmatprep.subr.bf16.mxu0 0
        %2586 = vmatpush2.bf16.msra.mxu0 0
        %2587 = vmatprep.subr.bf16.mxu0 0
        %2588 = vmatpush2.bf16.msra.mxu0 0
        %2589 = vmatprep.subr.bf16.mxu0 0
        %2590 = vmatpush2.bf16.msra.mxu0 0
        %2591 = vmatprep.subr.bf16.mxu0 0
        %2592 = vmatpush2.bf16.msra.mxu0 0
        %2593 = vmatprep.subr.bf16.mxu0 0
        %2594 = vmatpush2.bf16.msra.mxu0 0
        %2595 = vmatprep.mubr.bf16.mxu0 0
        %2596 = vmatmul.mubr.bf16.gmra.mxu0 %v2558
        %v2597 = vpop.f32.mrf.mxu0
        %v2598 = vadd.f32 0.0, %v2597
        %v2599 = vpop.f32.mrf.mxu0
        %v2600 = vpop.f32.mrf.mxu0
        %v2601 = vpop.f32.mrf.mxu0
        %2602 = vdwg.mxu0
        %2604 = vrot.lane.b32.xlu0 %v892, 120
        %v2605 = vpop.permute.xlu0 %2604
        %v2607 = vsel %vm967, %v2403, 0
        %v2610 = vsel %vm1436, %v2605, 0
        %2612 = vmatprep.subr.bf16.mxu0 0
        %2613 = vmatpush1.bf16.msra.mxu0 0
        %2614 = vmatprep.subr.bf16.mxu0 0
        %2615 = vmatpush1.bf16.msra.mxu0 0
        %2616 = vmatprep.subr.bf16.mxu0 0
        %2617 = vmatpush1.bf16.msra.mxu0 0
        %2618 = vmatprep.subr.bf16.mxu0 0
        %2619 = vmatpush1.bf16.msra.mxu0 0
        %2620 = vmatprep.subr.bf16.mxu0 0
        %2621 = vmatpush1.bf16.msra.mxu0 0
        %2622 = vmatprep.subr.bf16.mxu0 0
        %2623 = vmatpush1.bf16.msra.mxu0 0
        %2624 = vmatprep.subr.bf16.mxu0 0
        %2625 = vmatpush1.bf16.msra.mxu0 0
        %2626 = vmatprep.subr.bf16.mxu0 0
        %2627 = vmatpush1.bf16.msra.mxu0 %v2610
        %2628 = vmatprep.subr.bf16.mxu0 0
        %2629 = vmatpush2.bf16.msra.mxu0 0
        %2630 = vmatprep.subr.bf16.mxu0 0
        %2631 = vmatpush2.bf16.msra.mxu0 0
        %2632 = vmatprep.subr.bf16.mxu0 0
        %2633 = vmatpush2.bf16.msra.mxu0 0
        %2634 = vmatprep.subr.bf16.mxu0 0
        %2635 = vmatpush2.bf16.msra.mxu0 0
        %2636 = vmatprep.subr.bf16.mxu0 0
        %2637 = vmatpush2.bf16.msra.mxu0 0
        %2638 = vmatprep.subr.bf16.mxu0 0
        %2639 = vmatpush2.bf16.msra.mxu0 0
        %2640 = vmatprep.subr.bf16.mxu0 0
        %2641 = vmatpush2.bf16.msra.mxu0 0
        %2642 = vmatprep.subr.bf16.mxu0 0
        %2643 = vmatpush2.bf16.msra.mxu0 0
        %2644 = vmatprep.mubr.bf16.mxu0 0
        %2645 = vmatmul.mubr.bf16.gmra.mxu0 %v2607
        %v2646 = vpop.f32.mrf.mxu0
        %v2647 = vadd.f32 0.0, %v2646
        %v2648 = vpop.f32.mrf.mxu0
        %v2649 = vpop.f32.mrf.mxu0
        %v2650 = vpop.f32.mrf.mxu0
        %2651 = vdwg.mxu0
        %2653 = vrot.lane.b32.xlu0 %v893, 120
        %v2654 = vpop.permute.xlu0 %2653
        %v2656 = vsel %vm967, %v2404, 0
        %v2659 = vsel %vm1436, %v2654, 0
        %2661 = vmatprep.subr.bf16.mxu0 0
        %2662 = vmatpush1.bf16.msra.mxu0 0
        %2663 = vmatprep.subr.bf16.mxu0 0
        %2664 = vmatpush1.bf16.msra.mxu0 0
        %2665 = vmatprep.subr.bf16.mxu0 0
        %2666 = vmatpush1.bf16.msra.mxu0 0
        %2667 = vmatprep.subr.bf16.mxu0 0
        %2668 = vmatpush1.bf16.msra.mxu0 0
        %2669 = vmatprep.subr.bf16.mxu0 0
        %2670 = vmatpush1.bf16.msra.mxu0 0
        %2671 = vmatprep.subr.bf16.mxu0 0
        %2672 = vmatpush1.bf16.msra.mxu0 0
        %2673 = vmatprep.subr.bf16.mxu0 0
        %2674 = vmatpush1.bf16.msra.mxu0 0
        %2675 = vmatprep.subr.bf16.mxu0 0
        %2676 = vmatpush1.bf16.msra.mxu0 %v2659
        %2677 = vmatprep.subr.bf16.mxu0 0
        %2678 = vmatpush2.bf16.msra.mxu0 0
        %2679 = vmatprep.subr.bf16.mxu0 0
        %2680 = vmatpush2.bf16.msra.mxu0 0
        %2681 = vmatprep.subr.bf16.mxu0 0
        %2682 = vmatpush2.bf16.msra.mxu0 0
        %2683 = vmatprep.subr.bf16.mxu0 0
        %2684 = vmatpush2.bf16.msra.mxu0 0
        %2685 = vmatprep.subr.bf16.mxu0 0
        %2686 = vmatpush2.bf16.msra.mxu0 0
        %2687 = vmatprep.subr.bf16.mxu0 0
        %2688 = vmatpush2.bf16.msra.mxu0 0
        %2689 = vmatprep.subr.bf16.mxu0 0
        %2690 = vmatpush2.bf16.msra.mxu0 0
        %2691 = vmatprep.subr.bf16.mxu0 0
        %2692 = vmatpush2.bf16.msra.mxu0 0
        %2693 = vmatprep.mubr.bf16.mxu0 0
        %2694 = vmatmul.mubr.bf16.gmra.mxu0 %v2656
        %v2695 = vpop.f32.mrf.mxu0
        %v2696 = vadd.f32 0.0, %v2695
        %v2697 = vpop.f32.mrf.mxu0
        %v2698 = vpop.f32.mrf.mxu0
        %v2699 = vpop.f32.mrf.mxu0
        %2700 = vdwg.mxu0
        %2702 = vrot.lane.b32.xlu0 %v894, 120
        %v2703 = vpop.permute.xlu0 %2702
        %v2705 = vsel %vm967, %v2405, 0
        %v2708 = vsel %vm1436, %v2703, 0
        %2710 = vmatprep.subr.bf16.mxu0 0
        %2711 = vmatpush1.bf16.msra.mxu0 0
        %2712 = vmatprep.subr.bf16.mxu0 0
        %2713 = vmatpush1.bf16.msra.mxu0 0
        %2714 = vmatprep.subr.bf16.mxu0 0
        %2715 = vmatpush1.bf16.msra.mxu0 0
        %2716 = vmatprep.subr.bf16.mxu0 0
        %2717 = vmatpush1.bf16.msra.mxu0 0
        %2718 = vmatprep.subr.bf16.mxu0 0
        %2719 = vmatpush1.bf16.msra.mxu0 0
        %2720 = vmatprep.subr.bf16.mxu0 0
        %2721 = vmatpush1.bf16.msra.mxu0 0
        %2722 = vmatprep.subr.bf16.mxu0 0
        %2723 = vmatpush1.bf16.msra.mxu0 0
        %2724 = vmatprep.subr.bf16.mxu0 0
        %2725 = vmatpush1.bf16.msra.mxu0 %v2708
        %2726 = vmatprep.subr.bf16.mxu0 0
        %2727 = vmatpush2.bf16.msra.mxu0 0
        %2728 = vmatprep.subr.bf16.mxu0 0
        %2729 = vmatpush2.bf16.msra.mxu0 0
        %2730 = vmatprep.subr.bf16.mxu0 0
        %2731 = vmatpush2.bf16.msra.mxu0 0
        %2732 = vmatprep.subr.bf16.mxu0 0
        %2733 = vmatpush2.bf16.msra.mxu0 0
        %2734 = vmatprep.subr.bf16.mxu0 0
        %2735 = vmatpush2.bf16.msra.mxu0 0
        %2736 = vmatprep.subr.bf16.mxu0 0
        %2737 = vmatpush2.bf16.msra.mxu0 0
        %2738 = vmatprep.subr.bf16.mxu0 0
        %2739 = vmatpush2.bf16.msra.mxu0 0
        %2740 = vmatprep.subr.bf16.mxu0 0
        %2741 = vmatpush2.bf16.msra.mxu0 0
        %2742 = vmatprep.mubr.bf16.mxu0 0
        %2743 = vmatmul.mubr.bf16.gmra.mxu0 %v2705
        %v2744 = vpop.f32.mrf.mxu0
        %v2745 = vadd.f32 0.0, %v2744
        %v2746 = vpop.f32.mrf.mxu0
        %v2747 = vpop.f32.mrf.mxu0
        %v2748 = vpop.f32.mrf.mxu0
        %2749 = vdwg.mxu0
        %2751 = vrot.lane.b32.xlu0 %v895, 120
        %v2752 = vpop.permute.xlu0 %2751
        %v2754 = vsel %vm967, %v2406, 0
        %v2757 = vsel %vm1436, %v2752, 0
        %2759 = vmatprep.subr.bf16.mxu0 0
        %2760 = vmatpush1.bf16.msra.mxu0 0
        %2761 = vmatprep.subr.bf16.mxu0 0
        %2762 = vmatpush1.bf16.msra.mxu0 0
        %2763 = vmatprep.subr.bf16.mxu0 0
        %2764 = vmatpush1.bf16.msra.mxu0 0
        %2765 = vmatprep.subr.bf16.mxu0 0
        %2766 = vmatpush1.bf16.msra.mxu0 0
        %2767 = vmatprep.subr.bf16.mxu0 0
        %2768 = vmatpush1.bf16.msra.mxu0 0
        %2769 = vmatprep.subr.bf16.mxu0 0
        %2770 = vmatpush1.bf16.msra.mxu0 0
        %2771 = vmatprep.subr.bf16.mxu0 0
        %2772 = vmatpush1.bf16.msra.mxu0 0
        %2773 = vmatprep.subr.bf16.mxu0 0
        %2774 = vmatpush1.bf16.msra.mxu0 %v2757
        %2775 = vmatprep.subr.bf16.mxu0 0
        %2776 = vmatpush2.bf16.msra.mxu0 0
        %2777 = vmatprep.subr.bf16.mxu0 0
        %2778 = vmatpush2.bf16.msra.mxu0 0
        %2779 = vmatprep.subr.bf16.mxu0 0
        %2780 = vmatpush2.bf16.msra.mxu0 0
        %2781 = vmatprep.subr.bf16.mxu0 0
        %2782 = vmatpush2.bf16.msra.mxu0 0
        %2783 = vmatprep.subr.bf16.mxu0 0
        %2784 = vmatpush2.bf16.msra.mxu0 0
        %2785 = vmatprep.subr.bf16.mxu0 0
        %2786 = vmatpush2.bf16.msra.mxu0 0
        %2787 = vmatprep.subr.bf16.mxu0 0
        %2788 = vmatpush2.bf16.msra.mxu0 0
        %2789 = vmatprep.subr.bf16.mxu0 0
        %2790 = vmatpush2.bf16.msra.mxu0 0
        %2791 = vmatprep.mubr.bf16.mxu0 0
        %2792 = vmatmul.mubr.bf16.gmra.mxu0 %v2754
        %v2793 = vpop.f32.mrf.mxu0
        %v2794 = vadd.f32 0.0, %v2793
        %v2795 = vpop.f32.mrf.mxu0
        %v2796 = vpop.f32.mrf.mxu0
        %v2797 = vpop.f32.mrf.mxu0
        %2798 = vdwg.mxu0
        %v2799 = vpack.c.bf16 %v2451, %v2451
        %v2800 = vpack.c.bf16 %v2500, %v2500
        %v2801 = vpack.c.bf16 %v2549, %v2549
        %v2802 = vpack.c.bf16 %v2598, %v2598
        %v2803 = vpack.c.bf16 %v2647, %v2647
        %v2804 = vpack.c.bf16 %v2696, %v2696
        %v2805 = vpack.c.bf16 %v2745, %v2745
        %v2806 = vpack.c.bf16 %v2794, %v2794
        %v2815 = vunpack.c.l.b16 %v2799
        %v2816 = vunpack.c.l.b16 %v2800
        %v2817 = vunpack.c.l.b16 %v2801
        %v2818 = vunpack.c.l.b16 %v2802
        %v2819 = vunpack.c.l.b16 %v2803
        %v2820 = vunpack.c.l.b16 %v2804
        %v2821 = vunpack.c.l.b16 %v2805
        %v2822 = vunpack.c.l.b16 %v2806
        %v2823 = vrot.slane %v2816, 7
        %v2824 = vsel %vm1827, %v2823, %v2815
        %v2825 = vrot.slane %v2817, 6
        %v2826 = vsel %vm1830, %v2825, %v2824
        %v2827 = vrot.slane %v2818, 5
        %v2828 = vsel %vm1833, %v2827, %v2826
        %v2829 = vrot.slane %v2819, 4
        %v2830 = vsel %vm1836, %v2829, %v2828
        %v2831 = vrot.slane %v2820, 3
        %v2832 = vsel %vm1839, %v2831, %v2830
        %v2833 = vrot.slane %v2821, 2
        %v2834 = vsel %vm1842, %v2833, %v2832
        %v2835 = vrot.slane %v2822, 1
        %v2836 = vsel %vm1845, %v2835, %v2834
        %v2837 = vpack.c.b16 %v2836, %v2836
        %v2839 = vsel %vm967, %v2837, 0
        %v2842 = vsel %vm1436, %v956, 0
        %2844 = vmatprep.subr.bf16.mxu0 0
        %2845 = vmatpush1.bf16.msra.mxu0 0
        %2846 = vmatprep.subr.bf16.mxu0 0
        %2847 = vmatpush1.bf16.msra.mxu0 0
        %2848 = vmatprep.subr.bf16.mxu0 0
        %2849 = vmatpush1.bf16.msra.mxu0 0
        %2850 = vmatprep.subr.bf16.mxu0 0
        %2851 = vmatpush1.bf16.msra.mxu0 0
        %2852 = vmatprep.subr.bf16.mxu0 0
        %2853 = vmatpush1.bf16.msra.mxu0 0
        %2854 = vmatprep.subr.bf16.mxu0 0
        %2855 = vmatpush1.bf16.msra.mxu0 0
        %2856 = vmatprep.subr.bf16.mxu0 0
        %2857 = vmatpush1.bf16.msra.mxu0 0
        %2858 = vmatprep.subr.bf16.mxu0 0
        %2859 = vmatpush1.bf16.msra.mxu0 %v2842
        %2860 = vmatprep.subr.bf16.mxu0 0
        %2861 = vmatpush2.bf16.msra.mxu0 0
        %2862 = vmatprep.subr.bf16.mxu0 0
        %2863 = vmatpush2.bf16.msra.mxu0 0
        %2864 = vmatprep.subr.bf16.mxu0 0
        %2865 = vmatpush2.bf16.msra.mxu0 0
        %2866 = vmatprep.subr.bf16.mxu0 0
        %2867 = vmatpush2.bf16.msra.mxu0 0
        %2868 = vmatprep.subr.bf16.mxu0 0
        %2869 = vmatpush2.bf16.msra.mxu0 0
        %2870 = vmatprep.subr.bf16.mxu0 0
        %2871 = vmatpush2.bf16.msra.mxu0 0
        %2872 = vmatprep.subr.bf16.mxu0 0
        %2873 = vmatpush2.bf16.msra.mxu0 0
        %2874 = vmatprep.subr.bf16.mxu0 0
        %2875 = vmatpush2.bf16.msra.mxu0 0
        %2876 = vmatprep.mubr.bf16.mxu0 0
        %2877 = vmatmul.mubr.bf16.gmra.mxu0 %v2839
        %v2878 = vpop.f32.mrf.mxu0
        %v2879 = vadd.f32 0.0, %v2878
        %v2880 = vpop.f32.mrf.mxu0
        %v2881 = vpop.f32.mrf.mxu0
        %v2882 = vpop.f32.mrf.mxu0
        %2883 = vdwg.mxu0
        %v2884 = vadd.f32 %v1894, %v2879
        %2885 = vrot.lane.b32.xlu0 %v872, 112
        %v2886 = vpop.permute.xlu0 %2885
        %2887 = vrot.lane.b32.xlu0 %v880, 112
        %v2888 = vpop.permute.xlu0 %2887
        %v2890 = vsel %vm967, %v2886, 0
        %v2893 = vsel %vm967, %v2888, 0
        %2895 = vmatprep.subr.bf16.mxu0 0
        %2896 = vmatpush1.bf16.xpose.msra.mxu0 0
        %2897 = vmatprep.subr.bf16.mxu0 0
        %2898 = vmatpush1.bf16.xpose.msra.mxu0 0
        %2899 = vmatprep.subr.bf16.mxu0 0
        %2900 = vmatpush1.bf16.xpose.msra.mxu0 0
        %2901 = vmatprep.subr.bf16.mxu0 0
        %2902 = vmatpush1.bf16.xpose.msra.mxu0 0
        %2903 = vmatprep.subr.bf16.mxu0 0
        %2904 = vmatpush1.bf16.xpose.msra.mxu0 0
        %2905 = vmatprep.subr.bf16.mxu0 0
        %2906 = vmatpush1.bf16.xpose.msra.mxu0 0
        %2907 = vmatprep.subr.bf16.mxu0 0
        %2908 = vmatpush1.bf16.xpose.msra.mxu0 0
        %2909 = vmatprep.subr.bf16.mxu0 0
        %2910 = vmatpush1.bf16.xpose.msra.mxu0 %v2893
        %2911 = vmatprep.subr.bf16.mxu0 0
        %2912 = vmatpush2.bf16.xpose.msra.mxu0 0
        %2913 = vmatprep.subr.bf16.mxu0 0
        %2914 = vmatpush2.bf16.xpose.msra.mxu0 0
        %2915 = vmatprep.subr.bf16.mxu0 0
        %2916 = vmatpush2.bf16.xpose.msra.mxu0 0
        %2917 = vmatprep.subr.bf16.mxu0 0
        %2918 = vmatpush2.bf16.xpose.msra.mxu0 0
        %2919 = vmatprep.subr.bf16.mxu0 0
        %2920 = vmatpush2.bf16.xpose.msra.mxu0 0
        %2921 = vmatprep.subr.bf16.mxu0 0
        %2922 = vmatpush2.bf16.xpose.msra.mxu0 0
        %2923 = vmatprep.subr.bf16.mxu0 0
        %2924 = vmatpush2.bf16.xpose.msra.mxu0 0
        %2925 = vmatprep.subr.bf16.mxu0 0
        %2926 = vmatpush2.bf16.xpose.msra.mxu0 0
        %2927 = vmatprep.mubr.bf16.mxu0 0
        %2928 = vmatmul.mubr.bf16.gmra.mxu0 %v2890
        %v2929 = vpop.f32.mrf.mxu0
        %v2930 = vadd.f32 %v921, %v2929
        %v2931 = vpop.f32.mrf.mxu0
        %v2932 = vpop.f32.mrf.mxu0
        %v2933 = vpop.f32.mrf.mxu0
        %2934 = vdwg.mxu0
        %2935 = vrot.lane.b32.xlu0 %v873, 112
        %v2936 = vpop.permute.xlu0 %2935
        %2937 = vrot.lane.b32.xlu0 %v881, 112
        %v2938 = vpop.permute.xlu0 %2937
        %v2940 = vsel %vm967, %v2936, 0
        %v2943 = vsel %vm967, %v2938, 0
        %2945 = vmatprep.subr.bf16.mxu0 0
        %2946 = vmatpush1.bf16.xpose.msra.mxu0 0
        %2947 = vmatprep.subr.bf16.mxu0 0
        %2948 = vmatpush1.bf16.xpose.msra.mxu0 0
        %2949 = vmatprep.subr.bf16.mxu0 0
        %2950 = vmatpush1.bf16.xpose.msra.mxu0 0
        %2951 = vmatprep.subr.bf16.mxu0 0
        %2952 = vmatpush1.bf16.xpose.msra.mxu0 0
        %2953 = vmatprep.subr.bf16.mxu0 0
        %2954 = vmatpush1.bf16.xpose.msra.mxu0 0
        %2955 = vmatprep.subr.bf16.mxu0 0
        %2956 = vmatpush1.bf16.xpose.msra.mxu0 0
        %2957 = vmatprep.subr.bf16.mxu0 0
        %2958 = vmatpush1.bf16.xpose.msra.mxu0 0
        %2959 = vmatprep.subr.bf16.mxu0 0
        %2960 = vmatpush1.bf16.xpose.msra.mxu0 %v2943
        %2961 = vmatprep.subr.bf16.mxu0 0
        %2962 = vmatpush2.bf16.xpose.msra.mxu0 0
        %2963 = vmatprep.subr.bf16.mxu0 0
        %2964 = vmatpush2.bf16.xpose.msra.mxu0 0
        %2965 = vmatprep.subr.bf16.mxu0 0
        %2966 = vmatpush2.bf16.xpose.msra.mxu0 0
        %2967 = vmatprep.subr.bf16.mxu0 0
        %2968 = vmatpush2.bf16.xpose.msra.mxu0 0
        %2969 = vmatprep.subr.bf16.mxu0 0
        %2970 = vmatpush2.bf16.xpose.msra.mxu0 0
        %2971 = vmatprep.subr.bf16.mxu0 0
        %2972 = vmatpush2.bf16.xpose.msra.mxu0 0
        %2973 = vmatprep.subr.bf16.mxu0 0
        %2974 = vmatpush2.bf16.xpose.msra.mxu0 0
        %2975 = vmatprep.subr.bf16.mxu0 0
        %2976 = vmatpush2.bf16.xpose.msra.mxu0 0
        %2977 = vmatprep.mubr.bf16.mxu0 0
        %2978 = vmatmul.mubr.bf16.gmra.mxu0 %v2940
        %v2979 = vpop.f32.mrf.mxu0
        %v2980 = vadd.f32 %v935, %v2979
        %v2981 = vpop.f32.mrf.mxu0
        %v2982 = vpop.f32.mrf.mxu0
        %v2983 = vpop.f32.mrf.mxu0
        %2984 = vdwg.mxu0
        %2985 = vrot.lane.b32.xlu0 %v874, 112
        %v2986 = vpop.permute.xlu0 %2985
        %2987 = vrot.lane.b32.xlu0 %v882, 112
        %v2988 = vpop.permute.xlu0 %2987
        %v2990 = vsel %vm967, %v2986, 0
        %v2993 = vsel %vm967, %v2988, 0
        %2995 = vmatprep.subr.bf16.mxu0 0
        %2996 = vmatpush1.bf16.xpose.msra.mxu0 0
        %2997 = vmatprep.subr.bf16.mxu0 0
        %2998 = vmatpush1.bf16.xpose.msra.mxu0 0
        %2999 = vmatprep.subr.bf16.mxu0 0
        %3000 = vmatpush1.bf16.xpose.msra.mxu0 0
        %3001 = vmatprep.subr.bf16.mxu0 0
        %3002 = vmatpush1.bf16.xpose.msra.mxu0 0
        %3003 = vmatprep.subr.bf16.mxu0 0
        %3004 = vmatpush1.bf16.xpose.msra.mxu0 0
        %3005 = vmatprep.subr.bf16.mxu0 0
        %3006 = vmatpush1.bf16.xpose.msra.mxu0 0
        %3007 = vmatprep.subr.bf16.mxu0 0
        %3008 = vmatpush1.bf16.xpose.msra.mxu0 0
        %3009 = vmatprep.subr.bf16.mxu0 0
        %3010 = vmatpush1.bf16.xpose.msra.mxu0 %v2993
        %3011 = vmatprep.subr.bf16.mxu0 0
        %3012 = vmatpush2.bf16.xpose.msra.mxu0 0
        %3013 = vmatprep.subr.bf16.mxu0 0
        %3014 = vmatpush2.bf16.xpose.msra.mxu0 0
        %3015 = vmatprep.subr.bf16.mxu0 0
        %3016 = vmatpush2.bf16.xpose.msra.mxu0 0
        %3017 = vmatprep.subr.bf16.mxu0 0
        %3018 = vmatpush2.bf16.xpose.msra.mxu0 0
        %3019 = vmatprep.subr.bf16.mxu0 0
        %3020 = vmatpush2.bf16.xpose.msra.mxu0 0
        %3021 = vmatprep.subr.bf16.mxu0 0
        %3022 = vmatpush2.bf16.xpose.msra.mxu0 0
        %3023 = vmatprep.subr.bf16.mxu0 0
        %3024 = vmatpush2.bf16.xpose.msra.mxu0 0
        %3025 = vmatprep.subr.bf16.mxu0 0
        %3026 = vmatpush2.bf16.xpose.msra.mxu0 0
        %3027 = vmatprep.mubr.bf16.mxu0 0
        %3028 = vmatmul.mubr.bf16.gmra.mxu0 %v2990
        %v3029 = vpop.f32.mrf.mxu0
        %v3030 = vadd.f32 %v943, %v3029
        %v3031 = vpop.f32.mrf.mxu0
        %v3032 = vpop.f32.mrf.mxu0
        %v3033 = vpop.f32.mrf.mxu0
        %3034 = vdwg.mxu0
        %3035 = vrot.lane.b32.xlu0 %v875, 112
        %v3036 = vpop.permute.xlu0 %3035
        %3037 = vrot.lane.b32.xlu0 %v883, 112
        %v3038 = vpop.permute.xlu0 %3037
        %v3040 = vsel %vm967, %v3036, 0
        %v3043 = vsel %vm967, %v3038, 0
        %3045 = vmatprep.subr.bf16.mxu0 0
        %3046 = vmatpush1.bf16.xpose.msra.mxu0 0
        %3047 = vmatprep.subr.bf16.mxu0 0
        %3048 = vmatpush1.bf16.xpose.msra.mxu0 0
        %3049 = vmatprep.subr.bf16.mxu0 0
        %3050 = vmatpush1.bf16.xpose.msra.mxu0 0
        %3051 = vmatprep.subr.bf16.mxu0 0
        %3052 = vmatpush1.bf16.xpose.msra.mxu0 0
        %3053 = vmatprep.subr.bf16.mxu0 0
        %3054 = vmatpush1.bf16.xpose.msra.mxu0 0
        %3055 = vmatprep.subr.bf16.mxu0 0
        %3056 = vmatpush1.bf16.xpose.msra.mxu0 0
        %3057 = vmatprep.subr.bf16.mxu0 0
        %3058 = vmatpush1.bf16.xpose.msra.mxu0 0
        %3059 = vmatprep.subr.bf16.mxu0 0
        %3060 = vmatpush1.bf16.xpose.msra.mxu0 %v3043
        %3061 = vmatprep.subr.bf16.mxu0 0
        %3062 = vmatpush2.bf16.xpose.msra.mxu0 0
        %3063 = vmatprep.subr.bf16.mxu0 0
        %3064 = vmatpush2.bf16.xpose.msra.mxu0 0
        %3065 = vmatprep.subr.bf16.mxu0 0
        %3066 = vmatpush2.bf16.xpose.msra.mxu0 0
        %3067 = vmatprep.subr.bf16.mxu0 0
        %3068 = vmatpush2.bf16.xpose.msra.mxu0 0
        %3069 = vmatprep.subr.bf16.mxu0 0
        %3070 = vmatpush2.bf16.xpose.msra.mxu0 0
        %3071 = vmatprep.subr.bf16.mxu0 0
        %3072 = vmatpush2.bf16.xpose.msra.mxu0 0
        %3073 = vmatprep.subr.bf16.mxu0 0
        %3074 = vmatpush2.bf16.xpose.msra.mxu0 0
        %3075 = vmatprep.subr.bf16.mxu0 0
        %3076 = vmatpush2.bf16.xpose.msra.mxu0 0
        %3077 = vmatprep.mubr.bf16.mxu0 0
        %3078 = vmatmul.mubr.bf16.gmra.mxu0 %v3040
        %v3079 = vpop.f32.mrf.mxu0
        %v3080 = vadd.f32 %v945, %v3079
        %v3081 = vpop.f32.mrf.mxu0
        %v3082 = vpop.f32.mrf.mxu0
        %v3083 = vpop.f32.mrf.mxu0
        %3084 = vdwg.mxu0
        %3085 = vrot.lane.b32.xlu0 %v876, 112
        %v3086 = vpop.permute.xlu0 %3085
        %3087 = vrot.lane.b32.xlu0 %v884, 112
        %v3088 = vpop.permute.xlu0 %3087
        %v3090 = vsel %vm967, %v3086, 0
        %v3093 = vsel %vm967, %v3088, 0
        %3095 = vmatprep.subr.bf16.mxu0 0
        %3096 = vmatpush1.bf16.xpose.msra.mxu0 0
        %3097 = vmatprep.subr.bf16.mxu0 0
        %3098 = vmatpush1.bf16.xpose.msra.mxu0 0
        %3099 = vmatprep.subr.bf16.mxu0 0
        %3100 = vmatpush1.bf16.xpose.msra.mxu0 0
        %3101 = vmatprep.subr.bf16.mxu0 0
        %3102 = vmatpush1.bf16.xpose.msra.mxu0 0
        %3103 = vmatprep.subr.bf16.mxu0 0
        %3104 = vmatpush1.bf16.xpose.msra.mxu0 0
        %3105 = vmatprep.subr.bf16.mxu0 0
        %3106 = vmatpush1.bf16.xpose.msra.mxu0 0
        %3107 = vmatprep.subr.bf16.mxu0 0
        %3108 = vmatpush1.bf16.xpose.msra.mxu0 0
        %3109 = vmatprep.subr.bf16.mxu0 0
        %3110 = vmatpush1.bf16.xpose.msra.mxu0 %v3093
        %3111 = vmatprep.subr.bf16.mxu0 0
        %3112 = vmatpush2.bf16.xpose.msra.mxu0 0
        %3113 = vmatprep.subr.bf16.mxu0 0
        %3114 = vmatpush2.bf16.xpose.msra.mxu0 0
        %3115 = vmatprep.subr.bf16.mxu0 0
        %3116 = vmatpush2.bf16.xpose.msra.mxu0 0
        %3117 = vmatprep.subr.bf16.mxu0 0
        %3118 = vmatpush2.bf16.xpose.msra.mxu0 0
        %3119 = vmatprep.subr.bf16.mxu0 0
        %3120 = vmatpush2.bf16.xpose.msra.mxu0 0
        %3121 = vmatprep.subr.bf16.mxu0 0
        %3122 = vmatpush2.bf16.xpose.msra.mxu0 0
        %3123 = vmatprep.subr.bf16.mxu0 0
        %3124 = vmatpush2.bf16.xpose.msra.mxu0 0
        %3125 = vmatprep.subr.bf16.mxu0 0
        %3126 = vmatpush2.bf16.xpose.msra.mxu0 0
        %3127 = vmatprep.mubr.bf16.mxu0 0
        %3128 = vmatmul.mubr.bf16.gmra.mxu0 %v3090
        %v3129 = vpop.f32.mrf.mxu0
        %v3130 = vadd.f32 %v928, %v3129
        %v3131 = vpop.f32.mrf.mxu0
        %v3132 = vpop.f32.mrf.mxu0
        %v3133 = vpop.f32.mrf.mxu0
        %3134 = vdwg.mxu0
        %3135 = vrot.lane.b32.xlu0 %v877, 112
        %v3136 = vpop.permute.xlu0 %3135
        %3137 = vrot.lane.b32.xlu0 %v885, 112
        %v3138 = vpop.permute.xlu0 %3137
        %v3140 = vsel %vm967, %v3136, 0
        %v3143 = vsel %vm967, %v3138, 0
        %3145 = vmatprep.subr.bf16.mxu0 0
        %3146 = vmatpush1.bf16.xpose.msra.mxu0 0
        %3147 = vmatprep.subr.bf16.mxu0 0
        %3148 = vmatpush1.bf16.xpose.msra.mxu0 0
        %3149 = vmatprep.subr.bf16.mxu0 0
        %3150 = vmatpush1.bf16.xpose.msra.mxu0 0
        %3151 = vmatprep.subr.bf16.mxu0 0
        %3152 = vmatpush1.bf16.xpose.msra.mxu0 0
        %3153 = vmatprep.subr.bf16.mxu0 0
        %3154 = vmatpush1.bf16.xpose.msra.mxu0 0
        %3155 = vmatprep.subr.bf16.mxu0 0
        %3156 = vmatpush1.bf16.xpose.msra.mxu0 0
        %3157 = vmatprep.subr.bf16.mxu0 0
        %3158 = vmatpush1.bf16.xpose.msra.mxu0 0
        %3159 = vmatprep.subr.bf16.mxu0 0
        %3160 = vmatpush1.bf16.xpose.msra.mxu0 %v3143
        %3161 = vmatprep.subr.bf16.mxu0 0
        %3162 = vmatpush2.bf16.xpose.msra.mxu0 0
        %3163 = vmatprep.subr.bf16.mxu0 0
        %3164 = vmatpush2.bf16.xpose.msra.mxu0 0
        %3165 = vmatprep.subr.bf16.mxu0 0
        %3166 = vmatpush2.bf16.xpose.msra.mxu0 0
        %3167 = vmatprep.subr.bf16.mxu0 0
        %3168 = vmatpush2.bf16.xpose.msra.mxu0 0
        %3169 = vmatprep.subr.bf16.mxu0 0
        %3170 = vmatpush2.bf16.xpose.msra.mxu0 0
        %3171 = vmatprep.subr.bf16.mxu0 0
        %3172 = vmatpush2.bf16.xpose.msra.mxu0 0
        %3173 = vmatprep.subr.bf16.mxu0 0
        %3174 = vmatpush2.bf16.xpose.msra.mxu0 0
        %3175 = vmatprep.subr.bf16.mxu0 0
        %3176 = vmatpush2.bf16.xpose.msra.mxu0 0
        %3177 = vmatprep.mubr.bf16.mxu0 0
        %3178 = vmatmul.mubr.bf16.gmra.mxu0 %v3140
        %v3179 = vpop.f32.mrf.mxu0
        %v3180 = vadd.f32 %v942, %v3179
        %v3181 = vpop.f32.mrf.mxu0
        %v3182 = vpop.f32.mrf.mxu0
        %v3183 = vpop.f32.mrf.mxu0
        %3184 = vdwg.mxu0
        %3185 = vrot.lane.b32.xlu0 %v878, 112
        %v3186 = vpop.permute.xlu0 %3185
        %3187 = vrot.lane.b32.xlu0 %v886, 112
        %v3188 = vpop.permute.xlu0 %3187
        %v3190 = vsel %vm967, %v3186, 0
        %v3193 = vsel %vm967, %v3188, 0
        %3195 = vmatprep.subr.bf16.mxu0 0
        %3196 = vmatpush1.bf16.xpose.msra.mxu0 0
        %3197 = vmatprep.subr.bf16.mxu0 0
        %3198 = vmatpush1.bf16.xpose.msra.mxu0 0
        %3199 = vmatprep.subr.bf16.mxu0 0
        %3200 = vmatpush1.bf16.xpose.msra.mxu0 0
        %3201 = vmatprep.subr.bf16.mxu0 0
        %3202 = vmatpush1.bf16.xpose.msra.mxu0 0
        %3203 = vmatprep.subr.bf16.mxu0 0
        %3204 = vmatpush1.bf16.xpose.msra.mxu0 0
        %3205 = vmatprep.subr.bf16.mxu0 0
        %3206 = vmatpush1.bf16.xpose.msra.mxu0 0
        %3207 = vmatprep.subr.bf16.mxu0 0
        %3208 = vmatpush1.bf16.xpose.msra.mxu0 0
        %3209 = vmatprep.subr.bf16.mxu0 0
        %3210 = vmatpush1.bf16.xpose.msra.mxu0 %v3193
        %3211 = vmatprep.subr.bf16.mxu0 0
        %3212 = vmatpush2.bf16.xpose.msra.mxu0 0
        %3213 = vmatprep.subr.bf16.mxu0 0
        %3214 = vmatpush2.bf16.xpose.msra.mxu0 0
        %3215 = vmatprep.subr.bf16.mxu0 0
        %3216 = vmatpush2.bf16.xpose.msra.mxu0 0
        %3217 = vmatprep.subr.bf16.mxu0 0
        %3218 = vmatpush2.bf16.xpose.msra.mxu0 0
        %3219 = vmatprep.subr.bf16.mxu0 0
        %3220 = vmatpush2.bf16.xpose.msra.mxu0 0
        %3221 = vmatprep.subr.bf16.mxu0 0
        %3222 = vmatpush2.bf16.xpose.msra.mxu0 0
        %3223 = vmatprep.subr.bf16.mxu0 0
        %3224 = vmatpush2.bf16.xpose.msra.mxu0 0
        %3225 = vmatprep.subr.bf16.mxu0 0
        %3226 = vmatpush2.bf16.xpose.msra.mxu0 0
        %3227 = vmatprep.mubr.bf16.mxu0 0
        %3228 = vmatmul.mubr.bf16.gmra.mxu0 %v3190
        %v3229 = vpop.f32.mrf.mxu0
        %v3230 = vadd.f32 %v944, %v3229
        %v3231 = vpop.f32.mrf.mxu0
        %v3232 = vpop.f32.mrf.mxu0
        %v3233 = vpop.f32.mrf.mxu0
        %3234 = vdwg.mxu0
        %3235 = vrot.lane.b32.xlu0 %v879, 112
        %v3236 = vpop.permute.xlu0 %3235
        %3237 = vrot.lane.b32.xlu0 %v887, 112
        %v3238 = vpop.permute.xlu0 %3237
        %v3240 = vsel %vm967, %v3236, 0
        %v3243 = vsel %vm967, %v3238, 0
        %3245 = vmatprep.subr.bf16.mxu0 0
        %3246 = vmatpush1.bf16.xpose.msra.mxu0 0
        %3247 = vmatprep.subr.bf16.mxu0 0
        %3248 = vmatpush1.bf16.xpose.msra.mxu0 0
        %3249 = vmatprep.subr.bf16.mxu0 0
        %3250 = vmatpush1.bf16.xpose.msra.mxu0 0
        %3251 = vmatprep.subr.bf16.mxu0 0
        %3252 = vmatpush1.bf16.xpose.msra.mxu0 0
        %3253 = vmatprep.subr.bf16.mxu0 0
        %3254 = vmatpush1.bf16.xpose.msra.mxu0 0
        %3255 = vmatprep.subr.bf16.mxu0 0
        %3256 = vmatpush1.bf16.xpose.msra.mxu0 0
        %3257 = vmatprep.subr.bf16.mxu0 0
        %3258 = vmatpush1.bf16.xpose.msra.mxu0 0
        %3259 = vmatprep.subr.bf16.mxu0 0
        %3260 = vmatpush1.bf16.xpose.msra.mxu0 %v3243
        %3261 = vmatprep.subr.bf16.mxu0 0
        %3262 = vmatpush2.bf16.xpose.msra.mxu0 0
        %3263 = vmatprep.subr.bf16.mxu0 0
        %3264 = vmatpush2.bf16.xpose.msra.mxu0 0
        %3265 = vmatprep.subr.bf16.mxu0 0
        %3266 = vmatpush2.bf16.xpose.msra.mxu0 0
        %3267 = vmatprep.subr.bf16.mxu0 0
        %3268 = vmatpush2.bf16.xpose.msra.mxu0 0
        %3269 = vmatprep.subr.bf16.mxu0 0
        %3270 = vmatpush2.bf16.xpose.msra.mxu0 0
        %3271 = vmatprep.subr.bf16.mxu0 0
        %3272 = vmatpush2.bf16.xpose.msra.mxu0 0
        %3273 = vmatprep.subr.bf16.mxu0 0
        %3274 = vmatpush2.bf16.xpose.msra.mxu0 0
        %3275 = vmatprep.subr.bf16.mxu0 0
        %3276 = vmatpush2.bf16.xpose.msra.mxu0 0
        %3277 = vmatprep.mubr.bf16.mxu0 0
        %3278 = vmatmul.mubr.bf16.gmra.mxu0 %v3240
        %v3279 = vpop.f32.mrf.mxu0
        %v3280 = vadd.f32 %v946, %v3279
        %v3281 = vpop.f32.mrf.mxu0
        %v3282 = vpop.f32.mrf.mxu0
        %v3283 = vpop.f32.mrf.mxu0
        %3284 = vdwg.mxu0
        %v3285 = vsel %vm1336, %v2930, -inf
        %3286 = vmax.xlane.f32.xlu0 %v3285
        %v3287 = vpop.xlane.xlu0 %3286
        %v3288 = vsel %vm1336, %v2980, -inf
        %3289 = vmax.xlane.f32.xlu0 %v3288
        %v3290 = vpop.xlane.xlu0 %3289
        %v3291 = vsel %vm1336, %v3030, -inf
        %3292 = vmax.xlane.f32.xlu0 %v3291
        %v3293 = vpop.xlane.xlu0 %3292
        %v3294 = vsel %vm1336, %v3080, -inf
        %3295 = vmax.xlane.f32.xlu0 %v3294
        %v3296 = vpop.xlane.xlu0 %3295
        %v3297 = vsel %vm1336, %v3130, -inf
        %3298 = vmax.xlane.f32.xlu0 %v3297
        %v3299 = vpop.xlane.xlu0 %3298
        %v3300 = vsel %vm1336, %v3180, -inf
        %3301 = vmax.xlane.f32.xlu0 %v3300
        %v3302 = vpop.xlane.xlu0 %3301
        %v3303 = vsel %vm1336, %v3230, -inf
        %3304 = vmax.xlane.f32.xlu0 %v3303
        %v3305 = vpop.xlane.xlu0 %3304
        %v3306 = vsel %vm1336, %v3280, -inf
        %3307 = vmax.xlane.f32.xlu0 %v3306
        %v3308 = vpop.xlane.xlu0 %3307
        %v3309 = vsub.f32 %v2930, %v3287
        %v3310 = vsub.f32 %v2980, %v3290
        %v3311 = vsub.f32 %v3030, %v3293
        %v3312 = vsub.f32 %v3080, %v3296
        %v3313 = vsub.f32 %v3130, %v3299
        %v3314 = vsub.f32 %v3180, %v3302
        %v3315 = vsub.f32 %v3230, %v3305
        %v3316 = vsub.f32 %v3280, %v3308
        %v3317 = vmul.f32 %v3309, 1.442695
        %v3318 = vpow.pop %v3317
        %v3319 = vmul.f32 %v3310, 1.442695
        %v3320 = vpow.pop %v3319
        %v3321 = vmul.f32 %v3311, 1.442695
        %v3322 = vpow.pop %v3321
        %v3323 = vmul.f32 %v3312, 1.442695
        %v3324 = vpow.pop %v3323
        %v3325 = vmul.f32 %v3313, 1.442695
        %v3326 = vpow.pop %v3325
        %v3327 = vmul.f32 %v3314, 1.442695
        %v3328 = vpow.pop %v3327
        %v3329 = vmul.f32 %v3315, 1.442695
        %v3330 = vpow.pop %v3329
        %v3331 = vmul.f32 %v3316, 1.442695
        %v3332 = vpow.pop %v3331
        %v3333 = vsel %vm1336, %v3318, 0.0
        %3334 = vadd.xlane.f32.xlu0 %v3333
        %v3335 = vpop.xlane.xlu0 %3334
        %v3336 = vsel %vm1336, %v3320, 0.0
        %3337 = vadd.xlane.f32.xlu0 %v3336
        %v3338 = vpop.xlane.xlu0 %3337
        %v3339 = vsel %vm1336, %v3322, 0.0
        %3340 = vadd.xlane.f32.xlu0 %v3339
        %v3341 = vpop.xlane.xlu0 %3340
        %v3342 = vsel %vm1336, %v3324, 0.0
        %3343 = vadd.xlane.f32.xlu0 %v3342
        %v3344 = vpop.xlane.xlu0 %3343
        %v3345 = vsel %vm1336, %v3326, 0.0
        %3346 = vadd.xlane.f32.xlu0 %v3345
        %v3347 = vpop.xlane.xlu0 %3346
        %v3348 = vsel %vm1336, %v3328, 0.0
        %3349 = vadd.xlane.f32.xlu0 %v3348
        %v3350 = vpop.xlane.xlu0 %3349
        %v3351 = vsel %vm1336, %v3330, 0.0
        %3352 = vadd.xlane.f32.xlu0 %v3351
        %v3353 = vpop.xlane.xlu0 %3352
        %v3354 = vsel %vm1336, %v3332, 0.0
        %3355 = vadd.xlane.f32.xlu0 %v3354
        %v3356 = vpop.xlane.xlu0 %3355
        %v3357 = vrcp.pop %v3335
        %v3358 = vrcp.pop %v3338
        %v3359 = vrcp.pop %v3341
        %v3360 = vrcp.pop %v3344
        %v3361 = vrcp.pop %v3347
        %v3362 = vrcp.pop %v3350
        %v3363 = vrcp.pop %v3353
        %v3364 = vrcp.pop %v3356
        %v3365 = vmul.f32 %v3318, %v3357
        %v3366 = vmul.f32 %v3320, %v3358
        %v3367 = vmul.f32 %v3322, %v3359
        %v3368 = vmul.f32 %v3324, %v3360
        %v3369 = vmul.f32 %v3326, %v3361
        %v3370 = vmul.f32 %v3328, %v3362
        %v3371 = vmul.f32 %v3330, %v3363
        %v3372 = vmul.f32 %v3332, %v3364
        %v3373 = vpack.c.bf16 %v3365, %v3365
        %v3374 = vpack.c.bf16 %v3366, %v3366
        %v3375 = vpack.c.bf16 %v3367, %v3367
        %v3376 = vpack.c.bf16 %v3368, %v3368
        %v3377 = vpack.c.bf16 %v3369, %v3369
        %v3378 = vpack.c.bf16 %v3370, %v3370
        %v3379 = vpack.c.bf16 %v3371, %v3371
        %v3380 = vpack.c.bf16 %v3372, %v3372
        %3381 = vrot.lane.b32.xlu0 %v888, 112
        %v3382 = vpop.permute.xlu0 %3381
        %v3384 = vsel %vm967, %v3373, 0
        %v3387 = vsel %vm1436, %v3382, 0
        %3389 = vmatprep.subr.bf16.mxu0 0
        %3390 = vmatpush1.bf16.msra.mxu0 0
        %3391 = vmatprep.subr.bf16.mxu0 0
        %3392 = vmatpush1.bf16.msra.mxu0 0
        %3393 = vmatprep.subr.bf16.mxu0 0
        %3394 = vmatpush1.bf16.msra.mxu0 0
        %3395 = vmatprep.subr.bf16.mxu0 0
        %3396 = vmatpush1.bf16.msra.mxu0 0
        %3397 = vmatprep.subr.bf16.mxu0 0
        %3398 = vmatpush1.bf16.msra.mxu0 0
        %3399 = vmatprep.subr.bf16.mxu0 0
        %3400 = vmatpush1.bf16.msra.mxu0 0
        %3401 = vmatprep.subr.bf16.mxu0 0
        %3402 = vmatpush1.bf16.msra.mxu0 0
        %3403 = vmatprep.subr.bf16.mxu0 0
        %3404 = vmatpush1.bf16.msra.mxu0 %v3387
        %3405 = vmatprep.subr.bf16.mxu0 0
        %3406 = vmatpush2.bf16.msra.mxu0 0
        %3407 = vmatprep.subr.bf16.mxu0 0
        %3408 = vmatpush2.bf16.msra.mxu0 0
        %3409 = vmatprep.subr.bf16.mxu0 0
        %3410 = vmatpush2.bf16.msra.mxu0 0
        %3411 = vmatprep.subr.bf16.mxu0 0
        %3412 = vmatpush2.bf16.msra.mxu0 0
        %3413 = vmatprep.subr.bf16.mxu0 0
        %3414 = vmatpush2.bf16.msra.mxu0 0
        %3415 = vmatprep.subr.bf16.mxu0 0
        %3416 = vmatpush2.bf16.msra.mxu0 0
        %3417 = vmatprep.subr.bf16.mxu0 0
        %3418 = vmatpush2.bf16.msra.mxu0 0
        %3419 = vmatprep.subr.bf16.mxu0 0
        %3420 = vmatpush2.bf16.msra.mxu0 0
        %3421 = vmatprep.mubr.bf16.mxu0 0
        %3422 = vmatmul.mubr.bf16.gmra.mxu0 %v3384
        %v3423 = vpop.f32.mrf.mxu0
        %v3424 = vadd.f32 0.0, %v3423
        %v3425 = vpop.f32.mrf.mxu0
        %v3426 = vpop.f32.mrf.mxu0
        %v3427 = vpop.f32.mrf.mxu0
        %3428 = vdwg.mxu0
        %3429 = vrot.lane.b32.xlu0 %v889, 112
        %v3430 = vpop.permute.xlu0 %3429
        %v3432 = vsel %vm967, %v3374, 0
        %v3435 = vsel %vm1436, %v3430, 0
        %3437 = vmatprep.subr.bf16.mxu0 0
        %3438 = vmatpush1.bf16.msra.mxu0 0
        %3439 = vmatprep.subr.bf16.mxu0 0
        %3440 = vmatpush1.bf16.msra.mxu0 0
        %3441 = vmatprep.subr.bf16.mxu0 0
        %3442 = vmatpush1.bf16.msra.mxu0 0
        %3443 = vmatprep.subr.bf16.mxu0 0
        %3444 = vmatpush1.bf16.msra.mxu0 0
        %3445 = vmatprep.subr.bf16.mxu0 0
        %3446 = vmatpush1.bf16.msra.mxu0 0
        %3447 = vmatprep.subr.bf16.mxu0 0
        %3448 = vmatpush1.bf16.msra.mxu0 0
        %3449 = vmatprep.subr.bf16.mxu0 0
        %3450 = vmatpush1.bf16.msra.mxu0 0
        %3451 = vmatprep.subr.bf16.mxu0 0
        %3452 = vmatpush1.bf16.msra.mxu0 %v3435
        %3453 = vmatprep.subr.bf16.mxu0 0
        %3454 = vmatpush2.bf16.msra.mxu0 0
        %3455 = vmatprep.subr.bf16.mxu0 0
        %3456 = vmatpush2.bf16.msra.mxu0 0
        %3457 = vmatprep.subr.bf16.mxu0 0
        %3458 = vmatpush2.bf16.msra.mxu0 0
        %3459 = vmatprep.subr.bf16.mxu0 0
        %3460 = vmatpush2.bf16.msra.mxu0 0
        %3461 = vmatprep.subr.bf16.mxu0 0
        %3462 = vmatpush2.bf16.msra.mxu0 0
        %3463 = vmatprep.subr.bf16.mxu0 0
        %3464 = vmatpush2.bf16.msra.mxu0 0
        %3465 = vmatprep.subr.bf16.mxu0 0
        %3466 = vmatpush2.bf16.msra.mxu0 0
        %3467 = vmatprep.subr.bf16.mxu0 0
        %3468 = vmatpush2.bf16.msra.mxu0 0
        %3469 = vmatprep.mubr.bf16.mxu0 0
        %3470 = vmatmul.mubr.bf16.gmra.mxu0 %v3432
        %v3471 = vpop.f32.mrf.mxu0
        %v3472 = vadd.f32 0.0, %v3471
        %v3473 = vpop.f32.mrf.mxu0
        %v3474 = vpop.f32.mrf.mxu0
        %v3475 = vpop.f32.mrf.mxu0
        %3476 = vdwg.mxu0
        %3477 = vrot.lane.b32.xlu0 %v890, 112
        %v3478 = vpop.permute.xlu0 %3477
        %v3480 = vsel %vm967, %v3375, 0
        %v3483 = vsel %vm1436, %v3478, 0
        %3485 = vmatprep.subr.bf16.mxu0 0
        %3486 = vmatpush1.bf16.msra.mxu0 0
        %3487 = vmatprep.subr.bf16.mxu0 0
        %3488 = vmatpush1.bf16.msra.mxu0 0
        %3489 = vmatprep.subr.bf16.mxu0 0
        %3490 = vmatpush1.bf16.msra.mxu0 0
        %3491 = vmatprep.subr.bf16.mxu0 0
        %3492 = vmatpush1.bf16.msra.mxu0 0
        %3493 = vmatprep.subr.bf16.mxu0 0
        %3494 = vmatpush1.bf16.msra.mxu0 0
        %3495 = vmatprep.subr.bf16.mxu0 0
        %3496 = vmatpush1.bf16.msra.mxu0 0
        %3497 = vmatprep.subr.bf16.mxu0 0
        %3498 = vmatpush1.bf16.msra.mxu0 0
        %3499 = vmatprep.subr.bf16.mxu0 0
        %3500 = vmatpush1.bf16.msra.mxu0 %v3483
        %3501 = vmatprep.subr.bf16.mxu0 0
        %3502 = vmatpush2.bf16.msra.mxu0 0
        %3503 = vmatprep.subr.bf16.mxu0 0
        %3504 = vmatpush2.bf16.msra.mxu0 0
        %3505 = vmatprep.subr.bf16.mxu0 0
        %3506 = vmatpush2.bf16.msra.mxu0 0
        %3507 = vmatprep.subr.bf16.mxu0 0
        %3508 = vmatpush2.bf16.msra.mxu0 0
        %3509 = vmatprep.subr.bf16.mxu0 0
        %3510 = vmatpush2.bf16.msra.mxu0 0
        %3511 = vmatprep.subr.bf16.mxu0 0
        %3512 = vmatpush2.bf16.msra.mxu0 0
        %3513 = vmatprep.subr.bf16.mxu0 0
        %3514 = vmatpush2.bf16.msra.mxu0 0
        %3515 = vmatprep.subr.bf16.mxu0 0
        %3516 = vmatpush2.bf16.msra.mxu0 0
        %3517 = vmatprep.mubr.bf16.mxu0 0
        %3518 = vmatmul.mubr.bf16.gmra.mxu0 %v3480
        %v3519 = vpop.f32.mrf.mxu0
        %v3520 = vadd.f32 0.0, %v3519
        %v3521 = vpop.f32.mrf.mxu0
        %v3522 = vpop.f32.mrf.mxu0
        %v3523 = vpop.f32.mrf.mxu0
        %3524 = vdwg.mxu0
        %3525 = vrot.lane.b32.xlu0 %v891, 112
        %v3526 = vpop.permute.xlu0 %3525
        %v3528 = vsel %vm967, %v3376, 0
        %v3531 = vsel %vm1436, %v3526, 0
        %3533 = vmatprep.subr.bf16.mxu0 0
        %3534 = vmatpush1.bf16.msra.mxu0 0
        %3535 = vmatprep.subr.bf16.mxu0 0
        %3536 = vmatpush1.bf16.msra.mxu0 0
        %3537 = vmatprep.subr.bf16.mxu0 0
        %3538 = vmatpush1.bf16.msra.mxu0 0
        %3539 = vmatprep.subr.bf16.mxu0 0
        %3540 = vmatpush1.bf16.msra.mxu0 0
        %3541 = vmatprep.subr.bf16.mxu0 0
        %3542 = vmatpush1.bf16.msra.mxu0 0
        %3543 = vmatprep.subr.bf16.mxu0 0
        %3544 = vmatpush1.bf16.msra.mxu0 0
        %3545 = vmatprep.subr.bf16.mxu0 0
        %3546 = vmatpush1.bf16.msra.mxu0 0
        %3547 = vmatprep.subr.bf16.mxu0 0
        %3548 = vmatpush1.bf16.msra.mxu0 %v3531
        %3549 = vmatprep.subr.bf16.mxu0 0
        %3550 = vmatpush2.bf16.msra.mxu0 0
        %3551 = vmatprep.subr.bf16.mxu0 0
        %3552 = vmatpush2.bf16.msra.mxu0 0
        %3553 = vmatprep.subr.bf16.mxu0 0
        %3554 = vmatpush2.bf16.msra.mxu0 0
        %3555 = vmatprep.subr.bf16.mxu0 0
        %3556 = vmatpush2.bf16.msra.mxu0 0
        %3557 = vmatprep.subr.bf16.mxu0 0
        %3558 = vmatpush2.bf16.msra.mxu0 0
        %3559 = vmatprep.subr.bf16.mxu0 0
        %3560 = vmatpush2.bf16.msra.mxu0 0
        %3561 = vmatprep.subr.bf16.mxu0 0
        %3562 = vmatpush2.bf16.msra.mxu0 0
        %3563 = vmatprep.subr.bf16.mxu0 0
        %3564 = vmatpush2.bf16.msra.mxu0 0
        %3565 = vmatprep.mubr.bf16.mxu0 0
        %3566 = vmatmul.mubr.bf16.gmra.mxu0 %v3528
        %v3567 = vpop.f32.mrf.mxu0
        %v3568 = vadd.f32 0.0, %v3567
        %v3569 = vpop.f32.mrf.mxu0
        %v3570 = vpop.f32.mrf.mxu0
        %v3571 = vpop.f32.mrf.mxu0
        %3572 = vdwg.mxu0
        %3573 = vrot.lane.b32.xlu0 %v892, 112
        %v3574 = vpop.permute.xlu0 %3573
        %v3576 = vsel %vm967, %v3377, 0
        %v3579 = vsel %vm1436, %v3574, 0
        %3581 = vmatprep.subr.bf16.mxu0 0
        %3582 = vmatpush1.bf16.msra.mxu0 0
        %3583 = vmatprep.subr.bf16.mxu0 0
        %3584 = vmatpush1.bf16.msra.mxu0 0
        %3585 = vmatprep.subr.bf16.mxu0 0
        %3586 = vmatpush1.bf16.msra.mxu0 0
        %3587 = vmatprep.subr.bf16.mxu0 0
        %3588 = vmatpush1.bf16.msra.mxu0 0
        %3589 = vmatprep.subr.bf16.mxu0 0
        %3590 = vmatpush1.bf16.msra.mxu0 0
        %3591 = vmatprep.subr.bf16.mxu0 0
        %3592 = vmatpush1.bf16.msra.mxu0 0
        %3593 = vmatprep.subr.bf16.mxu0 0
        %3594 = vmatpush1.bf16.msra.mxu0 0
        %3595 = vmatprep.subr.bf16.mxu0 0
        %3596 = vmatpush1.bf16.msra.mxu0 %v3579
        %3597 = vmatprep.subr.bf16.mxu0 0
        %3598 = vmatpush2.bf16.msra.mxu0 0
        %3599 = vmatprep.subr.bf16.mxu0 0
        %3600 = vmatpush2.bf16.msra.mxu0 0
        %3601 = vmatprep.subr.bf16.mxu0 0
        %3602 = vmatpush2.bf16.msra.mxu0 0
        %3603 = vmatprep.subr.bf16.mxu0 0
        %3604 = vmatpush2.bf16.msra.mxu0 0
        %3605 = vmatprep.subr.bf16.mxu0 0
        %3606 = vmatpush2.bf16.msra.mxu0 0
        %3607 = vmatprep.subr.bf16.mxu0 0
        %3608 = vmatpush2.bf16.msra.mxu0 0
        %3609 = vmatprep.subr.bf16.mxu0 0
        %3610 = vmatpush2.bf16.msra.mxu0 0
        %3611 = vmatprep.subr.bf16.mxu0 0
        %3612 = vmatpush2.bf16.msra.mxu0 0
        %3613 = vmatprep.mubr.bf16.mxu0 0
        %3614 = vmatmul.mubr.bf16.gmra.mxu0 %v3576
        %v3615 = vpop.f32.mrf.mxu0
        %v3616 = vadd.f32 0.0, %v3615
        %v3617 = vpop.f32.mrf.mxu0
        %v3618 = vpop.f32.mrf.mxu0
        %v3619 = vpop.f32.mrf.mxu0
        %3620 = vdwg.mxu0
        %3621 = vrot.lane.b32.xlu0 %v893, 112
        %v3622 = vpop.permute.xlu0 %3621
        %v3624 = vsel %vm967, %v3378, 0
        %v3627 = vsel %vm1436, %v3622, 0
        %3629 = vmatprep.subr.bf16.mxu0 0
        %3630 = vmatpush1.bf16.msra.mxu0 0
        %3631 = vmatprep.subr.bf16.mxu0 0
        %3632 = vmatpush1.bf16.msra.mxu0 0
        %3633 = vmatprep.subr.bf16.mxu0 0
        %3634 = vmatpush1.bf16.msra.mxu0 0
        %3635 = vmatprep.subr.bf16.mxu0 0
        %3636 = vmatpush1.bf16.msra.mxu0 0
        %3637 = vmatprep.subr.bf16.mxu0 0
        %3638 = vmatpush1.bf16.msra.mxu0 0
        %3639 = vmatprep.subr.bf16.mxu0 0
        %3640 = vmatpush1.bf16.msra.mxu0 0
        %3641 = vmatprep.subr.bf16.mxu0 0
        %3642 = vmatpush1.bf16.msra.mxu0 0
        %3643 = vmatprep.subr.bf16.mxu0 0
        %3644 = vmatpush1.bf16.msra.mxu0 %v3627
        %3645 = vmatprep.subr.bf16.mxu0 0
        %3646 = vmatpush2.bf16.msra.mxu0 0
        %3647 = vmatprep.subr.bf16.mxu0 0
        %3648 = vmatpush2.bf16.msra.mxu0 0
        %3649 = vmatprep.subr.bf16.mxu0 0
        %3650 = vmatpush2.bf16.msra.mxu0 0
        %3651 = vmatprep.subr.bf16.mxu0 0
        %3652 = vmatpush2.bf16.msra.mxu0 0
        %3653 = vmatprep.subr.bf16.mxu0 0
        %3654 = vmatpush2.bf16.msra.mxu0 0
        %3655 = vmatprep.subr.bf16.mxu0 0
        %3656 = vmatpush2.bf16.msra.mxu0 0
        %3657 = vmatprep.subr.bf16.mxu0 0
        %3658 = vmatpush2.bf16.msra.mxu0 0
        %3659 = vmatprep.subr.bf16.mxu0 0
        %3660 = vmatpush2.bf16.msra.mxu0 0
        %3661 = vmatprep.mubr.bf16.mxu0 0
        %3662 = vmatmul.mubr.bf16.gmra.mxu0 %v3624
        %v3663 = vpop.f32.mrf.mxu0
        %v3664 = vadd.f32 0.0, %v3663
        %v3665 = vpop.f32.mrf.mxu0
        %v3666 = vpop.f32.mrf.mxu0
        %v3667 = vpop.f32.mrf.mxu0
        %3668 = vdwg.mxu0
        %3669 = vrot.lane.b32.xlu0 %v894, 112
        %v3670 = vpop.permute.xlu0 %3669
        %v3672 = vsel %vm967, %v3379, 0
        %v3675 = vsel %vm1436, %v3670, 0
        %3677 = vmatprep.subr.bf16.mxu0 0
        %3678 = vmatpush1.bf16.msra.mxu0 0
        %3679 = vmatprep.subr.bf16.mxu0 0
        %3680 = vmatpush1.bf16.msra.mxu0 0
        %3681 = vmatprep.subr.bf16.mxu0 0
        %3682 = vmatpush1.bf16.msra.mxu0 0
        %3683 = vmatprep.subr.bf16.mxu0 0
        %3684 = vmatpush1.bf16.msra.mxu0 0
        %3685 = vmatprep.subr.bf16.mxu0 0
        %3686 = vmatpush1.bf16.msra.mxu0 0
        %3687 = vmatprep.subr.bf16.mxu0 0
        %3688 = vmatpush1.bf16.msra.mxu0 0
        %3689 = vmatprep.subr.bf16.mxu0 0
        %3690 = vmatpush1.bf16.msra.mxu0 0
        %3691 = vmatprep.subr.bf16.mxu0 0
        %3692 = vmatpush1.bf16.msra.mxu0 %v3675
        %3693 = vmatprep.subr.bf16.mxu0 0
        %3694 = vmatpush2.bf16.msra.mxu0 0
        %3695 = vmatprep.subr.bf16.mxu0 0
        %3696 = vmatpush2.bf16.msra.mxu0 0
        %3697 = vmatprep.subr.bf16.mxu0 0
        %3698 = vmatpush2.bf16.msra.mxu0 0
        %3699 = vmatprep.subr.bf16.mxu0 0
        %3700 = vmatpush2.bf16.msra.mxu0 0
        %3701 = vmatprep.subr.bf16.mxu0 0
        %3702 = vmatpush2.bf16.msra.mxu0 0
        %3703 = vmatprep.subr.bf16.mxu0 0
        %3704 = vmatpush2.bf16.msra.mxu0 0
        %3705 = vmatprep.subr.bf16.mxu0 0
        %3706 = vmatpush2.bf16.msra.mxu0 0
        %3707 = vmatprep.subr.bf16.mxu0 0
        %3708 = vmatpush2.bf16.msra.mxu0 0
        %3709 = vmatprep.mubr.bf16.mxu0 0
        %3710 = vmatmul.mubr.bf16.gmra.mxu0 %v3672
        %v3711 = vpop.f32.mrf.mxu0
        %v3712 = vadd.f32 0.0, %v3711
        %v3713 = vpop.f32.mrf.mxu0
        %v3714 = vpop.f32.mrf.mxu0
        %v3715 = vpop.f32.mrf.mxu0
        %3716 = vdwg.mxu0
        %3717 = vrot.lane.b32.xlu0 %v895, 112
        %v3718 = vpop.permute.xlu0 %3717
        %v3720 = vsel %vm967, %v3380, 0
        %v3723 = vsel %vm1436, %v3718, 0
        %3725 = vmatprep.subr.bf16.mxu0 0
        %3726 = vmatpush1.bf16.msra.mxu0 0
        %3727 = vmatprep.subr.bf16.mxu0 0
        %3728 = vmatpush1.bf16.msra.mxu0 0
        %3729 = vmatprep.subr.bf16.mxu0 0
        %3730 = vmatpush1.bf16.msra.mxu0 0
        %3731 = vmatprep.subr.bf16.mxu0 0
        %3732 = vmatpush1.bf16.msra.mxu0 0
        %3733 = vmatprep.subr.bf16.mxu0 0
        %3734 = vmatpush1.bf16.msra.mxu0 0
        %3735 = vmatprep.subr.bf16.mxu0 0
        %3736 = vmatpush1.bf16.msra.mxu0 0
        %3737 = vmatprep.subr.bf16.mxu0 0
        %3738 = vmatpush1.bf16.msra.mxu0 0
        %3739 = vmatprep.subr.bf16.mxu0 0
        %3740 = vmatpush1.bf16.msra.mxu0 %v3723
        %3741 = vmatprep.subr.bf16.mxu0 0
        %3742 = vmatpush2.bf16.msra.mxu0 0
        %3743 = vmatprep.subr.bf16.mxu0 0
        %3744 = vmatpush2.bf16.msra.mxu0 0
        %3745 = vmatprep.subr.bf16.mxu0 0
        %3746 = vmatpush2.bf16.msra.mxu0 0
        %3747 = vmatprep.subr.bf16.mxu0 0
        %3748 = vmatpush2.bf16.msra.mxu0 0
        %3749 = vmatprep.subr.bf16.mxu0 0
        %3750 = vmatpush2.bf16.msra.mxu0 0
        %3751 = vmatprep.subr.bf16.mxu0 0
        %3752 = vmatpush2.bf16.msra.mxu0 0
        %3753 = vmatprep.subr.bf16.mxu0 0
        %3754 = vmatpush2.bf16.msra.mxu0 0
        %3755 = vmatprep.subr.bf16.mxu0 0
        %3756 = vmatpush2.bf16.msra.mxu0 0
        %3757 = vmatprep.mubr.bf16.mxu0 0
        %3758 = vmatmul.mubr.bf16.gmra.mxu0 %v3720
        %v3759 = vpop.f32.mrf.mxu0
        %v3760 = vadd.f32 0.0, %v3759
        %v3761 = vpop.f32.mrf.mxu0
        %v3762 = vpop.f32.mrf.mxu0
        %v3763 = vpop.f32.mrf.mxu0
        %3764 = vdwg.mxu0
        %v3765 = vpack.c.bf16 %v3424, %v3424
        %v3766 = vpack.c.bf16 %v3472, %v3472
        %v3767 = vpack.c.bf16 %v3520, %v3520
        %v3768 = vpack.c.bf16 %v3568, %v3568
        %v3769 = vpack.c.bf16 %v3616, %v3616
        %v3770 = vpack.c.bf16 %v3664, %v3664
        %v3771 = vpack.c.bf16 %v3712, %v3712
        %v3772 = vpack.c.bf16 %v3760, %v3760
        %v3781 = vunpack.c.l.b16 %v3765
        %v3782 = vunpack.c.l.b16 %v3766
        %v3783 = vunpack.c.l.b16 %v3767
        %v3784 = vunpack.c.l.b16 %v3768
        %v3785 = vunpack.c.l.b16 %v3769
        %v3786 = vunpack.c.l.b16 %v3770
        %v3787 = vunpack.c.l.b16 %v3771
        %v3788 = vunpack.c.l.b16 %v3772
        %v3789 = vrot.slane %v3782, 7
        %v3790 = vsel %vm1827, %v3789, %v3781
        %v3791 = vrot.slane %v3783, 6
        %v3792 = vsel %vm1830, %v3791, %v3790
        %v3793 = vrot.slane %v3784, 5
        %v3794 = vsel %vm1833, %v3793, %v3792
        %v3795 = vrot.slane %v3785, 4
        %v3796 = vsel %vm1836, %v3795, %v3794
        %v3797 = vrot.slane %v3786, 3
        %v3798 = vsel %vm1839, %v3797, %v3796
        %v3799 = vrot.slane %v3787, 2
        %v3800 = vsel %vm1842, %v3799, %v3798
        %v3801 = vrot.slane %v3788, 1
        %v3802 = vsel %vm1845, %v3801, %v3800
        %v3803 = vpack.c.b16 %v3802, %v3802
        %v3805 = vsel %vm967, %v3803, 0
        %v3808 = vsel %vm1436, %v957, 0
        %3810 = vmatprep.subr.bf16.mxu0 0
        %3811 = vmatpush1.bf16.msra.mxu0 0
        %3812 = vmatprep.subr.bf16.mxu0 0
        %3813 = vmatpush1.bf16.msra.mxu0 0
        %3814 = vmatprep.subr.bf16.mxu0 0
        %3815 = vmatpush1.bf16.msra.mxu0 0
        %3816 = vmatprep.subr.bf16.mxu0 0
        %3817 = vmatpush1.bf16.msra.mxu0 0
        %3818 = vmatprep.subr.bf16.mxu0 0
        %3819 = vmatpush1.bf16.msra.mxu0 0
        %3820 = vmatprep.subr.bf16.mxu0 0
        %3821 = vmatpush1.bf16.msra.mxu0 0
        %3822 = vmatprep.subr.bf16.mxu0 0
        %3823 = vmatpush1.bf16.msra.mxu0 0
        %3824 = vmatprep.subr.bf16.mxu0 0
        %3825 = vmatpush1.bf16.msra.mxu0 %v3808
        %3826 = vmatprep.subr.bf16.mxu0 0
        %3827 = vmatpush2.bf16.msra.mxu0 0
        %3828 = vmatprep.subr.bf16.mxu0 0
        %3829 = vmatpush2.bf16.msra.mxu0 0
        %3830 = vmatprep.subr.bf16.mxu0 0
        %3831 = vmatpush2.bf16.msra.mxu0 0
        %3832 = vmatprep.subr.bf16.mxu0 0
        %3833 = vmatpush2.bf16.msra.mxu0 0
        %3834 = vmatprep.subr.bf16.mxu0 0
        %3835 = vmatpush2.bf16.msra.mxu0 0
        %3836 = vmatprep.subr.bf16.mxu0 0
        %3837 = vmatpush2.bf16.msra.mxu0 0
        %3838 = vmatprep.subr.bf16.mxu0 0
        %3839 = vmatpush2.bf16.msra.mxu0 0
        %3840 = vmatprep.subr.bf16.mxu0 0
        %3841 = vmatpush2.bf16.msra.mxu0 0
        %3842 = vmatprep.mubr.bf16.mxu0 0
        %3843 = vmatmul.mubr.bf16.gmra.mxu0 %v3805
        %v3844 = vpop.f32.mrf.mxu0
        %v3845 = vadd.f32 0.0, %v3844
        %v3846 = vpop.f32.mrf.mxu0
        %v3847 = vpop.f32.mrf.mxu0
        %v3848 = vpop.f32.mrf.mxu0
        %3849 = vdwg.mxu0
        %v3850 = vadd.f32 %v2884, %v3845
        %3851 = vrot.lane.b32.xlu0 %v872, 104
        %v3852 = vpop.permute.xlu0 %3851
        %3853 = vrot.lane.b32.xlu0 %v880, 104
        %v3854 = vpop.permute.xlu0 %3853
        %v3856 = vsel %vm967, %v3852, 0
        %v3859 = vsel %vm967, %v3854, 0
        %3861 = vmatprep.subr.bf16.mxu0 0
        %3862 = vmatpush1.bf16.xpose.msra.mxu0 0
        %3863 = vmatprep.subr.bf16.mxu0 0
        %3864 = vmatpush1.bf16.xpose.msra.mxu0 0
        %3865 = vmatprep.subr.bf16.mxu0 0
        %3866 = vmatpush1.bf16.xpose.msra.mxu0 0
        %3867 = vmatprep.subr.bf16.mxu0 0
        %3868 = vmatpush1.bf16.xpose.msra.mxu0 0
        %3869 = vmatprep.subr.bf16.mxu0 0
        %3870 = vmatpush1.bf16.xpose.msra.mxu0 0
        %3871 = vmatprep.subr.bf16.mxu0 0
        %3872 = vmatpush1.bf16.xpose.msra.mxu0 0
        %3873 = vmatprep.subr.bf16.mxu0 0
        %3874 = vmatpush1.bf16.xpose.msra.mxu0 0
        %3875 = vmatprep.subr.bf16.mxu0 0
        %3876 = vmatpush1.bf16.xpose.msra.mxu0 %v3859
        %3877 = vmatprep.subr.bf16.mxu0 0
        %3878 = vmatpush2.bf16.xpose.msra.mxu0 0
        %3879 = vmatprep.subr.bf16.mxu0 0
        %3880 = vmatpush2.bf16.xpose.msra.mxu0 0
        %3881 = vmatprep.subr.bf16.mxu0 0
        %3882 = vmatpush2.bf16.xpose.msra.mxu0 0
        %3883 = vmatprep.subr.bf16.mxu0 0
        %3884 = vmatpush2.bf16.xpose.msra.mxu0 0
        %3885 = vmatprep.subr.bf16.mxu0 0
        %3886 = vmatpush2.bf16.xpose.msra.mxu0 0
        %3887 = vmatprep.subr.bf16.mxu0 0
        %3888 = vmatpush2.bf16.xpose.msra.mxu0 0
        %3889 = vmatprep.subr.bf16.mxu0 0
        %3890 = vmatpush2.bf16.xpose.msra.mxu0 0
        %3891 = vmatprep.subr.bf16.mxu0 0
        %3892 = vmatpush2.bf16.xpose.msra.mxu0 0
        %3893 = vmatprep.mubr.bf16.mxu0 0
        %3894 = vmatmul.mubr.bf16.gmra.mxu0 %v3856
        %v3895 = vpop.f32.mrf.mxu0
        %v3896 = vadd.f32 %v921, %v3895
        %v3897 = vpop.f32.mrf.mxu0
        %v3898 = vpop.f32.mrf.mxu0
        %v3899 = vpop.f32.mrf.mxu0
        %3900 = vdwg.mxu0
        %3901 = vrot.lane.b32.xlu0 %v873, 104
        %v3902 = vpop.permute.xlu0 %3901
        %3903 = vrot.lane.b32.xlu0 %v881, 104
        %v3904 = vpop.permute.xlu0 %3903
        %v3906 = vsel %vm967, %v3902, 0
        %v3909 = vsel %vm967, %v3904, 0
        %3911 = vmatprep.subr.bf16.mxu0 0
        %3912 = vmatpush1.bf16.xpose.msra.mxu0 0
        %3913 = vmatprep.subr.bf16.mxu0 0
        %3914 = vmatpush1.bf16.xpose.msra.mxu0 0
        %3915 = vmatprep.subr.bf16.mxu0 0
        %3916 = vmatpush1.bf16.xpose.msra.mxu0 0
        %3917 = vmatprep.subr.bf16.mxu0 0
        %3918 = vmatpush1.bf16.xpose.msra.mxu0 0
        %3919 = vmatprep.subr.bf16.mxu0 0
        %3920 = vmatpush1.bf16.xpose.msra.mxu0 0
        %3921 = vmatprep.subr.bf16.mxu0 0
        %3922 = vmatpush1.bf16.xpose.msra.mxu0 0
        %3923 = vmatprep.subr.bf16.mxu0 0
        %3924 = vmatpush1.bf16.xpose.msra.mxu0 0
        %3925 = vmatprep.subr.bf16.mxu0 0
        %3926 = vmatpush1.bf16.xpose.msra.mxu0 %v3909
        %3927 = vmatprep.subr.bf16.mxu0 0
        %3928 = vmatpush2.bf16.xpose.msra.mxu0 0
        %3929 = vmatprep.subr.bf16.mxu0 0
        %3930 = vmatpush2.bf16.xpose.msra.mxu0 0
        %3931 = vmatprep.subr.bf16.mxu0 0
        %3932 = vmatpush2.bf16.xpose.msra.mxu0 0
        %3933 = vmatprep.subr.bf16.mxu0 0
        %3934 = vmatpush2.bf16.xpose.msra.mxu0 0
        %3935 = vmatprep.subr.bf16.mxu0 0
        %3936 = vmatpush2.bf16.xpose.msra.mxu0 0
        %3937 = vmatprep.subr.bf16.mxu0 0
        %3938 = vmatpush2.bf16.xpose.msra.mxu0 0
        %3939 = vmatprep.subr.bf16.mxu0 0
        %3940 = vmatpush2.bf16.xpose.msra.mxu0 0
        %3941 = vmatprep.subr.bf16.mxu0 0
        %3942 = vmatpush2.bf16.xpose.msra.mxu0 0
        %3943 = vmatprep.mubr.bf16.mxu0 0
        %3944 = vmatmul.mubr.bf16.gmra.mxu0 %v3906
        %v3945 = vpop.f32.mrf.mxu0
        %v3946 = vadd.f32 %v935, %v3945
        %v3947 = vpop.f32.mrf.mxu0
        %v3948 = vpop.f32.mrf.mxu0
        %v3949 = vpop.f32.mrf.mxu0
        %3950 = vdwg.mxu0
        %3951 = vrot.lane.b32.xlu0 %v874, 104
        %v3952 = vpop.permute.xlu0 %3951
        %3953 = vrot.lane.b32.xlu0 %v882, 104
        %v3954 = vpop.permute.xlu0 %3953
        %v3956 = vsel %vm967, %v3952, 0
        %v3959 = vsel %vm967, %v3954, 0
        %3961 = vmatprep.subr.bf16.mxu0 0
        %3962 = vmatpush1.bf16.xpose.msra.mxu0 0
        %3963 = vmatprep.subr.bf16.mxu0 0
        %3964 = vmatpush1.bf16.xpose.msra.mxu0 0
        %3965 = vmatprep.subr.bf16.mxu0 0
        %3966 = vmatpush1.bf16.xpose.msra.mxu0 0
        %3967 = vmatprep.subr.bf16.mxu0 0
        %3968 = vmatpush1.bf16.xpose.msra.mxu0 0
        %3969 = vmatprep.subr.bf16.mxu0 0
        %3970 = vmatpush1.bf16.xpose.msra.mxu0 0
        %3971 = vmatprep.subr.bf16.mxu0 0
        %3972 = vmatpush1.bf16.xpose.msra.mxu0 0
        %3973 = vmatprep.subr.bf16.mxu0 0
        %3974 = vmatpush1.bf16.xpose.msra.mxu0 0
        %3975 = vmatprep.subr.bf16.mxu0 0
        %3976 = vmatpush1.bf16.xpose.msra.mxu0 %v3959
        %3977 = vmatprep.subr.bf16.mxu0 0
        %3978 = vmatpush2.bf16.xpose.msra.mxu0 0
        %3979 = vmatprep.subr.bf16.mxu0 0
        %3980 = vmatpush2.bf16.xpose.msra.mxu0 0
        %3981 = vmatprep.subr.bf16.mxu0 0
        %3982 = vmatpush2.bf16.xpose.msra.mxu0 0
        %3983 = vmatprep.subr.bf16.mxu0 0
        %3984 = vmatpush2.bf16.xpose.msra.mxu0 0
        %3985 = vmatprep.subr.bf16.mxu0 0
        %3986 = vmatpush2.bf16.xpose.msra.mxu0 0
        %3987 = vmatprep.subr.bf16.mxu0 0
        %3988 = vmatpush2.bf16.xpose.msra.mxu0 0
        %3989 = vmatprep.subr.bf16.mxu0 0
        %3990 = vmatpush2.bf16.xpose.msra.mxu0 0
        %3991 = vmatprep.subr.bf16.mxu0 0
        %3992 = vmatpush2.bf16.xpose.msra.mxu0 0
        %3993 = vmatprep.mubr.bf16.mxu0 0
        %3994 = vmatmul.mubr.bf16.gmra.mxu0 %v3956
        %v3995 = vpop.f32.mrf.mxu0
        %v3996 = vadd.f32 %v943, %v3995
        %v3997 = vpop.f32.mrf.mxu0
        %v3998 = vpop.f32.mrf.mxu0
        %v3999 = vpop.f32.mrf.mxu0
        %4000 = vdwg.mxu0
        %4001 = vrot.lane.b32.xlu0 %v875, 104
        %v4002 = vpop.permute.xlu0 %4001
        %4003 = vrot.lane.b32.xlu0 %v883, 104
        %v4004 = vpop.permute.xlu0 %4003
        %v4006 = vsel %vm967, %v4002, 0
        %v4009 = vsel %vm967, %v4004, 0
        %4011 = vmatprep.subr.bf16.mxu0 0
        %4012 = vmatpush1.bf16.xpose.msra.mxu0 0
        %4013 = vmatprep.subr.bf16.mxu0 0
        %4014 = vmatpush1.bf16.xpose.msra.mxu0 0
        %4015 = vmatprep.subr.bf16.mxu0 0
        %4016 = vmatpush1.bf16.xpose.msra.mxu0 0
        %4017 = vmatprep.subr.bf16.mxu0 0
        %4018 = vmatpush1.bf16.xpose.msra.mxu0 0
        %4019 = vmatprep.subr.bf16.mxu0 0
        %4020 = vmatpush1.bf16.xpose.msra.mxu0 0
        %4021 = vmatprep.subr.bf16.mxu0 0
        %4022 = vmatpush1.bf16.xpose.msra.mxu0 0
        %4023 = vmatprep.subr.bf16.mxu0 0
        %4024 = vmatpush1.bf16.xpose.msra.mxu0 0
        %4025 = vmatprep.subr.bf16.mxu0 0
        %4026 = vmatpush1.bf16.xpose.msra.mxu0 %v4009
        %4027 = vmatprep.subr.bf16.mxu0 0
        %4028 = vmatpush2.bf16.xpose.msra.mxu0 0
        %4029 = vmatprep.subr.bf16.mxu0 0
        %4030 = vmatpush2.bf16.xpose.msra.mxu0 0
        %4031 = vmatprep.subr.bf16.mxu0 0
        %4032 = vmatpush2.bf16.xpose.msra.mxu0 0
        %4033 = vmatprep.subr.bf16.mxu0 0
        %4034 = vmatpush2.bf16.xpose.msra.mxu0 0
        %4035 = vmatprep.subr.bf16.mxu0 0
        %4036 = vmatpush2.bf16.xpose.msra.mxu0 0
        %4037 = vmatprep.subr.bf16.mxu0 0
        %4038 = vmatpush2.bf16.xpose.msra.mxu0 0
        %4039 = vmatprep.subr.bf16.mxu0 0
        %4040 = vmatpush2.bf16.xpose.msra.mxu0 0
        %4041 = vmatprep.subr.bf16.mxu0 0
        %4042 = vmatpush2.bf16.xpose.msra.mxu0 0
        %4043 = vmatprep.mubr.bf16.mxu0 0
        %4044 = vmatmul.mubr.bf16.gmra.mxu0 %v4006
        %v4045 = vpop.f32.mrf.mxu0
        %v4046 = vadd.f32 %v945, %v4045
        %v4047 = vpop.f32.mrf.mxu0
        %v4048 = vpop.f32.mrf.mxu0
        %v4049 = vpop.f32.mrf.mxu0
        %4050 = vdwg.mxu0
        %4051 = vrot.lane.b32.xlu0 %v876, 104
        %v4052 = vpop.permute.xlu0 %4051
        %4053 = vrot.lane.b32.xlu0 %v884, 104
        %v4054 = vpop.permute.xlu0 %4053
        %v4056 = vsel %vm967, %v4052, 0
        %v4059 = vsel %vm967, %v4054, 0
        %4061 = vmatprep.subr.bf16.mxu0 0
        %4062 = vmatpush1.bf16.xpose.msra.mxu0 0
        %4063 = vmatprep.subr.bf16.mxu0 0
        %4064 = vmatpush1.bf16.xpose.msra.mxu0 0
        %4065 = vmatprep.subr.bf16.mxu0 0
        %4066 = vmatpush1.bf16.xpose.msra.mxu0 0
        %4067 = vmatprep.subr.bf16.mxu0 0
        %4068 = vmatpush1.bf16.xpose.msra.mxu0 0
        %4069 = vmatprep.subr.bf16.mxu0 0
        %4070 = vmatpush1.bf16.xpose.msra.mxu0 0
        %4071 = vmatprep.subr.bf16.mxu0 0
        %4072 = vmatpush1.bf16.xpose.msra.mxu0 0
        %4073 = vmatprep.subr.bf16.mxu0 0
        %4074 = vmatpush1.bf16.xpose.msra.mxu0 0
        %4075 = vmatprep.subr.bf16.mxu0 0
        %4076 = vmatpush1.bf16.xpose.msra.mxu0 %v4059
        %4077 = vmatprep.subr.bf16.mxu0 0
        %4078 = vmatpush2.bf16.xpose.msra.mxu0 0
        %4079 = vmatprep.subr.bf16.mxu0 0
        %4080 = vmatpush2.bf16.xpose.msra.mxu0 0
        %4081 = vmatprep.subr.bf16.mxu0 0
        %4082 = vmatpush2.bf16.xpose.msra.mxu0 0
        %4083 = vmatprep.subr.bf16.mxu0 0
        %4084 = vmatpush2.bf16.xpose.msra.mxu0 0
        %4085 = vmatprep.subr.bf16.mxu0 0
        %4086 = vmatpush2.bf16.xpose.msra.mxu0 0
        %4087 = vmatprep.subr.bf16.mxu0 0
        %4088 = vmatpush2.bf16.xpose.msra.mxu0 0
        %4089 = vmatprep.subr.bf16.mxu0 0
        %4090 = vmatpush2.bf16.xpose.msra.mxu0 0
        %4091 = vmatprep.subr.bf16.mxu0 0
        %4092 = vmatpush2.bf16.xpose.msra.mxu0 0
        %4093 = vmatprep.mubr.bf16.mxu0 0
        %4094 = vmatmul.mubr.bf16.gmra.mxu0 %v4056
        %v4095 = vpop.f32.mrf.mxu0
        %v4096 = vadd.f32 %v928, %v4095
        %v4097 = vpop.f32.mrf.mxu0
        %v4098 = vpop.f32.mrf.mxu0
        %v4099 = vpop.f32.mrf.mxu0
        %4100 = vdwg.mxu0
        %4101 = vrot.lane.b32.xlu0 %v877, 104
        %v4102 = vpop.permute.xlu0 %4101
        %4103 = vrot.lane.b32.xlu0 %v885, 104
        %v4104 = vpop.permute.xlu0 %4103
        %v4106 = vsel %vm967, %v4102, 0
        %v4109 = vsel %vm967, %v4104, 0
        %4111 = vmatprep.subr.bf16.mxu0 0
        %4112 = vmatpush1.bf16.xpose.msra.mxu0 0
        %4113 = vmatprep.subr.bf16.mxu0 0
        %4114 = vmatpush1.bf16.xpose.msra.mxu0 0
        %4115 = vmatprep.subr.bf16.mxu0 0
        %4116 = vmatpush1.bf16.xpose.msra.mxu0 0
        %4117 = vmatprep.subr.bf16.mxu0 0
        %4118 = vmatpush1.bf16.xpose.msra.mxu0 0
        %4119 = vmatprep.subr.bf16.mxu0 0
        %4120 = vmatpush1.bf16.xpose.msra.mxu0 0
        %4121 = vmatprep.subr.bf16.mxu0 0
        %4122 = vmatpush1.bf16.xpose.msra.mxu0 0
        %4123 = vmatprep.subr.bf16.mxu0 0
        %4124 = vmatpush1.bf16.xpose.msra.mxu0 0
        %4125 = vmatprep.subr.bf16.mxu0 0
        %4126 = vmatpush1.bf16.xpose.msra.mxu0 %v4109
        %4127 = vmatprep.subr.bf16.mxu0 0
        %4128 = vmatpush2.bf16.xpose.msra.mxu0 0
        %4129 = vmatprep.subr.bf16.mxu0 0
        %4130 = vmatpush2.bf16.xpose.msra.mxu0 0
        %4131 = vmatprep.subr.bf16.mxu0 0
        %4132 = vmatpush2.bf16.xpose.msra.mxu0 0
        %4133 = vmatprep.subr.bf16.mxu0 0
        %4134 = vmatpush2.bf16.xpose.msra.mxu0 0
        %4135 = vmatprep.subr.bf16.mxu0 0
        %4136 = vmatpush2.bf16.xpose.msra.mxu0 0
        %4137 = vmatprep.subr.bf16.mxu0 0
        %4138 = vmatpush2.bf16.xpose.msra.mxu0 0
        %4139 = vmatprep.subr.bf16.mxu0 0
        %4140 = vmatpush2.bf16.xpose.msra.mxu0 0
        %4141 = vmatprep.subr.bf16.mxu0 0
        %4142 = vmatpush2.bf16.xpose.msra.mxu0 0
        %4143 = vmatprep.mubr.bf16.mxu0 0
        %4144 = vmatmul.mubr.bf16.gmra.mxu0 %v4106
        %v4145 = vpop.f32.mrf.mxu0
        %v4146 = vadd.f32 %v942, %v4145
        %v4147 = vpop.f32.mrf.mxu0
        %v4148 = vpop.f32.mrf.mxu0
        %v4149 = vpop.f32.mrf.mxu0
        %4150 = vdwg.mxu0
        %4151 = vrot.lane.b32.xlu0 %v878, 104
        %v4152 = vpop.permute.xlu0 %4151
        %4153 = vrot.lane.b32.xlu0 %v886, 104
        %v4154 = vpop.permute.xlu0 %4153
        %v4156 = vsel %vm967, %v4152, 0
        %v4159 = vsel %vm967, %v4154, 0
        %4161 = vmatprep.subr.bf16.mxu0 0
        %4162 = vmatpush1.bf16.xpose.msra.mxu0 0
        %4163 = vmatprep.subr.bf16.mxu0 0
        %4164 = vmatpush1.bf16.xpose.msra.mxu0 0
        %4165 = vmatprep.subr.bf16.mxu0 0
        %4166 = vmatpush1.bf16.xpose.msra.mxu0 0
        %4167 = vmatprep.subr.bf16.mxu0 0
        %4168 = vmatpush1.bf16.xpose.msra.mxu0 0
        %4169 = vmatprep.subr.bf16.mxu0 0
        %4170 = vmatpush1.bf16.xpose.msra.mxu0 0
        %4171 = vmatprep.subr.bf16.mxu0 0
        %4172 = vmatpush1.bf16.xpose.msra.mxu0 0
        %4173 = vmatprep.subr.bf16.mxu0 0
        %4174 = vmatpush1.bf16.xpose.msra.mxu0 0
        %4175 = vmatprep.subr.bf16.mxu0 0
        %4176 = vmatpush1.bf16.xpose.msra.mxu0 %v4159
        %4177 = vmatprep.subr.bf16.mxu0 0
        %4178 = vmatpush2.bf16.xpose.msra.mxu0 0
        %4179 = vmatprep.subr.bf16.mxu0 0
        %4180 = vmatpush2.bf16.xpose.msra.mxu0 0
        %4181 = vmatprep.subr.bf16.mxu0 0
        %4182 = vmatpush2.bf16.xpose.msra.mxu0 0
        %4183 = vmatprep.subr.bf16.mxu0 0
        %4184 = vmatpush2.bf16.xpose.msra.mxu0 0
        %4185 = vmatprep.subr.bf16.mxu0 0
        %4186 = vmatpush2.bf16.xpose.msra.mxu0 0
        %4187 = vmatprep.subr.bf16.mxu0 0
        %4188 = vmatpush2.bf16.xpose.msra.mxu0 0
        %4189 = vmatprep.subr.bf16.mxu0 0
        %4190 = vmatpush2.bf16.xpose.msra.mxu0 0
        %4191 = vmatprep.subr.bf16.mxu0 0
        %4192 = vmatpush2.bf16.xpose.msra.mxu0 0
        %4193 = vmatprep.mubr.bf16.mxu0 0
        %4194 = vmatmul.mubr.bf16.gmra.mxu0 %v4156
        %v4195 = vpop.f32.mrf.mxu0
        %v4196 = vadd.f32 %v944, %v4195
        %v4197 = vpop.f32.mrf.mxu0
        %v4198 = vpop.f32.mrf.mxu0
        %v4199 = vpop.f32.mrf.mxu0
        %4200 = vdwg.mxu0
        %4201 = vrot.lane.b32.xlu0 %v879, 104
        %v4202 = vpop.permute.xlu0 %4201
        %4203 = vrot.lane.b32.xlu0 %v887, 104
        %v4204 = vpop.permute.xlu0 %4203
        %v4206 = vsel %vm967, %v4202, 0
        %v4209 = vsel %vm967, %v4204, 0
        %4211 = vmatprep.subr.bf16.mxu0 0
        %4212 = vmatpush1.bf16.xpose.msra.mxu0 0
        %4213 = vmatprep.subr.bf16.mxu0 0
        %4214 = vmatpush1.bf16.xpose.msra.mxu0 0
        %4215 = vmatprep.subr.bf16.mxu0 0
        %4216 = vmatpush1.bf16.xpose.msra.mxu0 0
        %4217 = vmatprep.subr.bf16.mxu0 0
        %4218 = vmatpush1.bf16.xpose.msra.mxu0 0
        %4219 = vmatprep.subr.bf16.mxu0 0
        %4220 = vmatpush1.bf16.xpose.msra.mxu0 0
        %4221 = vmatprep.subr.bf16.mxu0 0
        %4222 = vmatpush1.bf16.xpose.msra.mxu0 0
        %4223 = vmatprep.subr.bf16.mxu0 0
        %4224 = vmatpush1.bf16.xpose.msra.mxu0 0
        %4225 = vmatprep.subr.bf16.mxu0 0
        %4226 = vmatpush1.bf16.xpose.msra.mxu0 %v4209
        %4227 = vmatprep.subr.bf16.mxu0 0
        %4228 = vmatpush2.bf16.xpose.msra.mxu0 0
        %4229 = vmatprep.subr.bf16.mxu0 0
        %4230 = vmatpush2.bf16.xpose.msra.mxu0 0
        %4231 = vmatprep.subr.bf16.mxu0 0
        %4232 = vmatpush2.bf16.xpose.msra.mxu0 0
        %4233 = vmatprep.subr.bf16.mxu0 0
        %4234 = vmatpush2.bf16.xpose.msra.mxu0 0
        %4235 = vmatprep.subr.bf16.mxu0 0
        %4236 = vmatpush2.bf16.xpose.msra.mxu0 0
        %4237 = vmatprep.subr.bf16.mxu0 0
        %4238 = vmatpush2.bf16.xpose.msra.mxu0 0
        %4239 = vmatprep.subr.bf16.mxu0 0
        %4240 = vmatpush2.bf16.xpose.msra.mxu0 0
        %4241 = vmatprep.subr.bf16.mxu0 0
        %4242 = vmatpush2.bf16.xpose.msra.mxu0 0
        %4243 = vmatprep.mubr.bf16.mxu0 0
        %4244 = vmatmul.mubr.bf16.gmra.mxu0 %v4206
        %v4245 = vpop.f32.mrf.mxu0
        %v4246 = vadd.f32 %v946, %v4245
        %v4247 = vpop.f32.mrf.mxu0
        %v4248 = vpop.f32.mrf.mxu0
        %v4249 = vpop.f32.mrf.mxu0
        %4250 = vdwg.mxu0
        %v4251 = vsel %vm1336, %v3896, -inf
        %4252 = vmax.xlane.f32.xlu0 %v4251
        %v4253 = vpop.xlane.xlu0 %4252
        %v4254 = vsel %vm1336, %v3946, -inf
        %4255 = vmax.xlane.f32.xlu0 %v4254
        %v4256 = vpop.xlane.xlu0 %4255
        %v4257 = vsel %vm1336, %v3996, -inf
        %4258 = vmax.xlane.f32.xlu0 %v4257
        %v4259 = vpop.xlane.xlu0 %4258
        %v4260 = vsel %vm1336, %v4046, -inf
        %4261 = vmax.xlane.f32.xlu0 %v4260
        %v4262 = vpop.xlane.xlu0 %4261
        %v4263 = vsel %vm1336, %v4096, -inf
        %4264 = vmax.xlane.f32.xlu0 %v4263
        %v4265 = vpop.xlane.xlu0 %4264
        %v4266 = vsel %vm1336, %v4146, -inf
        %4267 = vmax.xlane.f32.xlu0 %v4266
        %v4268 = vpop.xlane.xlu0 %4267
        %v4269 = vsel %vm1336, %v4196, -inf
        %4270 = vmax.xlane.f32.xlu0 %v4269
        %v4271 = vpop.xlane.xlu0 %4270
        %v4272 = vsel %vm1336, %v4246, -inf
        %4273 = vmax.xlane.f32.xlu0 %v4272
        %v4274 = vpop.xlane.xlu0 %4273
        %v4275 = vsub.f32 %v3896, %v4253
        %v4276 = vsub.f32 %v3946, %v4256
        %v4277 = vsub.f32 %v3996, %v4259
        %v4278 = vsub.f32 %v4046, %v4262
        %v4279 = vsub.f32 %v4096, %v4265
        %v4280 = vsub.f32 %v4146, %v4268
        %v4281 = vsub.f32 %v4196, %v4271
        %v4282 = vsub.f32 %v4246, %v4274
        %v4283 = vmul.f32 %v4275, 1.442695
        %v4284 = vpow.pop %v4283
        %v4285 = vmul.f32 %v4276, 1.442695
        %v4286 = vpow.pop %v4285
        %v4287 = vmul.f32 %v4277, 1.442695
        %v4288 = vpow.pop %v4287
        %v4289 = vmul.f32 %v4278, 1.442695
        %v4290 = vpow.pop %v4289
        %v4291 = vmul.f32 %v4279, 1.442695
        %v4292 = vpow.pop %v4291
        %v4293 = vmul.f32 %v4280, 1.442695
        %v4294 = vpow.pop %v4293
        %v4295 = vmul.f32 %v4281, 1.442695
        %v4296 = vpow.pop %v4295
        %v4297 = vmul.f32 %v4282, 1.442695
        %v4298 = vpow.pop %v4297
        %v4299 = vsel %vm1336, %v4284, 0.0
        %4300 = vadd.xlane.f32.xlu0 %v4299
        %v4301 = vpop.xlane.xlu0 %4300
        %v4302 = vsel %vm1336, %v4286, 0.0
        %4303 = vadd.xlane.f32.xlu0 %v4302
        %v4304 = vpop.xlane.xlu0 %4303
        %v4305 = vsel %vm1336, %v4288, 0.0
        %4306 = vadd.xlane.f32.xlu0 %v4305
        %v4307 = vpop.xlane.xlu0 %4306
        %v4308 = vsel %vm1336, %v4290, 0.0
        %4309 = vadd.xlane.f32.xlu0 %v4308
        %v4310 = vpop.xlane.xlu0 %4309
        %v4311 = vsel %vm1336, %v4292, 0.0
        %4312 = vadd.xlane.f32.xlu0 %v4311
        %v4313 = vpop.xlane.xlu0 %4312
        %v4314 = vsel %vm1336, %v4294, 0.0
        %4315 = vadd.xlane.f32.xlu0 %v4314
        %v4316 = vpop.xlane.xlu0 %4315
        %v4317 = vsel %vm1336, %v4296, 0.0
        %4318 = vadd.xlane.f32.xlu0 %v4317
        %v4319 = vpop.xlane.xlu0 %4318
        %v4320 = vsel %vm1336, %v4298, 0.0
        %4321 = vadd.xlane.f32.xlu0 %v4320
        %v4322 = vpop.xlane.xlu0 %4321
        %v4323 = vrcp.pop %v4301
        %v4324 = vrcp.pop %v4304
        %v4325 = vrcp.pop %v4307
        %v4326 = vrcp.pop %v4310
        %v4327 = vrcp.pop %v4313
        %v4328 = vrcp.pop %v4316
        %v4329 = vrcp.pop %v4319
        %v4330 = vrcp.pop %v4322
        %v4331 = vmul.f32 %v4284, %v4323
        %v4332 = vmul.f32 %v4286, %v4324
        %v4333 = vmul.f32 %v4288, %v4325
        %v4334 = vmul.f32 %v4290, %v4326
        %v4335 = vmul.f32 %v4292, %v4327
        %v4336 = vmul.f32 %v4294, %v4328
        %v4337 = vmul.f32 %v4296, %v4329
        %v4338 = vmul.f32 %v4298, %v4330
        %v4339 = vpack.c.bf16 %v4331, %v4331
        %v4340 = vpack.c.bf16 %v4332, %v4332
        %v4341 = vpack.c.bf16 %v4333, %v4333
        %v4342 = vpack.c.bf16 %v4334, %v4334
        %v4343 = vpack.c.bf16 %v4335, %v4335
        %v4344 = vpack.c.bf16 %v4336, %v4336
        %v4345 = vpack.c.bf16 %v4337, %v4337
        %v4346 = vpack.c.bf16 %v4338, %v4338
        %4347 = vrot.lane.b32.xlu0 %v888, 104
        %v4348 = vpop.permute.xlu0 %4347
        %v4350 = vsel %vm967, %v4339, 0
        %v4353 = vsel %vm1436, %v4348, 0
        %4355 = vmatprep.subr.bf16.mxu0 0
        %4356 = vmatpush1.bf16.msra.mxu0 0
        %4357 = vmatprep.subr.bf16.mxu0 0
        %4358 = vmatpush1.bf16.msra.mxu0 0
        %4359 = vmatprep.subr.bf16.mxu0 0
        %4360 = vmatpush1.bf16.msra.mxu0 0
        %4361 = vmatprep.subr.bf16.mxu0 0
        %4362 = vmatpush1.bf16.msra.mxu0 0
        %4363 = vmatprep.subr.bf16.mxu0 0
        %4364 = vmatpush1.bf16.msra.mxu0 0
        %4365 = vmatprep.subr.bf16.mxu0 0
        %4366 = vmatpush1.bf16.msra.mxu0 0
        %4367 = vmatprep.subr.bf16.mxu0 0
        %4368 = vmatpush1.bf16.msra.mxu0 0
        %4369 = vmatprep.subr.bf16.mxu0 0
        %4370 = vmatpush1.bf16.msra.mxu0 %v4353
        %4371 = vmatprep.subr.bf16.mxu0 0
        %4372 = vmatpush2.bf16.msra.mxu0 0
        %4373 = vmatprep.subr.bf16.mxu0 0
        %4374 = vmatpush2.bf16.msra.mxu0 0
        %4375 = vmatprep.subr.bf16.mxu0 0
        %4376 = vmatpush2.bf16.msra.mxu0 0
        %4377 = vmatprep.subr.bf16.mxu0 0
        %4378 = vmatpush2.bf16.msra.mxu0 0
        %4379 = vmatprep.subr.bf16.mxu0 0
        %4380 = vmatpush2.bf16.msra.mxu0 0
        %4381 = vmatprep.subr.bf16.mxu0 0
        %4382 = vmatpush2.bf16.msra.mxu0 0
        %4383 = vmatprep.subr.bf16.mxu0 0
        %4384 = vmatpush2.bf16.msra.mxu0 0
        %4385 = vmatprep.subr.bf16.mxu0 0
        %4386 = vmatpush2.bf16.msra.mxu0 0
        %4387 = vmatprep.mubr.bf16.mxu0 0
        %4388 = vmatmul.mubr.bf16.gmra.mxu0 %v4350
        %v4389 = vpop.f32.mrf.mxu0
        %v4390 = vadd.f32 0.0, %v4389
        %v4391 = vpop.f32.mrf.mxu0
        %v4392 = vpop.f32.mrf.mxu0
        %v4393 = vpop.f32.mrf.mxu0
        %4394 = vdwg.mxu0
        %4395 = vrot.lane.b32.xlu0 %v889, 104
        %v4396 = vpop.permute.xlu0 %4395
        %v4398 = vsel %vm967, %v4340, 0
        %v4401 = vsel %vm1436, %v4396, 0
        %4403 = vmatprep.subr.bf16.mxu0 0
        %4404 = vmatpush1.bf16.msra.mxu0 0
        %4405 = vmatprep.subr.bf16.mxu0 0
        %4406 = vmatpush1.bf16.msra.mxu0 0
        %4407 = vmatprep.subr.bf16.mxu0 0
        %4408 = vmatpush1.bf16.msra.mxu0 0
        %4409 = vmatprep.subr.bf16.mxu0 0
        %4410 = vmatpush1.bf16.msra.mxu0 0
        %4411 = vmatprep.subr.bf16.mxu0 0
        %4412 = vmatpush1.bf16.msra.mxu0 0
        %4413 = vmatprep.subr.bf16.mxu0 0
        %4414 = vmatpush1.bf16.msra.mxu0 0
        %4415 = vmatprep.subr.bf16.mxu0 0
        %4416 = vmatpush1.bf16.msra.mxu0 0
        %4417 = vmatprep.subr.bf16.mxu0 0
        %4418 = vmatpush1.bf16.msra.mxu0 %v4401
        %4419 = vmatprep.subr.bf16.mxu0 0
        %4420 = vmatpush2.bf16.msra.mxu0 0
        %4421 = vmatprep.subr.bf16.mxu0 0
        %4422 = vmatpush2.bf16.msra.mxu0 0
        %4423 = vmatprep.subr.bf16.mxu0 0
        %4424 = vmatpush2.bf16.msra.mxu0 0
        %4425 = vmatprep.subr.bf16.mxu0 0
        %4426 = vmatpush2.bf16.msra.mxu0 0
        %4427 = vmatprep.subr.bf16.mxu0 0
        %4428 = vmatpush2.bf16.msra.mxu0 0
        %4429 = vmatprep.subr.bf16.mxu0 0
        %4430 = vmatpush2.bf16.msra.mxu0 0
        %4431 = vmatprep.subr.bf16.mxu0 0
        %4432 = vmatpush2.bf16.msra.mxu0 0
        %4433 = vmatprep.subr.bf16.mxu0 0
        %4434 = vmatpush2.bf16.msra.mxu0 0
        %4435 = vmatprep.mubr.bf16.mxu0 0
        %4436 = vmatmul.mubr.bf16.gmra.mxu0 %v4398
        %v4437 = vpop.f32.mrf.mxu0
        %v4438 = vadd.f32 0.0, %v4437
        %v4439 = vpop.f32.mrf.mxu0
        %v4440 = vpop.f32.mrf.mxu0
        %v4441 = vpop.f32.mrf.mxu0
        %4442 = vdwg.mxu0
        %4443 = vrot.lane.b32.xlu0 %v890, 104
        %v4444 = vpop.permute.xlu0 %4443
        %v4446 = vsel %vm967, %v4341, 0
        %v4449 = vsel %vm1436, %v4444, 0
        %4451 = vmatprep.subr.bf16.mxu0 0
        %4452 = vmatpush1.bf16.msra.mxu0 0
        %4453 = vmatprep.subr.bf16.mxu0 0
        %4454 = vmatpush1.bf16.msra.mxu0 0
        %4455 = vmatprep.subr.bf16.mxu0 0
        %4456 = vmatpush1.bf16.msra.mxu0 0
        %4457 = vmatprep.subr.bf16.mxu0 0
        %4458 = vmatpush1.bf16.msra.mxu0 0
        %4459 = vmatprep.subr.bf16.mxu0 0
        %4460 = vmatpush1.bf16.msra.mxu0 0
        %4461 = vmatprep.subr.bf16.mxu0 0
        %4462 = vmatpush1.bf16.msra.mxu0 0
        %4463 = vmatprep.subr.bf16.mxu0 0
        %4464 = vmatpush1.bf16.msra.mxu0 0
        %4465 = vmatprep.subr.bf16.mxu0 0
        %4466 = vmatpush1.bf16.msra.mxu0 %v4449
        %4467 = vmatprep.subr.bf16.mxu0 0
        %4468 = vmatpush2.bf16.msra.mxu0 0
        %4469 = vmatprep.subr.bf16.mxu0 0
        %4470 = vmatpush2.bf16.msra.mxu0 0
        %4471 = vmatprep.subr.bf16.mxu0 0
        %4472 = vmatpush2.bf16.msra.mxu0 0
        %4473 = vmatprep.subr.bf16.mxu0 0
        %4474 = vmatpush2.bf16.msra.mxu0 0
        %4475 = vmatprep.subr.bf16.mxu0 0
        %4476 = vmatpush2.bf16.msra.mxu0 0
        %4477 = vmatprep.subr.bf16.mxu0 0
        %4478 = vmatpush2.bf16.msra.mxu0 0
        %4479 = vmatprep.subr.bf16.mxu0 0
        %4480 = vmatpush2.bf16.msra.mxu0 0
        %4481 = vmatprep.subr.bf16.mxu0 0
        %4482 = vmatpush2.bf16.msra.mxu0 0
        %4483 = vmatprep.mubr.bf16.mxu0 0
        %4484 = vmatmul.mubr.bf16.gmra.mxu0 %v4446
        %v4485 = vpop.f32.mrf.mxu0
        %v4486 = vadd.f32 0.0, %v4485
        %v4487 = vpop.f32.mrf.mxu0
        %v4488 = vpop.f32.mrf.mxu0
        %v4489 = vpop.f32.mrf.mxu0
        %4490 = vdwg.mxu0
        %4491 = vrot.lane.b32.xlu0 %v891, 104
        %v4492 = vpop.permute.xlu0 %4491
        %v4494 = vsel %vm967, %v4342, 0
        %v4497 = vsel %vm1436, %v4492, 0
        %4499 = vmatprep.subr.bf16.mxu0 0
        %4500 = vmatpush1.bf16.msra.mxu0 0
        %4501 = vmatprep.subr.bf16.mxu0 0
        %4502 = vmatpush1.bf16.msra.mxu0 0
        %4503 = vmatprep.subr.bf16.mxu0 0
        %4504 = vmatpush1.bf16.msra.mxu0 0
        %4505 = vmatprep.subr.bf16.mxu0 0
        %4506 = vmatpush1.bf16.msra.mxu0 0
        %4507 = vmatprep.subr.bf16.mxu0 0
        %4508 = vmatpush1.bf16.msra.mxu0 0
        %4509 = vmatprep.subr.bf16.mxu0 0
        %4510 = vmatpush1.bf16.msra.mxu0 0
        %4511 = vmatprep.subr.bf16.mxu0 0
        %4512 = vmatpush1.bf16.msra.mxu0 0
        %4513 = vmatprep.subr.bf16.mxu0 0
        %4514 = vmatpush1.bf16.msra.mxu0 %v4497
        %4515 = vmatprep.subr.bf16.mxu0 0
        %4516 = vmatpush2.bf16.msra.mxu0 0
        %4517 = vmatprep.subr.bf16.mxu0 0
        %4518 = vmatpush2.bf16.msra.mxu0 0
        %4519 = vmatprep.subr.bf16.mxu0 0
        %4520 = vmatpush2.bf16.msra.mxu0 0
        %4521 = vmatprep.subr.bf16.mxu0 0
        %4522 = vmatpush2.bf16.msra.mxu0 0
        %4523 = vmatprep.subr.bf16.mxu0 0
        %4524 = vmatpush2.bf16.msra.mxu0 0
        %4525 = vmatprep.subr.bf16.mxu0 0
        %4526 = vmatpush2.bf16.msra.mxu0 0
        %4527 = vmatprep.subr.bf16.mxu0 0
        %4528 = vmatpush2.bf16.msra.mxu0 0
        %4529 = vmatprep.subr.bf16.mxu0 0
        %4530 = vmatpush2.bf16.msra.mxu0 0
        %4531 = vmatprep.mubr.bf16.mxu0 0
        %4532 = vmatmul.mubr.bf16.gmra.mxu0 %v4494
        %v4533 = vpop.f32.mrf.mxu0
        %v4534 = vadd.f32 0.0, %v4533
        %v4535 = vpop.f32.mrf.mxu0
        %v4536 = vpop.f32.mrf.mxu0
        %v4537 = vpop.f32.mrf.mxu0
        %4538 = vdwg.mxu0
        %4539 = vrot.lane.b32.xlu0 %v892, 104
        %v4540 = vpop.permute.xlu0 %4539
        %v4542 = vsel %vm967, %v4343, 0
        %v4545 = vsel %vm1436, %v4540, 0
        %4547 = vmatprep.subr.bf16.mxu0 0
        %4548 = vmatpush1.bf16.msra.mxu0 0
        %4549 = vmatprep.subr.bf16.mxu0 0
        %4550 = vmatpush1.bf16.msra.mxu0 0
        %4551 = vmatprep.subr.bf16.mxu0 0
        %4552 = vmatpush1.bf16.msra.mxu0 0
        %4553 = vmatprep.subr.bf16.mxu0 0
        %4554 = vmatpush1.bf16.msra.mxu0 0
        %4555 = vmatprep.subr.bf16.mxu0 0
        %4556 = vmatpush1.bf16.msra.mxu0 0
        %4557 = vmatprep.subr.bf16.mxu0 0
        %4558 = vmatpush1.bf16.msra.mxu0 0
        %4559 = vmatprep.subr.bf16.mxu0 0
        %4560 = vmatpush1.bf16.msra.mxu0 0
        %4561 = vmatprep.subr.bf16.mxu0 0
        %4562 = vmatpush1.bf16.msra.mxu0 %v4545
        %4563 = vmatprep.subr.bf16.mxu0 0
        %4564 = vmatpush2.bf16.msra.mxu0 0
        %4565 = vmatprep.subr.bf16.mxu0 0
        %4566 = vmatpush2.bf16.msra.mxu0 0
        %4567 = vmatprep.subr.bf16.mxu0 0
        %4568 = vmatpush2.bf16.msra.mxu0 0
        %4569 = vmatprep.subr.bf16.mxu0 0
        %4570 = vmatpush2.bf16.msra.mxu0 0
        %4571 = vmatprep.subr.bf16.mxu0 0
        %4572 = vmatpush2.bf16.msra.mxu0 0
        %4573 = vmatprep.subr.bf16.mxu0 0
        %4574 = vmatpush2.bf16.msra.mxu0 0
        %4575 = vmatprep.subr.bf16.mxu0 0
        %4576 = vmatpush2.bf16.msra.mxu0 0
        %4577 = vmatprep.subr.bf16.mxu0 0
        %4578 = vmatpush2.bf16.msra.mxu0 0
        %4579 = vmatprep.mubr.bf16.mxu0 0
        %4580 = vmatmul.mubr.bf16.gmra.mxu0 %v4542
        %v4581 = vpop.f32.mrf.mxu0
        %v4582 = vadd.f32 0.0, %v4581
        %v4583 = vpop.f32.mrf.mxu0
        %v4584 = vpop.f32.mrf.mxu0
        %v4585 = vpop.f32.mrf.mxu0
        %4586 = vdwg.mxu0
        %4587 = vrot.lane.b32.xlu0 %v893, 104
        %v4588 = vpop.permute.xlu0 %4587
        %v4590 = vsel %vm967, %v4344, 0
        %v4593 = vsel %vm1436, %v4588, 0
        %4595 = vmatprep.subr.bf16.mxu0 0
        %4596 = vmatpush1.bf16.msra.mxu0 0
        %4597 = vmatprep.subr.bf16.mxu0 0
        %4598 = vmatpush1.bf16.msra.mxu0 0
        %4599 = vmatprep.subr.bf16.mxu0 0
        %4600 = vmatpush1.bf16.msra.mxu0 0
        %4601 = vmatprep.subr.bf16.mxu0 0
        %4602 = vmatpush1.bf16.msra.mxu0 0
        %4603 = vmatprep.subr.bf16.mxu0 0
        %4604 = vmatpush1.bf16.msra.mxu0 0
        %4605 = vmatprep.subr.bf16.mxu0 0
        %4606 = vmatpush1.bf16.msra.mxu0 0
        %4607 = vmatprep.subr.bf16.mxu0 0
        %4608 = vmatpush1.bf16.msra.mxu0 0
        %4609 = vmatprep.subr.bf16.mxu0 0
        %4610 = vmatpush1.bf16.msra.mxu0 %v4593
        %4611 = vmatprep.subr.bf16.mxu0 0
        %4612 = vmatpush2.bf16.msra.mxu0 0
        %4613 = vmatprep.subr.bf16.mxu0 0
        %4614 = vmatpush2.bf16.msra.mxu0 0
        %4615 = vmatprep.subr.bf16.mxu0 0
        %4616 = vmatpush2.bf16.msra.mxu0 0
        %4617 = vmatprep.subr.bf16.mxu0 0
        %4618 = vmatpush2.bf16.msra.mxu0 0
        %4619 = vmatprep.subr.bf16.mxu0 0
        %4620 = vmatpush2.bf16.msra.mxu0 0
        %4621 = vmatprep.subr.bf16.mxu0 0
        %4622 = vmatpush2.bf16.msra.mxu0 0
        %4623 = vmatprep.subr.bf16.mxu0 0
        %4624 = vmatpush2.bf16.msra.mxu0 0
        %4625 = vmatprep.subr.bf16.mxu0 0
        %4626 = vmatpush2.bf16.msra.mxu0 0
        %4627 = vmatprep.mubr.bf16.mxu0 0
        %4628 = vmatmul.mubr.bf16.gmra.mxu0 %v4590
        %v4629 = vpop.f32.mrf.mxu0
        %v4630 = vadd.f32 0.0, %v4629
        %v4631 = vpop.f32.mrf.mxu0
        %v4632 = vpop.f32.mrf.mxu0
        %v4633 = vpop.f32.mrf.mxu0
        %4634 = vdwg.mxu0
        %4635 = vrot.lane.b32.xlu0 %v894, 104
        %v4636 = vpop.permute.xlu0 %4635
        %v4638 = vsel %vm967, %v4345, 0
        %v4641 = vsel %vm1436, %v4636, 0
        %4643 = vmatprep.subr.bf16.mxu0 0
        %4644 = vmatpush1.bf16.msra.mxu0 0
        %4645 = vmatprep.subr.bf16.mxu0 0
        %4646 = vmatpush1.bf16.msra.mxu0 0
        %4647 = vmatprep.subr.bf16.mxu0 0
        %4648 = vmatpush1.bf16.msra.mxu0 0
        %4649 = vmatprep.subr.bf16.mxu0 0
        %4650 = vmatpush1.bf16.msra.mxu0 0
        %4651 = vmatprep.subr.bf16.mxu0 0
        %4652 = vmatpush1.bf16.msra.mxu0 0
        %4653 = vmatprep.subr.bf16.mxu0 0
        %4654 = vmatpush1.bf16.msra.mxu0 0
        %4655 = vmatprep.subr.bf16.mxu0 0
        %4656 = vmatpush1.bf16.msra.mxu0 0
        %4657 = vmatprep.subr.bf16.mxu0 0
        %4658 = vmatpush1.bf16.msra.mxu0 %v4641
        %4659 = vmatprep.subr.bf16.mxu0 0
        %4660 = vmatpush2.bf16.msra.mxu0 0
        %4661 = vmatprep.subr.bf16.mxu0 0
        %4662 = vmatpush2.bf16.msra.mxu0 0
        %4663 = vmatprep.subr.bf16.mxu0 0
        %4664 = vmatpush2.bf16.msra.mxu0 0
        %4665 = vmatprep.subr.bf16.mxu0 0
        %4666 = vmatpush2.bf16.msra.mxu0 0
        %4667 = vmatprep.subr.bf16.mxu0 0
        %4668 = vmatpush2.bf16.msra.mxu0 0
        %4669 = vmatprep.subr.bf16.mxu0 0
        %4670 = vmatpush2.bf16.msra.mxu0 0
        %4671 = vmatprep.subr.bf16.mxu0 0
        %4672 = vmatpush2.bf16.msra.mxu0 0
        %4673 = vmatprep.subr.bf16.mxu0 0
        %4674 = vmatpush2.bf16.msra.mxu0 0
        %4675 = vmatprep.mubr.bf16.mxu0 0
        %4676 = vmatmul.mubr.bf16.gmra.mxu0 %v4638
        %v4677 = vpop.f32.mrf.mxu0
        %v4678 = vadd.f32 0.0, %v4677
        %v4679 = vpop.f32.mrf.mxu0
        %v4680 = vpop.f32.mrf.mxu0
        %v4681 = vpop.f32.mrf.mxu0
        %4682 = vdwg.mxu0
        %4683 = vrot.lane.b32.xlu0 %v895, 104
        %v4684 = vpop.permute.xlu0 %4683
        %v4686 = vsel %vm967, %v4346, 0
        %v4689 = vsel %vm1436, %v4684, 0
        %4691 = vmatprep.subr.bf16.mxu0 0
        %4692 = vmatpush1.bf16.msra.mxu0 0
        %4693 = vmatprep.subr.bf16.mxu0 0
        %4694 = vmatpush1.bf16.msra.mxu0 0
        %4695 = vmatprep.subr.bf16.mxu0 0
        %4696 = vmatpush1.bf16.msra.mxu0 0
        %4697 = vmatprep.subr.bf16.mxu0 0
        %4698 = vmatpush1.bf16.msra.mxu0 0
        %4699 = vmatprep.subr.bf16.mxu0 0
        %4700 = vmatpush1.bf16.msra.mxu0 0
        %4701 = vmatprep.subr.bf16.mxu0 0
        %4702 = vmatpush1.bf16.msra.mxu0 0
        %4703 = vmatprep.subr.bf16.mxu0 0
        %4704 = vmatpush1.bf16.msra.mxu0 0
        %4705 = vmatprep.subr.bf16.mxu0 0
        %4706 = vmatpush1.bf16.msra.mxu0 %v4689
        %4707 = vmatprep.subr.bf16.mxu0 0
        %4708 = vmatpush2.bf16.msra.mxu0 0
        %4709 = vmatprep.subr.bf16.mxu0 0
        %4710 = vmatpush2.bf16.msra.mxu0 0
        %4711 = vmatprep.subr.bf16.mxu0 0
        %4712 = vmatpush2.bf16.msra.mxu0 0
        %4713 = vmatprep.subr.bf16.mxu0 0
        %4714 = vmatpush2.bf16.msra.mxu0 0
        %4715 = vmatprep.subr.bf16.mxu0 0
        %4716 = vmatpush2.bf16.msra.mxu0 0
        %4717 = vmatprep.subr.bf16.mxu0 0
        %4718 = vmatpush2.bf16.msra.mxu0 0
        %4719 = vmatprep.subr.bf16.mxu0 0
        %4720 = vmatpush2.bf16.msra.mxu0 0
        %4721 = vmatprep.subr.bf16.mxu0 0
        %4722 = vmatpush2.bf16.msra.mxu0 0
        %4723 = vmatprep.mubr.bf16.mxu0 0
        %4724 = vmatmul.mubr.bf16.gmra.mxu0 %v4686
        %v4725 = vpop.f32.mrf.mxu0
        %v4726 = vadd.f32 0.0, %v4725
        %v4727 = vpop.f32.mrf.mxu0
        %v4728 = vpop.f32.mrf.mxu0
        %v4729 = vpop.f32.mrf.mxu0
        %4730 = vdwg.mxu0
        %v4731 = vpack.c.bf16 %v4390, %v4390
        %v4732 = vpack.c.bf16 %v4438, %v4438
        %v4733 = vpack.c.bf16 %v4486, %v4486
        %v4734 = vpack.c.bf16 %v4534, %v4534
        %v4735 = vpack.c.bf16 %v4582, %v4582
        %v4736 = vpack.c.bf16 %v4630, %v4630
        %v4737 = vpack.c.bf16 %v4678, %v4678
        %v4738 = vpack.c.bf16 %v4726, %v4726
        %v4747 = vunpack.c.l.b16 %v4731
        %v4748 = vunpack.c.l.b16 %v4732
        %v4749 = vunpack.c.l.b16 %v4733
        %v4750 = vunpack.c.l.b16 %v4734
        %v4751 = vunpack.c.l.b16 %v4735
        %v4752 = vunpack.c.l.b16 %v4736
        %v4753 = vunpack.c.l.b16 %v4737
        %v4754 = vunpack.c.l.b16 %v4738
        %v4755 = vrot.slane %v4748, 7
        %v4756 = vsel %vm1827, %v4755, %v4747
        %v4757 = vrot.slane %v4749, 6
        %v4758 = vsel %vm1830, %v4757, %v4756
        %v4759 = vrot.slane %v4750, 5
        %v4760 = vsel %vm1833, %v4759, %v4758
        %v4761 = vrot.slane %v4751, 4
        %v4762 = vsel %vm1836, %v4761, %v4760
        %v4763 = vrot.slane %v4752, 3
        %v4764 = vsel %vm1839, %v4763, %v4762
        %v4765 = vrot.slane %v4753, 2
        %v4766 = vsel %vm1842, %v4765, %v4764
        %v4767 = vrot.slane %v4754, 1
        %v4768 = vsel %vm1845, %v4767, %v4766
        %v4769 = vpack.c.b16 %v4768, %v4768
        %v4771 = vsel %vm967, %v4769, 0
        %v4774 = vsel %vm1436, %v958, 0
        %4776 = vmatprep.subr.bf16.mxu0 0
        %4777 = vmatpush1.bf16.msra.mxu0 0
        %4778 = vmatprep.subr.bf16.mxu0 0
        %4779 = vmatpush1.bf16.msra.mxu0 0
        %4780 = vmatprep.subr.bf16.mxu0 0
        %4781 = vmatpush1.bf16.msra.mxu0 0
        %4782 = vmatprep.subr.bf16.mxu0 0
        %4783 = vmatpush1.bf16.msra.mxu0 0
        %4784 = vmatprep.subr.bf16.mxu0 0
        %4785 = vmatpush1.bf16.msra.mxu0 0
        %4786 = vmatprep.subr.bf16.mxu0 0
        %4787 = vmatpush1.bf16.msra.mxu0 0
        %4788 = vmatprep.subr.bf16.mxu0 0
        %4789 = vmatpush1.bf16.msra.mxu0 0
        %4790 = vmatprep.subr.bf16.mxu0 0
        %4791 = vmatpush1.bf16.msra.mxu0 %v4774
        %4792 = vmatprep.subr.bf16.mxu0 0
        %4793 = vmatpush2.bf16.msra.mxu0 0
        %4794 = vmatprep.subr.bf16.mxu0 0
        %4795 = vmatpush2.bf16.msra.mxu0 0
        %4796 = vmatprep.subr.bf16.mxu0 0
        %4797 = vmatpush2.bf16.msra.mxu0 0
        %4798 = vmatprep.subr.bf16.mxu0 0
        %4799 = vmatpush2.bf16.msra.mxu0 0
        %4800 = vmatprep.subr.bf16.mxu0 0
        %4801 = vmatpush2.bf16.msra.mxu0 0
        %4802 = vmatprep.subr.bf16.mxu0 0
        %4803 = vmatpush2.bf16.msra.mxu0 0
        %4804 = vmatprep.subr.bf16.mxu0 0
        %4805 = vmatpush2.bf16.msra.mxu0 0
        %4806 = vmatprep.subr.bf16.mxu0 0
        %4807 = vmatpush2.bf16.msra.mxu0 0
        %4808 = vmatprep.mubr.bf16.mxu0 0
        %4809 = vmatmul.mubr.bf16.gmra.mxu0 %v4771
        %v4810 = vpop.f32.mrf.mxu0
        %v4811 = vadd.f32 0.0, %v4810
        %v4812 = vpop.f32.mrf.mxu0
        %v4813 = vpop.f32.mrf.mxu0
        %v4814 = vpop.f32.mrf.mxu0
        %4815 = vdwg.mxu0
        %v4816 = vadd.f32 %v3850, %v4811
        %v4817 = vpack.c.bf16 %v4816, %v4816
        %v4818 = vld [vmem:[%s11] sm:$0xf]
        %v4819 = vld [vmem:[%s11 + $0x4] sm:$0xf]
        %v4820 = vld [vmem:[%s11 + $0x8] sm:$0xf]
        %v4821 = vld [vmem:[%s11 + $0xc] sm:$0xf]
        %v4822 = vld [vmem:[%s12] sm:$0x1]
        %v4824 = vlaneseq
        %v4825 = vshrl.u32 %v4824, 7
        %v4826 = vsub.s32 0, %v4825
        %v4827 = vrot.slane %v4822, %v4826
        %v4833 = vunpack.c.l.b16 %v4818
        %v4834 = vunpack.c.l.b16 %v4819
        %v4835 = vunpack.c.l.b16 %v4820
        %v4836 = vunpack.c.l.b16 %v4821
        %v4837 = vpack.c.b16 %v4834, %v4833
        %v4838 = vpack.c.b16 %v4836, %v4835
        %v4842 = vsel %vm562, %v4817, 0
        %4844 = vmatprep.subr.bf16.mxu0 0
        %4845 = vmatpush1.bf16.msra.mxu0 0
        %4846 = vmatprep.subr.bf16.mxu0 0
        %4847 = vmatpush1.bf16.msra.mxu0 0
        %4848 = vmatprep.subr.bf16.mxu0 0
        %4849 = vmatpush1.bf16.msra.mxu0 0
        %4850 = vmatprep.subr.bf16.mxu0 0
        %4851 = vmatpush1.bf16.msra.mxu0 0
        %4852 = vmatprep.subr.bf16.mxu0 0
        %4853 = vmatpush1.bf16.msra.mxu0 0
        %4854 = vmatprep.subr.bf16.mxu0 0
        %4855 = vmatpush1.bf16.msra.mxu0 0
        %4856 = vmatprep.subr.bf16.mxu0 0
        %4857 = vmatpush1.bf16.msra.mxu0 %v4838
        %4858 = vmatprep.subr.bf16.mxu0 0
        %4859 = vmatpush1.bf16.msra.mxu0 %v4837
        %4860 = vmatprep.subr.bf16.mxu0 0
        %4861 = vmatpush2.bf16.msra.mxu0 0
        %4862 = vmatprep.subr.bf16.mxu0 0
        %4863 = vmatpush2.bf16.msra.mxu0 0
        %4864 = vmatprep.subr.bf16.mxu0 0
        %4865 = vmatpush2.bf16.msra.mxu0 0
        %4866 = vmatprep.subr.bf16.mxu0 0
        %4867 = vmatpush2.bf16.msra.mxu0 0
        %4868 = vmatprep.subr.bf16.mxu0 0
        %4869 = vmatpush2.bf16.msra.mxu0 0
        %4870 = vmatprep.subr.bf16.mxu0 0
        %4871 = vmatpush2.bf16.msra.mxu0 0
        %4872 = vmatprep.subr.bf16.mxu0 0
        %4873 = vmatpush2.bf16.msra.mxu0 0
        %4874 = vmatprep.subr.bf16.mxu0 0
        %4875 = vmatpush2.bf16.msra.mxu0 0
        %4876 = vmatprep.mubr.bf16.mxu0 0
        %4877 = vmatmul.mubr.bf16.gmra.mxu0 %v4842
        %v4878 = vpop.f32.mrf.mxu0
        %v4879 = vadd.f32 %v4827, %v4878
        %v4880 = vpop.f32.mrf.mxu0
        %v4881 = vpop.f32.mrf.mxu0
        %v4882 = vpop.f32.mrf.mxu0
        %4883 = vdwg.mxu0
        %v4884 = vmul.f32 %v4879, 0.5
        %v4885 = vmul.f32 %v4879, 0.70710677
        %v4886 = verf.f32.pop %v4885
        %v4887 = vadd.f32 %v4886, 1.0
        %v4888 = vmul.f32 %v4884, %v4887
        %v4889 = vpack.c.bf16 %v4888, %v4888
        %v4890 = vld [vmem:[%s13] sm:$0xf]
        %v4891 = vld [vmem:[%s13 + $0x4] sm:$0xf]
        %v4892 = vld [vmem:[%s13 + $0x8] sm:$0xf]
        %v4893 = vld [vmem:[%s13 + $0xc] sm:$0xf]
        %v4894 = vld [vmem:[%s13 + $0x10] sm:$0xf]
        %v4895 = vld [vmem:[%s13 + $0x14] sm:$0xf]
        %v4896 = vld [vmem:[%s13 + $0x18] sm:$0xf]
        %v4897 = vld [vmem:[%s13 + $0x1c] sm:$0xf]
        %v4898 = vld [vmem:[%s14] sm:$0x1]
        %v4900 = vlaneseq
        %v4901 = vshrl.u32 %v4900, 7
        %v4902 = vsub.s32 0, %v4901
        %v4903 = vrot.slane %v4898, %v4902
        %v4913 = vunpack.c.l.b16 %v4890
        %v4914 = vunpack.c.l.b16 %v4891
        %v4915 = vunpack.c.l.b16 %v4892
        %v4916 = vunpack.c.l.b16 %v4893
        %v4917 = vunpack.c.l.b16 %v4894
        %v4918 = vunpack.c.l.b16 %v4895
        %v4919 = vunpack.c.l.b16 %v4896
        %v4920 = vunpack.c.l.b16 %v4897
        %v4921 = vpack.c.b16 %v4914, %v4913
        %v4922 = vpack.c.b16 %v4916, %v4915
        %v4923 = vpack.c.b16 %v4918, %v4917
        %v4924 = vpack.c.b16 %v4920, %v4919
        %vm4929 = vcmask 523264
        %v4931 = vsel %vm4929, %v4889, 0
        %4933 = vmatprep.subr.bf16.mxu0 0
        %4934 = vmatpush1.bf16.msra.mxu0 0
        %4935 = vmatprep.subr.bf16.mxu0 0
        %4936 = vmatpush1.bf16.msra.mxu0 0
        %4937 = vmatprep.subr.bf16.mxu0 0
        %4938 = vmatpush1.bf16.msra.mxu0 0
        %4939 = vmatprep.subr.bf16.mxu0 0
        %4940 = vmatpush1.bf16.msra.mxu0 0
        %4941 = vmatprep.subr.bf16.mxu0 0
        %4942 = vmatpush1.bf16.msra.mxu0 %v4924
        %4943 = vmatprep.subr.bf16.mxu0 0
        %4944 = vmatpush1.bf16.msra.mxu0 %v4923
        %4945 = vmatprep.subr.bf16.mxu0 0
        %4946 = vmatpush1.bf16.msra.mxu0 %v4922
        %4947 = vmatprep.subr.bf16.mxu0 0
        %4948 = vmatpush1.bf16.msra.mxu0 %v4921
        %4949 = vmatprep.subr.bf16.mxu0 0
        %4950 = vmatpush2.bf16.msra.mxu0 0
        %4951 = vmatprep.subr.bf16.mxu0 0
        %4952 = vmatpush2.bf16.msra.mxu0 0
        %4953 = vmatprep.subr.bf16.mxu0 0
        %4954 = vmatpush2.bf16.msra.mxu0 0
        %4955 = vmatprep.subr.bf16.mxu0 0
        %4956 = vmatpush2.bf16.msra.mxu0 0
        %4957 = vmatprep.subr.bf16.mxu0 0
        %4958 = vmatpush2.bf16.msra.mxu0 0
        %4959 = vmatprep.subr.bf16.mxu0 0
        %4960 = vmatpush2.bf16.msra.mxu0 0
        %4961 = vmatprep.subr.bf16.mxu0 0
        %4962 = vmatpush2.bf16.msra.mxu0 0
        %4963 = vmatprep.subr.bf16.mxu0 0
        %4964 = vmatpush2.bf16.msra.mxu0 0
        %4965 = vmatprep.mubr.bf16.mxu0 0
        %4966 = vmatmul.mubr.bf16.gmra.mxu0 %v4931
        %v4967 = vpop.f32.mrf.mxu0
        %v4968 = vadd.f32 %v4903, %v4967
        %v4969 = vpop.f32.mrf.mxu0
        %v4970 = vpop.f32.mrf.mxu0
        %v4971 = vpop.f32.mrf.mxu0
        %4972 = vdwg.mxu0
        %v4973 = vmul.f32 %v4968, 0.5
        %v4974 = vmul.f32 %v4968, 0.70710677
        %v4975 = verf.f32.pop %v4974
        %v4976 = vadd.f32 %v4975, 1.0
        %v4977 = vmul.f32 %v4973, %v4976
        %4978 = vst.msk [vmem:[%s514] sm:$0xff] %vm562, %v4977
        %s4979 = sand.u32 %s367, 1
        %s4980 = scalar_lea.sflag [#allocation3], %s4979
        %s4981 = sand.u32 %s367, 1
        %s4982 = smul.addr %s4981, 8
        %s4983 = scalar_lea.vmem [#allocation2], %s4982
        // Predicated region
        $region81: #{tpu_custom_call.1} parent=79 // pred_check
          %p4984 = pneg %p377
        $region82: #{tpu_custom_call.1} parent=79 // pred_check_branch
          %4986 = sbr.rel (%p4984) target = $region84
        $region83: #{tpu_custom_call.1} parent=79 // pred_region
          %s4988 = ssub.s32 128, 128
          %4989 = vsyncadd %s4980, %s4988
          %s4990 = smul.addr %s29, 128
          %s4991 = scalar_lea.hbm %s15, %s4990
          %s4993 = sshll.u32 %s4983, 4
          %s4994 = int_to_ptr.vmem [resolvable:$true] %s4993
          %4996 = dma.vmem_to_hbm [thread:$0]  %s4994, 128, %s4991, %s4980
        $region84: #{tpu_custom_call.1} parent=79 // pred_fallthru
          _
      $region80: #{tpu_custom_call.1} parent=5 // pred_fallthru
        _
      %p4997 = scmp.le.s32.totalorder 2, %s24
      // Predicated region
      $region85: #{tpu_custom_call.1} parent=5 // pred_check
        %p4998 = pneg %p4997
      $region86: #{tpu_custom_call.1} parent=5 // pred_check_branch
        %5000 = sbr.rel (%p4998) target = $region88
      $region87: #{tpu_custom_call.1} parent=5 // pred_region
        %s5001 = ssub.s32 %s24, 2
        // Predicated region
        $region89: #{tpu_custom_call.1} parent=87 // pred_check
          %p5002 = pneg %p383
        $region90: #{tpu_custom_call.1} parent=87 // pred_check_branch
          %5004 = sbr.rel (%p5002) target = $region92
        $region91: #{tpu_custom_call.1} parent=87 // pred_region
          %s5005 = sand.u32 %s368, 1
          %s5006 = scalar_lea.sflag [#allocation3], %s5005
          %s5007 = sand.u32 %s368, 1
          %s5008 = smul.addr %s5007, 8
          %s5009 = scalar_lea.vmem [#allocation2], %s5008
          %5010 = dma.done %s5006, 128
        $region92: #{tpu_custom_call.1} parent=87 // pred_fallthru
          _
      $region88: #{tpu_custom_call.1} parent=5 // pred_fallthru
        _
    $region6: #{tpu_custom_call.1} parent=1 // loop_footer
      %s28 = sadd.s32 1, %s24
    $region7: #{tpu_custom_call.1} parent=1 // loop_footer_branch
      %23 = sbr.rel target = $region3
    $region8: #{tpu_custom_call.1} parent=1 // loop_exit
      _
    %5011 = vsyncpa [#allocation3], 1
    %s5012 = scalar_lea.sflag [#allocation3], 1
    %5013 = vsyncpa %s5012, 1

</llo_original>
